<compile_context>
chip_gen: v5e
topology: v5e:2x2
jax: 0.10.0
libtpu: 0.0.40
codegen_flags: <defaults>
</compile_context>

<pallas_src>
import functools

import jax
import jax.numpy as jnp
from jax.experimental import pallas as pl
from jax.experimental.pallas import tpu as pltpu

LN_EPS = 1e-5
NEG_BIG = -1e30  # finite "-inf": exp() stays NaN-free even for all-masked rows


def _layernorm(x, gamma, beta):
    # PyTorch nn.LayerNorm: biased variance, eps=1e-5
    mu = jnp.mean(x, axis=-1, keepdims=True)
    var = jnp.mean((x - mu) ** 2, axis=-1, keepdims=True)
    return (x - mu) * jax.lax.rsqrt(var + LN_EPS) * gamma + beta


# ---------------------------------------------------------------------------
# Fused block kernel: one grid step = B_BLK batch elements, flattened to
# an (M, C) = (B_BLK*T, C) matrix for every dense matmul.
# ---------------------------------------------------------------------------
def block_kernel(x_ref, g1_ref, bln1_ref, wqkv_ref, wo_ref, bo_ref,
                 g2_ref, bln2_ref, w1_ref, b1_ref, w2_ref, b2_ref,
                 o_ref, *, n_head, head_size, scale):
    BB, T, C = x_ref.shape
    M = BB * T
    x = x_ref[...].reshape(M, C)                     # (M, C) fp32 residual stream

    # -------- attention sub-block: x + Proj(MHA(LN1(x))) --------------------
    xn = _layernorm(x, g1_ref[0], bln1_ref[0]).astype(jnp.bfloat16)
    qkv = jnp.dot(xn, wqkv_ref[...],                 # (M, 3C), fp32 accum
                  preferred_element_type=jnp.float32)
    q = (qkv[:, :C] * scale).astype(jnp.bfloat16)    # fold softmax scale into q
    k = qkv[:, C:2 * C].astype(jnp.bfloat16)
    v = qkv[:, 2 * C:].astype(jnp.bfloat16)

    row = jax.lax.broadcasted_iota(jnp.int32, (BB, T, T), 1)
    col = jax.lax.broadcasted_iota(jnp.int32, (BB, T, T), 2)
    causal = row >= col                              # tril mask, per batch elem

    head_outs = []
    for h in range(n_head):                          # n_head small: static unroll
        lo = h * head_size
        qh = q[:, lo:lo + head_size].reshape(BB, T, head_size)
        kh = k[:, lo:lo + head_size].reshape(BB, T, head_size)
        vh = v[:, lo:lo + head_size].reshape(BB, T, head_size)
        # scores: batched over BB, contract head dim (no explicit transpose)
        s = jax.lax.dot_general(qh, kh, (((2,), (2,)), ((0,), (0,))),
                                preferred_element_type=jnp.float32)   # (BB,T,T)
        s = jnp.where(causal, s, NEG_BIG)
        p = jnp.exp(s - jnp.max(s, axis=-1, keepdims=True))
        p = p * pl.reciprocal(jnp.sum(p, axis=-1, keepdims=True), approx=True)
        # TODO(synk): attention dropout skipped (eval-mode identity)
        oh = jax.lax.dot_general(p.astype(jnp.bfloat16), vh,
                                 (((2,), (1,)), ((0,), (0,))),
                                 preferred_element_type=jnp.float32)  # (BB,T,hs)
        head_outs.append(oh.reshape(M, head_size).astype(jnp.bfloat16))

    # single lane-dense (M, C) assembly in registers -> feeds projection directly
    att = jnp.concatenate(head_outs, axis=-1)
    proj = jnp.dot(att, wo_ref[...],
                   preferred_element_type=jnp.float32) + bo_ref[0]
    x1 = x + proj                                    # residual (fp32)

    # -------- feed-forward sub-block: x1 + W2(relu(W1(LN2(x1)))) ------------
    xn2 = _layernorm(x1, g2_ref[0], bln2_ref[0]).astype(jnp.bfloat16)
    hdn = jnp.dot(xn2, w1_ref[...],
                  preferred_element_type=jnp.float32) + b1_ref[0]
    hdn = jnp.maximum(hdn, 0.0).astype(jnp.bfloat16)         # ReLU
    y = jnp.dot(hdn, w2_ref[...],
                preferred_element_type=jnp.float32) + b2_ref[0]
    # TODO(synk): FFN dropout skipped (eval-mode identity)
    o_ref[...] = (x1 + y).reshape(BB, T, C)          # residual (fp32)


# ---------------------------------------------------------------------------
# One-time parameter preparation (hoisted out of the per-call forward):
# fuse Q/K/V into one (C, 3C) matrix and cast MXU weights to bf16 once.
# ---------------------------------------------------------------------------
def prepare_params(p):
    return {
        "ln1_g": p["ln1_g"], "ln1_b": p["ln1_b"],
        "wqkv": jnp.concatenate([p["wq"], p["wk"], p["wv"]],
                                axis=1).astype(jnp.bfloat16),
        "wo": p["wo"].astype(jnp.bfloat16), "bo": p["bo"],
        "ln2_g": p["ln2_g"], "ln2_b": p["ln2_b"],
        "w1": p["w1"].astype(jnp.bfloat16), "b1": p["b1"],
        "w2": p["w2"].astype(jnp.bfloat16), "b2": p["b2"],
    }


def _pick_batch_block(B, T):
    """Largest b_blk with b_blk*T <= 256 MXU rows, keeping >= 2 grid steps
    when possible (v7x has 2 TensorCores sharing the parallel axis)."""
    best = 1
    for d in range(1, B + 1):
        if B % d != 0:
            continue
        if d * T > 256:
            break
        if B >= 2 and (B // d) < 2:
            continue
        best = d
    return best


# ---------------------------------------------------------------------------
# Wrapper
# ---------------------------------------------------------------------------
def block_forward(x, prm, *, n_head, b_blk=None):
    B, T, C = x.shape
    assert C % n_head == 0 and T % 8 == 0
    head_size = C // n_head
    scale = float(C) ** (-0.5)                       # matches PyTorch: C**-0.5
    if b_blk is None:
        b_blk = _pick_batch_block(B, T)
    assert B % b_blk == 0
    M = b_blk * T

    x_spec = pl.BlockSpec((b_blk, T, C), lambda b: (b, 0, 0))

    def const_spec(shape):
        # constant across the grid (weights / biases)
        return pl.BlockSpec(shape, lambda b: (0,) * len(shape))

    # Explicit scoped-VMEM budget: bf16 weights + fp32 IO blocks (double-
    # buffered) + activation headroom, clamped to stay within physical VMEM.
    w_bytes = 12 * C * C * 2 * 2
    io_bytes = 2 * (b_blk * T * C * 4) * 2
    act_bytes = 48 * M * C * 4
    vmem_limit = int(min(64 << 20, max(16 << 20, w_bytes + io_bytes + act_bytes)))

    out = pl.pallas_call(
        functools.partial(block_kernel, n_head=n_head,
                          head_size=head_size, scale=scale),
        out_shape=jax.ShapeDtypeStruct((B, T, C), jnp.float32),
        grid_spec=pltpu.PrefetchScalarGridSpec(
            num_scalar_prefetch=0, grid=(B // b_blk,),
            in_specs=[x_spec,
                      const_spec((1, C)), const_spec((1, C)),         # ln1 g,b
                      const_spec((C, 3 * C)),                         # wqkv
                      const_spec((C, C)), const_spec((1, C)),         # wo, bo
                      const_spec((1, C)), const_spec((1, C)),         # ln2 g,b
                      const_spec((C, 4 * C)), const_spec((1, 4 * C)), # w1, b1
                      const_spec((4 * C, C)), const_spec((1, C))],    # w2, b2
            out_specs=x_spec),
        compiler_params=pltpu.CompilerParams(
            dimension_semantics=("parallel",),
            vmem_limit_bytes=vmem_limit),
    )(x, prm["ln1_g"], prm["ln1_b"], prm["wqkv"], prm["wo"], prm["bo"],
      prm["ln2_g"], prm["ln2_b"], prm["w1"], prm["b1"], prm["w2"], prm["b2"])
    return out


# ---------------------------------------------------------------------------
# Pure-JAX references (for correctness check)
#   mimic_bf16=True rounds matmul inputs to bf16 at the same points as the
#   kernel (isolates logic errors from expected bf16 precision loss).
# ---------------------------------------------------------------------------
def _rt(a):
    return a.astype(jnp.bfloat16).astype(jnp.float32)


def block_reference(x, p, *, n_head, mimic_bf16):
    B, T, C = x.shape
    hs = C // n_head
    cast = _rt if mimic_bf16 else (lambda a: a)
    wq, wk, wv, wo = cast(p["wq"]), cast(p["wk"]), cast(p["wv"]), cast(p["wo"])
    w1, w2 = cast(p["w1"]), cast(p["w2"])

    xn = cast(_layernorm(x, p["ln1_g"][0], p["ln1_b"][0]))
    q = cast((xn @ wq) * (C ** -0.5))
    k = cast(xn @ wk)
    v = cast(xn @ wv)
    mask = jnp.tril(jnp.ones((T, T), bool))
    outs = []
    for h in range(n_head):
        sl = slice(h * hs, (h + 1) * hs)
        s = q[..., sl] @ jnp.swapaxes(k[..., sl], -1, -2)
        s = jnp.where(mask, s, -jnp.inf)
        w = jax.nn.softmax(s, axis=-1)
        outs.append(cast(w) @ v[..., sl])
    x = x + cast(jnp.concatenate(outs, axis=-1)) @ wo + p["bo"][0]
    xn2 = cast(_layernorm(x, p["ln2_g"][0], p["ln2_b"][0]))
    h1 = cast(jnp.maximum(xn2 @ w1 + p["b1"][0], 0.0))
    return x + h1 @ w2 + p["b2"][0]


if __name__ == "__main__":
    # Small shapes consistent with the module; C a multiple of 128 (lane-dense),
    # B*T chosen so the batch-blocked grid has >= 2 steps with M = 128 rows.
    B, T, C, n_head = 4, 64, 128, 4

    key = jax.random.PRNGKey(0)
    kx, kw = jax.random.split(key)
    x = jax.random.normal(kx, (B, T, C), jnp.float32)

    ks = jax.random.split(kw, 9)
    params = {
        "ln1_g": jnp.ones((1, C), jnp.float32),
        "ln1_b": jnp.zeros((1, C), jnp.float32),
        # per-head K/Q/V linears concatenated along the output dim -> (C, C)
        "wq": 0.1 * jax.random.normal(ks[0], (C, C), jnp.float32),
        "wk": 0.1 * jax.random.normal(ks[1], (C, C), jnp.float32),
        "wv": 0.1 * jax.random.normal(ks[2], (C, C), jnp.float32),
        "wo": 0.1 * jax.random.normal(ks[3], (C, C), jnp.float32),
        "bo": 0.1 * jax.random.normal(ks[4], (1, C), jnp.float32),
        "ln2_g": jnp.ones((1, C), jnp.float32),
        "ln2_b": jnp.zeros((1, C), jnp.float32),
        "w1": 0.1 * jax.random.normal(ks[5], (C, 4 * C), jnp.float32),
        "b1": 0.1 * jax.random.normal(ks[6], (1, 4 * C), jnp.float32),
        "w2": 0.1 * jax.random.normal(ks[7], (4 * C, C), jnp.float32),
        "b2": 0.1 * jax.random.normal(ks[8], (1, C), jnp.float32),
    }

    prepared = prepare_params(params)                       # one-time weight prep
    fwd = jax.jit(functools.partial(block_forward, n_head=n_head))
    out = jax.block_until_ready(fwd(x, prepared))
    assert out.shape == (B, T, C)

    # tight check vs. a reference with matching bf16 rounding (kernel logic);
    # kernel softmax uses the EUP approximate reciprocal (~1e-3 rel), covered
    # by the tolerance.
    ref_bf = block_reference(x, params, n_head=n_head, mimic_bf16=True)
    assert jnp.allclose(out, ref_bf, atol=3e-2, rtol=3e-2), "mismatch vs bf16 ref"

    # loose sanity bound vs. the pure-fp32 reference (expected bf16 precision loss)
    ref32 = block_reference(x, params, n_head=n_head, mimic_bf16=False)
    max_diff = float(jnp.max(jnp.abs(out - ref32)))
    assert max_diff < 0.5, f"fp32 reference diverged: {max_diff}"

    print("KERNEL_OK")
</pallas_src>

<mosaic_0001>
module attributes {stable_mosaic.version = 11 : i64} {
  func.func @block_kernel(%arg0: i32, %arg1: memref<2x64x128xf32, #tpu.memory_space<vmem>>, %arg2: memref<1x128xf32, #tpu.memory_space<vmem>>, %arg3: memref<1x128xf32, #tpu.memory_space<vmem>>, %arg4: memref<128x384xbf16, #tpu.memory_space<vmem>>, %arg5: memref<128x128xbf16, #tpu.memory_space<vmem>>, %arg6: memref<1x128xf32, #tpu.memory_space<vmem>>, %arg7: memref<1x128xf32, #tpu.memory_space<vmem>>, %arg8: memref<1x128xf32, #tpu.memory_space<vmem>>, %arg9: memref<128x512xbf16, #tpu.memory_space<vmem>>, %arg10: memref<1x512xf32, #tpu.memory_space<vmem>>, %arg11: memref<512x128xbf16, #tpu.memory_space<vmem>>, %arg12: memref<1x128xf32, #tpu.memory_space<vmem>>, %arg13: memref<2x64x128xf32, #tpu.memory_space<vmem>>) attributes {dimension_semantics = [#tpu.dimension_semantics<parallel>], iteration_bounds = array<i64: 2>, scalar_prefetch = 0 : i64, scratch_operands = 0 : i64, tpu.core_type = #tpu.core_type<tc>, window_params = [{transform_indices = @transform_0, window_bounds = array<i64: 2, 64, 128>}, {pipeline_mode = #tpu.pipeline_mode<synchronous>, transform_indices = @transform_1, window_bounds = array<i64: 1, 128>}, {pipeline_mode = #tpu.pipeline_mode<synchronous>, transform_indices = @transform_2, window_bounds = array<i64: 1, 128>}, {pipeline_mode = #tpu.pipeline_mode<synchronous>, transform_indices = @transform_3, window_bounds = array<i64: 128, 384>}, {pipeline_mode = #tpu.pipeline_mode<synchronous>, transform_indices = @transform_4, window_bounds = array<i64: 128, 128>}, {pipeline_mode = #tpu.pipeline_mode<synchronous>, transform_indices = @transform_5, window_bounds = array<i64: 1, 128>}, {pipeline_mode = #tpu.pipeline_mode<synchronous>, transform_indices = @transform_6, window_bounds = array<i64: 1, 128>}, {pipeline_mode = #tpu.pipeline_mode<synchronous>, transform_indices = @transform_7, window_bounds = array<i64: 1, 128>}, {pipeline_mode = #tpu.pipeline_mode<synchronous>, transform_indices = @transform_8, window_bounds = array<i64: 128, 512>}, {pipeline_mode = #tpu.pipeline_mode<synchronous>, transform_indices = @transform_9, window_bounds = array<i64: 1, 512>}, {pipeline_mode = #tpu.pipeline_mode<synchronous>, transform_indices = @transform_10, window_bounds = array<i64: 512, 128>}, {pipeline_mode = #tpu.pipeline_mode<synchronous>, transform_indices = @transform_11, window_bounds = array<i64: 1, 128>}, {transform_indices = @transform_12, window_bounds = array<i64: 2, 64, 128>}]} {
    %c0 = arith.constant 0 : index
    %c0_0 = arith.constant 0 : index
    %c0_1 = arith.constant 0 : index
    %0 = vector.load %arg1[%c0, %c0_0, %c0_1] : memref<2x64x128xf32, #tpu.memory_space<vmem>>, vector<2x64x128xf32>
    %1 = vector.shape_cast %0 : vector<2x64x128xf32> to vector<128x128xf32>
    %c0_2 = arith.constant 0 : index
    %c0_3 = arith.constant 0 : index
    %2 = vector.load %arg2[%c0_2, %c0_3] : memref<1x128xf32, #tpu.memory_space<vmem>>, vector<1x128xf32>
    %3 = vector.shape_cast %2 : vector<1x128xf32> to vector<128xf32>
    %c0_4 = arith.constant 0 : index
    %c0_5 = arith.constant 0 : index
    %4 = vector.load %arg3[%c0_4, %c0_5] : memref<1x128xf32, #tpu.memory_space<vmem>>, vector<1x128xf32>
    %5 = vector.shape_cast %4 : vector<1x128xf32> to vector<128xf32>
    %cst = arith.constant dense<0.000000e+00> : vector<128xf32>
    %6 = vector.multi_reduction <add>, %1, %cst [1] : vector<128x128xf32> to vector<128xf32>
    %7 = vector.shape_cast %6 : vector<128xf32> to vector<128x1xf32>
    %cst_6 = arith.constant 1.280000e+02 : f32
    %8 = vector.broadcast %cst_6 : f32 to vector<128x1xf32>
    %9 = arith.divf %7, %8 : vector<128x1xf32>
    %10 = vector.broadcast %9 : vector<128x1xf32> to vector<128x128xf32>
    %11 = arith.subf %1, %10 : vector<128x128xf32>
    %12 = arith.mulf %11, %11 : vector<128x128xf32>
    %cst_7 = arith.constant dense<0.000000e+00> : vector<128xf32>
    %13 = vector.multi_reduction <add>, %12, %cst_7 [1] : vector<128x128xf32> to vector<128xf32>
    %14 = vector.shape_cast %13 : vector<128xf32> to vector<128x1xf32>
    %cst_8 = arith.constant 1.280000e+02 : f32
    %15 = vector.broadcast %cst_8 : f32 to vector<128x1xf32>
    %16 = arith.divf %14, %15 : vector<128x1xf32>
    %17 = vector.broadcast %9 : vector<128x1xf32> to vector<128x128xf32>
    %18 = arith.subf %1, %17 : vector<128x128xf32>
    %cst_9 = arith.constant 9.99999974E-6 : f32
    %19 = vector.broadcast %cst_9 : f32 to vector<128x1xf32>
    %20 = arith.addf %16, %19 : vector<128x1xf32>
    %21 = math.rsqrt %20 : vector<128x1xf32>
    %22 = vector.broadcast %21 : vector<128x1xf32> to vector<128x128xf32>
    %23 = arith.mulf %18, %22 : vector<128x128xf32>
    %24 = vector.shape_cast %3 : vector<128xf32> to vector<1x128xf32>
    %25 = vector.broadcast %24 : vector<1x128xf32> to vector<128x128xf32>
    %26 = arith.mulf %23, %25 : vector<128x128xf32>
    %27 = vector.shape_cast %5 : vector<128xf32> to vector<1x128xf32>
    %28 = vector.broadcast %27 : vector<1x128xf32> to vector<128x128xf32>
    %29 = arith.addf %26, %28 : vector<128x128xf32>
    %30 = arith.truncf %29 : vector<128x128xf32> to vector<128x128xbf16>
    %c0_10 = arith.constant 0 : index
    %c0_11 = arith.constant 0 : index
    %31 = vector.load %arg4[%c0_10, %c0_11] : memref<128x384xbf16, #tpu.memory_space<vmem>>, vector<128x384xbf16>
    %cst_12 = arith.constant dense<0.000000e+00> : vector<128x384xf32>
    %32 = tpu.matmul %30, %31, %cst_12 {dimension_numbers = #tpu.dot_dimension_numbers<[1], [0], [0], [1], [0, 0, 1, 1], [], []>} : vector<128x128xbf16>, vector<128x384xbf16>, vector<128x384xf32> -> vector<128x384xf32>
    %33 = vector.extract_strided_slice %32 {offsets = [0, 0], sizes = [128, 128], strides = [1, 1]} : vector<128x384xf32> to vector<128x128xf32>
    %cst_13 = arith.constant 0.0883883461 : f32
    %34 = vector.broadcast %cst_13 : f32 to vector<128x128xf32>
    %35 = arith.mulf %33, %34 : vector<128x128xf32>
    %36 = arith.truncf %35 : vector<128x128xf32> to vector<128x128xbf16>
    %37 = vector.extract_strided_slice %32 {offsets = [0, 128], sizes = [128, 128], strides = [1, 1]} : vector<128x384xf32> to vector<128x128xf32>
    %38 = arith.truncf %37 : vector<128x128xf32> to vector<128x128xbf16>
    %39 = vector.extract_strided_slice %32 {offsets = [0, 256], sizes = [128, 128], strides = [1, 1]} : vector<128x384xf32> to vector<128x128xf32>
    %40 = arith.truncf %39 : vector<128x128xf32> to vector<128x128xbf16>
    %41 = tpu.iota {dimensions = array<i32: 1>} : vector<2x64x64xi32>
    %42 = tpu.iota {dimensions = array<i32: 2>} : vector<2x64x64xi32>
    %43 = arith.cmpi sge, %41, %42 : vector<2x64x64xi32>
    %44 = vector.extract_strided_slice %36 {offsets = [0, 0], sizes = [128, 32], strides = [1, 1]} : vector<128x128xbf16> to vector<128x32xbf16>
    %45 = vector.shape_cast %44 : vector<128x32xbf16> to vector<2x64x32xbf16>
    %46 = vector.extract_strided_slice %38 {offsets = [0, 0], sizes = [128, 32], strides = [1, 1]} : vector<128x128xbf16> to vector<128x32xbf16>
    %47 = vector.shape_cast %46 : vector<128x32xbf16> to vector<2x64x32xbf16>
    %48 = vector.extract_strided_slice %40 {offsets = [0, 0], sizes = [128, 32], strides = [1, 1]} : vector<128x128xbf16> to vector<128x32xbf16>
    %49 = vector.shape_cast %48 : vector<128x32xbf16> to vector<2x64x32xbf16>
    %cst_14 = arith.constant dense<0.000000e+00> : vector<2x64x64xf32>
    %50 = tpu.matmul %45, %47, %cst_14 {dimension_numbers = #tpu.dot_dimension_numbers<[2], [2], [1], [1], [0, 0, 0, 1, 1, 1], [0], [0]>} : vector<2x64x32xbf16>, vector<2x64x32xbf16>, vector<2x64x64xf32> -> vector<2x64x64xf32>
    %cst_15 = arith.constant -1.000000e+30 : f32
    %51 = vector.broadcast %cst_15 : f32 to vector<2x64x64xf32>
    %52 = arith.select %43, %50, %51 : vector<2x64x64xi1>, vector<2x64x64xf32>
    %cst_16 = arith.constant dense<0xFF800000> : vector<2x64xf32>
    %53 = vector.multi_reduction <maximumf>, %52, %cst_16 [2] : vector<2x64x64xf32> to vector<2x64xf32>
    %54 = vector.shape_cast %53 : vector<2x64xf32> to vector<2x64x1xf32>
    %55 = vector.broadcast %54 : vector<2x64x1xf32> to vector<2x64x64xf32>
    %56 = arith.subf %52, %55 : vector<2x64x64xf32>
    %57 = math.exp %56 : vector<2x64x64xf32>
    %cst_17 = arith.constant dense<0.000000e+00> : vector<2x64xf32>
    %58 = vector.multi_reduction <add>, %57, %cst_17 [2] : vector<2x64x64xf32> to vector<2x64xf32>
    %59 = vector.shape_cast %58 : vector<2x64xf32> to vector<2x64x1xf32>
    %60 = tpu.reciprocal %59 {approx = true} : vector<2x64x1xf32> -> vector<2x64x1xf32>
    %61 = vector.broadcast %60 : vector<2x64x1xf32> to vector<2x64x64xf32>
    %62 = arith.mulf %57, %61 : vector<2x64x64xf32>
    %63 = arith.truncf %62 : vector<2x64x64xf32> to vector<2x64x64xbf16>
    %cst_18 = arith.constant dense<0.000000e+00> : vector<2x64x32xf32>
    %64 = tpu.matmul %63, %49, %cst_18 {dimension_numbers = #tpu.dot_dimension_numbers<[2], [1], [1], [2], [0, 0, 0, 1, 1, 2], [0], [0]>} : vector<2x64x64xbf16>, vector<2x64x32xbf16>, vector<2x64x32xf32> -> vector<2x64x32xf32>
    %65 = vector.shape_cast %64 : vector<2x64x32xf32> to vector<128x32xf32>
    %66 = arith.truncf %65 : vector<128x32xf32> to vector<128x32xbf16>
    %67 = vector.extract_strided_slice %36 {offsets = [0, 32], sizes = [128, 32], strides = [1, 1]} : vector<128x128xbf16> to vector<128x32xbf16>
    %68 = vector.shape_cast %67 : vector<128x32xbf16> to vector<2x64x32xbf16>
    %69 = vector.extract_strided_slice %38 {offsets = [0, 32], sizes = [128, 32], strides = [1, 1]} : vector<128x128xbf16> to vector<128x32xbf16>
    %70 = vector.shape_cast %69 : vector<128x32xbf16> to vector<2x64x32xbf16>
    %71 = vector.extract_strided_slice %40 {offsets = [0, 32], sizes = [128, 32], strides = [1, 1]} : vector<128x128xbf16> to vector<128x32xbf16>
    %72 = vector.shape_cast %71 : vector<128x32xbf16> to vector<2x64x32xbf16>
    %cst_19 = arith.constant dense<0.000000e+00> : vector<2x64x64xf32>
    %73 = tpu.matmul %68, %70, %cst_19 {dimension_numbers = #tpu.dot_dimension_numbers<[2], [2], [1], [1], [0, 0, 0, 1, 1, 1], [0], [0]>} : vector<2x64x32xbf16>, vector<2x64x32xbf16>, vector<2x64x64xf32> -> vector<2x64x64xf32>
    %cst_20 = arith.constant -1.000000e+30 : f32
    %74 = vector.broadcast %cst_20 : f32 to vector<2x64x64xf32>
    %75 = arith.select %43, %73, %74 : vector<2x64x64xi1>, vector<2x64x64xf32>
    %cst_21 = arith.constant dense<0xFF800000> : vector<2x64xf32>
    %76 = vector.multi_reduction <maximumf>, %75, %cst_21 [2] : vector<2x64x64xf32> to vector<2x64xf32>
    %77 = vector.shape_cast %76 : vector<2x64xf32> to vector<2x64x1xf32>
    %78 = vector.broadcast %77 : vector<2x64x1xf32> to vector<2x64x64xf32>
    %79 = arith.subf %75, %78 : vector<2x64x64xf32>
    %80 = math.exp %79 : vector<2x64x64xf32>
    %cst_22 = arith.constant dense<0.000000e+00> : vector<2x64xf32>
    %81 = vector.multi_reduction <add>, %80, %cst_22 [2] : vector<2x64x64xf32> to vector<2x64xf32>
    %82 = vector.shape_cast %81 : vector<2x64xf32> to vector<2x64x1xf32>
    %83 = tpu.reciprocal %82 {approx = true} : vector<2x64x1xf32> -> vector<2x64x1xf32>
    %84 = vector.broadcast %83 : vector<2x64x1xf32> to vector<2x64x64xf32>
    %85 = arith.mulf %80, %84 : vector<2x64x64xf32>
    %86 = arith.truncf %85 : vector<2x64x64xf32> to vector<2x64x64xbf16>
    %cst_23 = arith.constant dense<0.000000e+00> : vector<2x64x32xf32>
    %87 = tpu.matmul %86, %72, %cst_23 {dimension_numbers = #tpu.dot_dimension_numbers<[2], [1], [1], [2], [0, 0, 0, 1, 1, 2], [0], [0]>} : vector<2x64x64xbf16>, vector<2x64x32xbf16>, vector<2x64x32xf32> -> vector<2x64x32xf32>
    %88 = vector.shape_cast %87 : vector<2x64x32xf32> to vector<128x32xf32>
    %89 = arith.truncf %88 : vector<128x32xf32> to vector<128x32xbf16>
    %90 = vector.extract_strided_slice %36 {offsets = [0, 64], sizes = [128, 32], strides = [1, 1]} : vector<128x128xbf16> to vector<128x32xbf16>
    %91 = vector.shape_cast %90 : vector<128x32xbf16> to vector<2x64x32xbf16>
    %92 = vector.extract_strided_slice %38 {offsets = [0, 64], sizes = [128, 32], strides = [1, 1]} : vector<128x128xbf16> to vector<128x32xbf16>
    %93 = vector.shape_cast %92 : vector<128x32xbf16> to vector<2x64x32xbf16>
    %94 = vector.extract_strided_slice %40 {offsets = [0, 64], sizes = [128, 32], strides = [1, 1]} : vector<128x128xbf16> to vector<128x32xbf16>
    %95 = vector.shape_cast %94 : vector<128x32xbf16> to vector<2x64x32xbf16>
    %cst_24 = arith.constant dense<0.000000e+00> : vector<2x64x64xf32>
    %96 = tpu.matmul %91, %93, %cst_24 {dimension_numbers = #tpu.dot_dimension_numbers<[2], [2], [1], [1], [0, 0, 0, 1, 1, 1], [0], [0]>} : vector<2x64x32xbf16>, vector<2x64x32xbf16>, vector<2x64x64xf32> -> vector<2x64x64xf32>
    %cst_25 = arith.constant -1.000000e+30 : f32
    %97 = vector.broadcast %cst_25 : f32 to vector<2x64x64xf32>
    %98 = arith.select %43, %96, %97 : vector<2x64x64xi1>, vector<2x64x64xf32>
    %cst_26 = arith.constant dense<0xFF800000> : vector<2x64xf32>
    %99 = vector.multi_reduction <maximumf>, %98, %cst_26 [2] : vector<2x64x64xf32> to vector<2x64xf32>
    %100 = vector.shape_cast %99 : vector<2x64xf32> to vector<2x64x1xf32>
    %101 = vector.broadcast %100 : vector<2x64x1xf32> to vector<2x64x64xf32>
    %102 = arith.subf %98, %101 : vector<2x64x64xf32>
    %103 = math.exp %102 : vector<2x64x64xf32>
    %cst_27 = arith.constant dense<0.000000e+00> : vector<2x64xf32>
    %104 = vector.multi_reduction <add>, %103, %cst_27 [2] : vector<2x64x64xf32> to vector<2x64xf32>
    %105 = vector.shape_cast %104 : vector<2x64xf32> to vector<2x64x1xf32>
    %106 = tpu.reciprocal %105 {approx = true} : vector<2x64x1xf32> -> vector<2x64x1xf32>
    %107 = vector.broadcast %106 : vector<2x64x1xf32> to vector<2x64x64xf32>
    %108 = arith.mulf %103, %107 : vector<2x64x64xf32>
    %109 = arith.truncf %108 : vector<2x64x64xf32> to vector<2x64x64xbf16>
    %cst_28 = arith.constant dense<0.000000e+00> : vector<2x64x32xf32>
    %110 = tpu.matmul %109, %95, %cst_28 {dimension_numbers = #tpu.dot_dimension_numbers<[2], [1], [1], [2], [0, 0, 0, 1, 1, 2], [0], [0]>} : vector<2x64x64xbf16>, vector<2x64x32xbf16>, vector<2x64x32xf32> -> vector<2x64x32xf32>
    %111 = vector.shape_cast %110 : vector<2x64x32xf32> to vector<128x32xf32>
    %112 = arith.truncf %111 : vector<128x32xf32> to vector<128x32xbf16>
    %113 = vector.extract_strided_slice %36 {offsets = [0, 96], sizes = [128, 32], strides = [1, 1]} : vector<128x128xbf16> to vector<128x32xbf16>
    %114 = vector.shape_cast %113 : vector<128x32xbf16> to vector<2x64x32xbf16>
    %115 = vector.extract_strided_slice %38 {offsets = [0, 96], sizes = [128, 32], strides = [1, 1]} : vector<128x128xbf16> to vector<128x32xbf16>
    %116 = vector.shape_cast %115 : vector<128x32xbf16> to vector<2x64x32xbf16>
    %117 = vector.extract_strided_slice %40 {offsets = [0, 96], sizes = [128, 32], strides = [1, 1]} : vector<128x128xbf16> to vector<128x32xbf16>
    %118 = vector.shape_cast %117 : vector<128x32xbf16> to vector<2x64x32xbf16>
    %cst_29 = arith.constant dense<0.000000e+00> : vector<2x64x64xf32>
    %119 = tpu.matmul %114, %116, %cst_29 {dimension_numbers = #tpu.dot_dimension_numbers<[2], [2], [1], [1], [0, 0, 0, 1, 1, 1], [0], [0]>} : vector<2x64x32xbf16>, vector<2x64x32xbf16>, vector<2x64x64xf32> -> vector<2x64x64xf32>
    %cst_30 = arith.constant -1.000000e+30 : f32
    %120 = vector.broadcast %cst_30 : f32 to vector<2x64x64xf32>
    %121 = arith.select %43, %119, %120 : vector<2x64x64xi1>, vector<2x64x64xf32>
    %cst_31 = arith.constant dense<0xFF800000> : vector<2x64xf32>
    %122 = vector.multi_reduction <maximumf>, %121, %cst_31 [2] : vector<2x64x64xf32> to vector<2x64xf32>
    %123 = vector.shape_cast %122 : vector<2x64xf32> to vector<2x64x1xf32>
    %124 = vector.broadcast %123 : vector<2x64x1xf32> to vector<2x64x64xf32>
    %125 = arith.subf %121, %124 : vector<2x64x64xf32>
    %126 = math.exp %125 : vector<2x64x64xf32>
    %cst_32 = arith.constant dense<0.000000e+00> : vector<2x64xf32>
    %127 = vector.multi_reduction <add>, %126, %cst_32 [2] : vector<2x64x64xf32> to vector<2x64xf32>
    %128 = vector.shape_cast %127 : vector<2x64xf32> to vector<2x64x1xf32>
    %129 = tpu.reciprocal %128 {approx = true} : vector<2x64x1xf32> -> vector<2x64x1xf32>
    %130 = vector.broadcast %129 : vector<2x64x1xf32> to vector<2x64x64xf32>
    %131 = arith.mulf %126, %130 : vector<2x64x64xf32>
    %132 = arith.truncf %131 : vector<2x64x64xf32> to vector<2x64x64xbf16>
    %cst_33 = arith.constant dense<0.000000e+00> : vector<2x64x32xf32>
    %133 = tpu.matmul %132, %118, %cst_33 {dimension_numbers = #tpu.dot_dimension_numbers<[2], [1], [1], [2], [0, 0, 0, 1, 1, 2], [0], [0]>} : vector<2x64x64xbf16>, vector<2x64x32xbf16>, vector<2x64x32xf32> -> vector<2x64x32xf32>
    %134 = vector.shape_cast %133 : vector<2x64x32xf32> to vector<128x32xf32>
    %135 = arith.truncf %134 : vector<128x32xf32> to vector<128x32xbf16>
    %136 = tpu.concatenate %66, %89, %112, %135 in 1 : vector<128x32xbf16>, vector<128x32xbf16>, vector<128x32xbf16>, vector<128x32xbf16> -> vector<128x128xbf16>
    %c0_34 = arith.constant 0 : index
    %c0_35 = arith.constant 0 : index
    %137 = vector.load %arg5[%c0_34, %c0_35] : memref<128x128xbf16, #tpu.memory_space<vmem>>, vector<128x128xbf16>
    %cst_36 = arith.constant dense<0.000000e+00> : vector<128x128xf32>
    %138 = tpu.matmul %136, %137, %cst_36 {dimension_numbers = #tpu.dot_dimension_numbers<[1], [0], [0], [1], [0, 0, 1, 1], [], []>} : vector<128x128xbf16>, vector<128x128xbf16>, vector<128x128xf32> -> vector<128x128xf32>
    %c0_37 = arith.constant 0 : index
    %c0_38 = arith.constant 0 : index
    %139 = vector.load %arg6[%c0_37, %c0_38] : memref<1x128xf32, #tpu.memory_space<vmem>>, vector<1x128xf32>
    %140 = vector.shape_cast %139 : vector<1x128xf32> to vector<128xf32>
    %141 = vector.shape_cast %140 : vector<128xf32> to vector<1x128xf32>
    %142 = vector.broadcast %141 : vector<1x128xf32> to vector<128x128xf32>
    %143 = arith.addf %138, %142 : vector<128x128xf32>
    %144 = arith.addf %1, %143 : vector<128x128xf32>
    %c0_39 = arith.constant 0 : index
    %c0_40 = arith.constant 0 : index
    %145 = vector.load %arg7[%c0_39, %c0_40] : memref<1x128xf32, #tpu.memory_space<vmem>>, vector<1x128xf32>
    %146 = vector.shape_cast %145 : vector<1x128xf32> to vector<128xf32>
    %c0_41 = arith.constant 0 : index
    %c0_42 = arith.constant 0 : index
    %147 = vector.load %arg8[%c0_41, %c0_42] : memref<1x128xf32, #tpu.memory_space<vmem>>, vector<1x128xf32>
    %148 = vector.shape_cast %147 : vector<1x128xf32> to vector<128xf32>
    %cst_43 = arith.constant dense<0.000000e+00> : vector<128xf32>
    %149 = vector.multi_reduction <add>, %144, %cst_43 [1] : vector<128x128xf32> to vector<128xf32>
    %150 = vector.shape_cast %149 : vector<128xf32> to vector<128x1xf32>
    %cst_44 = arith.constant 1.280000e+02 : f32
    %151 = vector.broadcast %cst_44 : f32 to vector<128x1xf32>
    %152 = arith.divf %150, %151 : vector<128x1xf32>
    %153 = vector.broadcast %152 : vector<128x1xf32> to vector<128x128xf32>
    %154 = arith.subf %144, %153 : vector<128x128xf32>
    %155 = arith.mulf %154, %154 : vector<128x128xf32>
    %cst_45 = arith.constant dense<0.000000e+00> : vector<128xf32>
    %156 = vector.multi_reduction <add>, %155, %cst_45 [1] : vector<128x128xf32> to vector<128xf32>
    %157 = vector.shape_cast %156 : vector<128xf32> to vector<128x1xf32>
    %cst_46 = arith.constant 1.280000e+02 : f32
    %158 = vector.broadcast %cst_46 : f32 to vector<128x1xf32>
    %159 = arith.divf %157, %158 : vector<128x1xf32>
    %160 = vector.broadcast %152 : vector<128x1xf32> to vector<128x128xf32>
    %161 = arith.subf %144, %160 : vector<128x128xf32>
    %cst_47 = arith.constant 9.99999974E-6 : f32
    %162 = vector.broadcast %cst_47 : f32 to vector<128x1xf32>
    %163 = arith.addf %159, %162 : vector<128x1xf32>
    %164 = math.rsqrt %163 : vector<128x1xf32>
    %165 = vector.broadcast %164 : vector<128x1xf32> to vector<128x128xf32>
    %166 = arith.mulf %161, %165 : vector<128x128xf32>
    %167 = vector.shape_cast %146 : vector<128xf32> to vector<1x128xf32>
    %168 = vector.broadcast %167 : vector<1x128xf32> to vector<128x128xf32>
    %169 = arith.mulf %166, %168 : vector<128x128xf32>
    %170 = vector.shape_cast %148 : vector<128xf32> to vector<1x128xf32>
    %171 = vector.broadcast %170 : vector<1x128xf32> to vector<128x128xf32>
    %172 = arith.addf %169, %171 : vector<128x128xf32>
    %173 = arith.truncf %172 : vector<128x128xf32> to vector<128x128xbf16>
    %c0_48 = arith.constant 0 : index
    %c0_49 = arith.constant 0 : index
    %174 = vector.load %arg9[%c0_48, %c0_49] : memref<128x512xbf16, #tpu.memory_space<vmem>>, vector<128x512xbf16>
    %cst_50 = arith.constant dense<0.000000e+00> : vector<128x512xf32>
    %175 = tpu.matmul %173, %174, %cst_50 {dimension_numbers = #tpu.dot_dimension_numbers<[1], [0], [0], [1], [0, 0, 1, 1], [], []>} : vector<128x128xbf16>, vector<128x512xbf16>, vector<128x512xf32> -> vector<128x512xf32>
    %c0_51 = arith.constant 0 : index
    %c0_52 = arith.constant 0 : index
    %176 = vector.load %arg10[%c0_51, %c0_52] : memref<1x512xf32, #tpu.memory_space<vmem>>, vector<1x512xf32>
    %177 = vector.shape_cast %176 : vector<1x512xf32> to vector<512xf32>
    %178 = vector.shape_cast %177 : vector<512xf32> to vector<1x512xf32>
    %179 = vector.broadcast %178 : vector<1x512xf32> to vector<128x512xf32>
    %180 = arith.addf %175, %179 : vector<128x512xf32>
    %cst_53 = arith.constant 0.000000e+00 : f32
    %181 = vector.broadcast %cst_53 : f32 to vector<128x512xf32>
    %182 = arith.maximumf %180, %181 : vector<128x512xf32>
    %183 = arith.truncf %182 : vector<128x512xf32> to vector<128x512xbf16>
    %c0_54 = arith.constant 0 : index
    %c0_55 = arith.constant 0 : index
    %184 = vector.load %arg11[%c0_54, %c0_55] : memref<512x128xbf16, #tpu.memory_space<vmem>>, vector<512x128xbf16>
    %cst_56 = arith.constant dense<0.000000e+00> : vector<128x128xf32>
    %185 = tpu.matmul %183, %184, %cst_56 {dimension_numbers = #tpu.dot_dimension_numbers<[1], [0], [0], [1], [0, 0, 1, 1], [], []>} : vector<128x512xbf16>, vector<512x128xbf16>, vector<128x128xf32> -> vector<128x128xf32>
    %c0_57 = arith.constant 0 : index
    %c0_58 = arith.constant 0 : index
    %186 = vector.load %arg12[%c0_57, %c0_58] : memref<1x128xf32, #tpu.memory_space<vmem>>, vector<1x128xf32>
    %187 = vector.shape_cast %186 : vector<1x128xf32> to vector<128xf32>
    %188 = vector.shape_cast %187 : vector<128xf32> to vector<1x128xf32>
    %189 = vector.broadcast %188 : vector<1x128xf32> to vector<128x128xf32>
    %190 = arith.addf %185, %189 : vector<128x128xf32>
    %191 = arith.addf %144, %190 : vector<128x128xf32>
    %192 = vector.shape_cast %191 : vector<128x128xf32> to vector<2x64x128xf32>
    %c0_59 = arith.constant 0 : index
    %c0_60 = arith.constant 0 : index
    %c0_61 = arith.constant 0 : index
    %193 = vector.load %arg13[%c0_59, %c0_60, %c0_61] : memref<2x64x128xf32, #tpu.memory_space<vmem>>, vector<2x64x128xf32>
    tpu.vector_store %arg13[%c0_59, %c0_60, %c0_61], %192 {strides = array<i32>} : memref<2x64x128xf32, #tpu.memory_space<vmem>>, vector<2x64x128xf32>,
    return
  }
  func.func @transform_0(%arg0: i32) -> (i32, i32, i32) {
    %c0_i32 = arith.constant 0 : i32
    %c0_i32_0 = arith.constant 0 : i32
    %c0_i32_1 = arith.constant 0 : i32
    return %arg0, %c0_i32, %c0_i32_0 : i32, i32, i32
  }
  func.func @transform_1(%arg0: i32) -> (i32, i32) {
    %c0_i32 = arith.constant 0 : i32
    %c0_i32_0 = arith.constant 0 : i32
    %c0_i32_1 = arith.constant 0 : i32
    return %c0_i32, %c0_i32_0 : i32, i32
  }
  func.func @transform_2(%arg0: i32) -> (i32, i32) {
    %c0_i32 = arith.constant 0 : i32
    %c0_i32_0 = arith.constant 0 : i32
    %c0_i32_1 = arith.constant 0 : i32
    return %c0_i32, %c0_i32_0 : i32, i32
  }
  func.func @transform_3(%arg0: i32) -> (i32, i32) {
    %c0_i32 = arith.constant 0 : i32
    %c0_i32_0 = arith.constant 0 : i32
    %c0_i32_1 = arith.constant 0 : i32
    return %c0_i32, %c0_i32_0 : i32, i32
  }
  func.func @transform_4(%arg0: i32) -> (i32, i32) {
    %c0_i32 = arith.constant 0 : i32
    %c0_i32_0 = arith.constant 0 : i32
    %c0_i32_1 = arith.constant 0 : i32
    return %c0_i32, %c0_i32_0 : i32, i32
  }
  func.func @transform_5(%arg0: i32) -> (i32, i32) {
    %c0_i32 = arith.constant 0 : i32
    %c0_i32_0 = arith.constant 0 : i32
    %c0_i32_1 = arith.constant 0 : i32
    return %c0_i32, %c0_i32_0 : i32, i32
  }
  func.func @transform_6(%arg0: i32) -> (i32, i32) {
    %c0_i32 = arith.constant 0 : i32
    %c0_i32_0 = arith.constant 0 : i32
    %c0_i32_1 = arith.constant 0 : i32
    return %c0_i32, %c0_i32_0 : i32, i32
  }
  func.func @transform_7(%arg0: i32) -> (i32, i32) {
    %c0_i32 = arith.constant 0 : i32
    %c0_i32_0 = arith.constant 0 : i32
    %c0_i32_1 = arith.constant 0 : i32
    return %c0_i32, %c0_i32_0 : i32, i32
  }
  func.func @transform_8(%arg0: i32) -> (i32, i32) {
    %c0_i32 = arith.constant 0 : i32
    %c0_i32_0 = arith.constant 0 : i32
    %c0_i32_1 = arith.constant 0 : i32
    return %c0_i32, %c0_i32_0 : i32, i32
  }
  func.func @transform_9(%arg0: i32) -> (i32, i32) {
    %c0_i32 = arith.constant 0 : i32
    %c0_i32_0 = arith.constant 0 : i32
    %c0_i32_1 = arith.constant 0 : i32
    return %c0_i32, %c0_i32_0 : i32, i32
  }
  func.func @transform_10(%arg0: i32) -> (i32, i32) {
    %c0_i32 = arith.constant 0 : i32
    %c0_i32_0 = arith.constant 0 : i32
    %c0_i32_1 = arith.constant 0 : i32
    return %c0_i32, %c0_i32_0 : i32, i32
  }
  func.func @transform_11(%arg0: i32) -> (i32, i32) {
    %c0_i32 = arith.constant 0 : i32
    %c0_i32_0 = arith.constant 0 : i32
    %c0_i32_1 = arith.constant 0 : i32
    return %c0_i32, %c0_i32_0 : i32, i32
  }
  func.func @transform_12(%arg0: i32) -> (i32, i32, i32) {
    %c0_i32 = arith.constant 0 : i32
    %c0_i32_0 = arith.constant 0 : i32
    %c0_i32_1 = arith.constant 0 : i32
    return %arg0, %c0_i32, %c0_i32_0 : i32, i32, i32
  }
}

</mosaic_0001>

<llo_original>
// kernel: block_forward.1
$region0: #{block_forward.1}
  #allocation0 [shape = 'u32[]', space=smem, size = 0x4, offset = 0x4, fixed_abs, tag = 'smem constant byte address 0x4 - core index']
  #allocation1 [shape = 'u32[72,128]{1,0:T(1,128)}', space=vmem, size = 0x9000, scoped, tag = 'internal scratch']
  %s0 = inlined_call_operand.hbm [shape: f32[4,64,128], index: 0, kind: input, shape index: {}]
  %s1 = inlined_call_operand.vmem [shape: f32[1,128], index: 1, kind: input, shape index: {}]
  %s2 = inlined_call_operand.vmem [shape: f32[1,128], index: 2, kind: input, shape index: {}]
  %s3 = inlined_call_operand.hbm [shape: bf16[128,384], index: 3, kind: input, shape index: {}]
  %s4 = inlined_call_operand.hbm [shape: bf16[128,128], index: 4, kind: input, shape index: {}]
  %s5 = inlined_call_operand.hbm [shape: f32[1,128], index: 5, kind: input, shape index: {}]
  %s6 = inlined_call_operand.vmem [shape: f32[1,128], index: 6, kind: input, shape index: {}]
  %s7 = inlined_call_operand.vmem [shape: f32[1,128], index: 7, kind: input, shape index: {}]
  %s8 = inlined_call_operand.hbm [shape: bf16[128,512], index: 8, kind: input, shape index: {}]
  %s9 = inlined_call_operand.hbm [shape: f32[1,512], index: 9, kind: input, shape index: {}]
  %s10 = inlined_call_operand.hbm [shape: bf16[512,128], index: 10, kind: input, shape index: {}]
  %s11 = inlined_call_operand.hbm [shape: f32[1,128], index: 11, kind: input, shape index: {}]
  %s12 = inlined_call_operand.hbm [shape: f32[4,64,128], index: 12, kind: output, shape index: {}]
  %s13 = sld [smem:[#allocation0]]
  $region113: #{block_forward.1} parent=0
    _
  %s15 = ssub.s32 1, %s13
  %s16 = scalar_select 0, %s15, %s13
  $region1: #{block_forward.1} parent=0
    #allocation2 [shape = 'u8[131072]{0}', space=vmem, size = 0x20000, scoped, tag = 'input window, operand 0']
    #allocation3 [shape = 's32[2]{0}', space=sflag, size = 0x8, scoped, tag = 'scoped memory for block_forward.1']
    #allocation4 [shape = 's32[2]{0}', space=sflag, size = 0x8, scoped, tag = 'scoped memory for block_forward.1']
    #allocation5 [shape = 'u8[98304]{0}', space=vmem, size = 0x18000, scoped, tag = 'input window, operand 3, single buffered']
    #allocation6 [shape = 's32[1]{0}', space=sflag, size = 0x4, scoped, tag = 'scoped memory for block_forward.1']
    #allocation7 [shape = 'u8[32768]{0}', space=vmem, size = 0x8000, scoped, tag = 'input window, operand 4, single buffered']
    #allocation8 [shape = 'u8[512]{0}', space=vmem, size = 0x400, scoped, tag = 'input window, operand 5, single buffered']
    #allocation9 [shape = 's32[1]{0}', space=sflag, size = 0x4, scoped, tag = 'scoped memory for block_forward.1']
    #allocation10 [shape = 'u8[131072]{0}', space=vmem, size = 0x20000, scoped, tag = 'input window, operand 8, single buffered']
    #allocation11 [shape = 'u8[2048]{0}', space=vmem, size = 0x800, scoped, tag = 'input window, operand 9, single buffered']
    #allocation12 [shape = 's32[1]{0}', space=sflag, size = 0x4, scoped, tag = 'scoped memory for block_forward.1']
    #allocation13 [shape = 'u8[131072]{0}', space=vmem, size = 0x20000, scoped, tag = 'input window, operand 10, single buffered']
    #allocation14 [shape = 'u8[512]{0}', space=vmem, size = 0x400, scoped, tag = 'input window, operand 11, single buffered']
    #allocation15 [shape = 's32[1]{0}', space=sflag, size = 0x4, scoped, tag = 'scoped memory for block_forward.1']
    #allocation16 [shape = 'u8[131072]{0}', space=vmem, size = 0x20000, scoped, tag = 'output window, operand 0']
    %17 = vsyncpa [#allocation3], 0
    %s18 = scalar_lea.sflag [#allocation3], 1
    %19 = vsyncpa %s18, 0
    %20 = vsyncpa [#allocation6], 0
    %21 = vsyncpa [#allocation9], 0
    %22 = vsyncpa [#allocation12], 0
    %23 = vsyncpa [#allocation15], 0
    %24 = vsyncpa [#allocation4], 0
    %s25 = scalar_lea.sflag [#allocation4], 1
    %26 = vsyncpa %s25, 0
    loop: start=0, step=1, limit=4
    $region2: #{block_forward.1} parent=1 // loop_pre_header
      _
    $region3: #{block_forward.1} parent=1 // loop_header
      %s28 = sphi 0, %s32
      %p29 = scmp.ge.s32.totalorder %s28, 4
      %s38 = sphi 0, %s40
      %s41 = sphi 0, %s38
      %s42 = sphi 0, %s41
      %s58 = sphi 0, %s42
      %s62 = sphi 0, %s62
      %s64 = sphi 0, %s62
      %s65 = sphi 0, %s64
      %s79 = sphi 0, %s65
      %s83 = sphi 0, %s83
      %s85 = sphi 0, %s83
      %s86 = sphi 0, %s85
      %s100 = sphi 0, %s86
      %s104 = sphi 0, %s104
      %s106 = sphi 0, %s104
      %s107 = sphi 0, %s106
      %s121 = sphi 0, %s107
      %s125 = sphi 0, %s125
      %s127 = sphi 0, %s125
      %s128 = sphi 0, %s127
      %s142 = sphi 0, %s128
      %s146 = sphi 0, %s146
      %s148 = sphi 0, %s146
      %s149 = sphi 0, %s148
      %s163 = sphi 0, %s149
      %s167 = sphi 0, %s167
      %s169 = sphi 0, %s167
      %s170 = sphi 0, %s169
      %s184 = sphi 0, %s170
      %s188 = sphi 0, %s188
      %s190 = sphi 0, %s188
      %s191 = sphi 0, %s190
      %s205 = sphi 0, %s191
      %s209 = sphi 0, %s209
      %s211 = sphi 0, %s209
      %s212 = sphi 0, %s211
      %s226 = sphi 0, %s212
      %s230 = sphi 0, %s230
      %s232 = sphi 0, %s230
      %s233 = sphi 0, %s232
      %s247 = sphi 0, %s233
      %s251 = sphi 0, %s251
      %s253 = sphi 0, %s251
      %s254 = sphi 0, %s253
      %s268 = sphi 0, %s254
      %s272 = sphi 0, %s272
      %s274 = sphi 0, %s272
      %s275 = sphi 0, %s274
      %s289 = sphi 0, %s275
      %s295 = sphi 0, %s297
      %s298 = sphi 0, %s295
      %s299 = sphi 0, %s298
      %s315 = sphi 0, %s299
    $region4: #{block_forward.1} parent=1 // loop_header_branch
      %31 = sbr.rel (%p29) target = $region8
    $region5: #{block_forward.1} parent=1 // loop_body
      %s33 = ssub.s32 %s28, 1
      %s34 = ssub.s32 %s28, 2
      %s35 = sadd.s32 %s28, 1
      %s36 = ssub.s32 %s28, %s35
      %p37 = scmp.eq.s32.totalorder %s36, 0
      %s39 = sadd.s32 %s38, 1
      %s40 = scalar_select %p37, %s38, %s39
      %p43 = pneg %p37
      %p44 = scmp.eq.s32.totalorder %s28, 1
      %p45 = por %p43, %p44
      %p46 = scmp.ne.s32.totalorder %s38, %s41
      %p47 = scmp.eq.s32.totalorder %s28, 0
      %p48 = por %p46, %p47
      %p49 = scmp.ne.s32.totalorder %s38, %s41
      %p50 = scmp.eq.s32.totalorder %s33, 1
      %p51 = por %p49, %p50
      %p52 = scmp.ne.s32.totalorder %s41, %s42
      %p53 = scmp.eq.s32.totalorder %s33, 0
      %p54 = por %p52, %p53
      %p55 = scmp.ne.s32.totalorder %s41, %s42
      %p56 = scmp.eq.s32.totalorder %s34, 1
      %p57 = por %p55, %p56
      %p59 = scmp.ne.s32.totalorder %s42, %s58
      %p60 = scmp.eq.s32.totalorder %s34, 0
      %p61 = por %p59, %p60
      %s63 = sadd.s32 %s62, 1
      %p66 = scmp.eq.s32.totalorder %s28, 1
      %p67 = scmp.ne.s32.totalorder %s62, %s64
      %p68 = scmp.eq.s32.totalorder %s28, 0
      %p69 = por %p67, %p68
      %p70 = scmp.ne.s32.totalorder %s62, %s64
      %p71 = scmp.eq.s32.totalorder %s33, 1
      %p72 = por %p70, %p71
      %p73 = scmp.ne.s32.totalorder %s64, %s65
      %p74 = scmp.eq.s32.totalorder %s33, 0
      %p75 = por %p73, %p74
      %p76 = scmp.ne.s32.totalorder %s64, %s65
      %p77 = scmp.eq.s32.totalorder %s34, 1
      %p78 = por %p76, %p77
      %p80 = scmp.ne.s32.totalorder %s65, %s79
      %p81 = scmp.eq.s32.totalorder %s34, 0
      %p82 = por %p80, %p81
      %s84 = sadd.s32 %s83, 1
      %p87 = scmp.eq.s32.totalorder %s28, 1
      %p88 = scmp.ne.s32.totalorder %s83, %s85
      %p89 = scmp.eq.s32.totalorder %s28, 0
      %p90 = por %p88, %p89
      %p91 = scmp.ne.s32.totalorder %s83, %s85
      %p92 = scmp.eq.s32.totalorder %s33, 1
      %p93 = por %p91, %p92
      %p94 = scmp.ne.s32.totalorder %s85, %s86
      %p95 = scmp.eq.s32.totalorder %s33, 0
      %p96 = por %p94, %p95
      %p97 = scmp.ne.s32.totalorder %s85, %s86
      %p98 = scmp.eq.s32.totalorder %s34, 1
      %p99 = por %p97, %p98
      %p101 = scmp.ne.s32.totalorder %s86, %s100
      %p102 = scmp.eq.s32.totalorder %s34, 0
      %p103 = por %p101, %p102
      %s105 = sadd.s32 %s104, 1
      %p108 = scmp.eq.s32.totalorder %s28, 1
      %p109 = scmp.ne.s32.totalorder %s104, %s106
      %p110 = scmp.eq.s32.totalorder %s28, 0
      %p111 = por %p109, %p110
      %p112 = scmp.ne.s32.totalorder %s104, %s106
      %p113 = scmp.eq.s32.totalorder %s33, 1
      %p114 = por %p112, %p113
      %p115 = scmp.ne.s32.totalorder %s106, %s107
      %p116 = scmp.eq.s32.totalorder %s33, 0
      %p117 = por %p115, %p116
      %p118 = scmp.ne.s32.totalorder %s106, %s107
      %p119 = scmp.eq.s32.totalorder %s34, 1
      %p120 = por %p118, %p119
      %p122 = scmp.ne.s32.totalorder %s107, %s121
      %p123 = scmp.eq.s32.totalorder %s34, 0
      %p124 = por %p122, %p123
      %s126 = sadd.s32 %s125, 1
      %p129 = scmp.eq.s32.totalorder %s28, 1
      %p130 = scmp.ne.s32.totalorder %s125, %s127
      %p131 = scmp.eq.s32.totalorder %s28, 0
      %p132 = por %p130, %p131
      %p133 = scmp.ne.s32.totalorder %s125, %s127
      %p134 = scmp.eq.s32.totalorder %s33, 1
      %p135 = por %p133, %p134
      %p136 = scmp.ne.s32.totalorder %s127, %s128
      %p137 = scmp.eq.s32.totalorder %s33, 0
      %p138 = por %p136, %p137
      %p139 = scmp.ne.s32.totalorder %s127, %s128
      %p140 = scmp.eq.s32.totalorder %s34, 1
      %p141 = por %p139, %p140
      %p143 = scmp.ne.s32.totalorder %s128, %s142
      %p144 = scmp.eq.s32.totalorder %s34, 0
      %p145 = por %p143, %p144
      %s147 = sadd.s32 %s146, 1
      %p150 = scmp.eq.s32.totalorder %s28, 1
      %p151 = scmp.ne.s32.totalorder %s146, %s148
      %p152 = scmp.eq.s32.totalorder %s28, 0
      %p153 = por %p151, %p152
      %p154 = scmp.ne.s32.totalorder %s146, %s148
      %p155 = scmp.eq.s32.totalorder %s33, 1
      %p156 = por %p154, %p155
      %p157 = scmp.ne.s32.totalorder %s148, %s149
      %p158 = scmp.eq.s32.totalorder %s33, 0
      %p159 = por %p157, %p158
      %p160 = scmp.ne.s32.totalorder %s148, %s149
      %p161 = scmp.eq.s32.totalorder %s34, 1
      %p162 = por %p160, %p161
      %p164 = scmp.ne.s32.totalorder %s149, %s163
      %p165 = scmp.eq.s32.totalorder %s34, 0
      %p166 = por %p164, %p165
      %s168 = sadd.s32 %s167, 1
      %p171 = scmp.eq.s32.totalorder %s28, 1
      %p172 = scmp.ne.s32.totalorder %s167, %s169
      %p173 = scmp.eq.s32.totalorder %s28, 0
      %p174 = por %p172, %p173
      %p175 = scmp.ne.s32.totalorder %s167, %s169
      %p176 = scmp.eq.s32.totalorder %s33, 1
      %p177 = por %p175, %p176
      %p178 = scmp.ne.s32.totalorder %s169, %s170
      %p179 = scmp.eq.s32.totalorder %s33, 0
      %p180 = por %p178, %p179
      %p181 = scmp.ne.s32.totalorder %s169, %s170
      %p182 = scmp.eq.s32.totalorder %s34, 1
      %p183 = por %p181, %p182
      %p185 = scmp.ne.s32.totalorder %s170, %s184
      %p186 = scmp.eq.s32.totalorder %s34, 0
      %p187 = por %p185, %p186
      %s189 = sadd.s32 %s188, 1
      %p192 = scmp.eq.s32.totalorder %s28, 1
      %p193 = scmp.ne.s32.totalorder %s188, %s190
      %p194 = scmp.eq.s32.totalorder %s28, 0
      %p195 = por %p193, %p194
      %p196 = scmp.ne.s32.totalorder %s188, %s190
      %p197 = scmp.eq.s32.totalorder %s33, 1
      %p198 = por %p196, %p197
      %p199 = scmp.ne.s32.totalorder %s190, %s191
      %p200 = scmp.eq.s32.totalorder %s33, 0
      %p201 = por %p199, %p200
      %p202 = scmp.ne.s32.totalorder %s190, %s191
      %p203 = scmp.eq.s32.totalorder %s34, 1
      %p204 = por %p202, %p203
      %p206 = scmp.ne.s32.totalorder %s191, %s205
      %p207 = scmp.eq.s32.totalorder %s34, 0
      %p208 = por %p206, %p207
      %s210 = sadd.s32 %s209, 1
      %p213 = scmp.eq.s32.totalorder %s28, 1
      %p214 = scmp.ne.s32.totalorder %s209, %s211
      %p215 = scmp.eq.s32.totalorder %s28, 0
      %p216 = por %p214, %p215
      %p217 = scmp.ne.s32.totalorder %s209, %s211
      %p218 = scmp.eq.s32.totalorder %s33, 1
      %p219 = por %p217, %p218
      %p220 = scmp.ne.s32.totalorder %s211, %s212
      %p221 = scmp.eq.s32.totalorder %s33, 0
      %p222 = por %p220, %p221
      %p223 = scmp.ne.s32.totalorder %s211, %s212
      %p224 = scmp.eq.s32.totalorder %s34, 1
      %p225 = por %p223, %p224
      %p227 = scmp.ne.s32.totalorder %s212, %s226
      %p228 = scmp.eq.s32.totalorder %s34, 0
      %p229 = por %p227, %p228
      %s231 = sadd.s32 %s230, 1
      %p234 = scmp.eq.s32.totalorder %s28, 1
      %p235 = scmp.ne.s32.totalorder %s230, %s232
      %p236 = scmp.eq.s32.totalorder %s28, 0
      %p237 = por %p235, %p236
      %p238 = scmp.ne.s32.totalorder %s230, %s232
      %p239 = scmp.eq.s32.totalorder %s33, 1
      %p240 = por %p238, %p239
      %p241 = scmp.ne.s32.totalorder %s232, %s233
      %p242 = scmp.eq.s32.totalorder %s33, 0
      %p243 = por %p241, %p242
      %p244 = scmp.ne.s32.totalorder %s232, %s233
      %p245 = scmp.eq.s32.totalorder %s34, 1
      %p246 = por %p244, %p245
      %p248 = scmp.ne.s32.totalorder %s233, %s247
      %p249 = scmp.eq.s32.totalorder %s34, 0
      %p250 = por %p248, %p249
      %s252 = sadd.s32 %s251, 1
      %p255 = scmp.eq.s32.totalorder %s28, 1
      %p256 = scmp.ne.s32.totalorder %s251, %s253
      %p257 = scmp.eq.s32.totalorder %s28, 0
      %p258 = por %p256, %p257
      %p259 = scmp.ne.s32.totalorder %s251, %s253
      %p260 = scmp.eq.s32.totalorder %s33, 1
      %p261 = por %p259, %p260
      %p262 = scmp.ne.s32.totalorder %s253, %s254
      %p263 = scmp.eq.s32.totalorder %s33, 0
      %p264 = por %p262, %p263
      %p265 = scmp.ne.s32.totalorder %s253, %s254
      %p266 = scmp.eq.s32.totalorder %s34, 1
      %p267 = por %p265, %p266
      %p269 = scmp.ne.s32.totalorder %s254, %s268
      %p270 = scmp.eq.s32.totalorder %s34, 0
      %p271 = por %p269, %p270
      %s273 = sadd.s32 %s272, 1
      %p276 = scmp.eq.s32.totalorder %s28, 1
      %p277 = scmp.ne.s32.totalorder %s272, %s274
      %p278 = scmp.eq.s32.totalorder %s28, 0
      %p279 = por %p277, %p278
      %p280 = scmp.ne.s32.totalorder %s272, %s274
      %p281 = scmp.eq.s32.totalorder %s33, 1
      %p282 = por %p280, %p281
      %p283 = scmp.ne.s32.totalorder %s274, %s275
      %p284 = scmp.eq.s32.totalorder %s33, 0
      %p285 = por %p283, %p284
      %p286 = scmp.ne.s32.totalorder %s274, %s275
      %p287 = scmp.eq.s32.totalorder %s34, 1
      %p288 = por %p286, %p287
      %p290 = scmp.ne.s32.totalorder %s275, %s289
      %p291 = scmp.eq.s32.totalorder %s34, 0
      %p292 = por %p290, %p291
      %s293 = ssub.s32 %s28, %s35
      %p294 = scmp.eq.s32.totalorder %s293, 0
      %s296 = sadd.s32 %s295, 1
      %s297 = scalar_select %p294, %s295, %s296
      %p300 = pneg %p294
      %p301 = scmp.eq.s32.totalorder %s28, 1
      %p302 = por %p300, %p301
      %p303 = scmp.ne.s32.totalorder %s295, %s298
      %p304 = scmp.eq.s32.totalorder %s28, 0
      %p305 = por %p303, %p304
      %p306 = scmp.ne.s32.totalorder %s295, %s298
      %p307 = scmp.eq.s32.totalorder %s33, 1
      %p308 = por %p306, %p307
      %p309 = scmp.ne.s32.totalorder %s298, %s299
      %p310 = scmp.eq.s32.totalorder %s33, 0
      %p311 = por %p309, %p310
      %p312 = scmp.ne.s32.totalorder %s298, %s299
      %p313 = scmp.eq.s32.totalorder %s34, 1
      %p314 = por %p312, %p313
      %p316 = scmp.ne.s32.totalorder %s299, %s315
      %p317 = scmp.eq.s32.totalorder %s34, 0
      %p318 = por %p316, %p317
      %p319 = scmp.le.s32.totalorder 1, %s28
      %p320 = scmp.lt.s32.totalorder %s28, 3
      %p321 = pnand %p319, %p320
      %p322 = pneg %p321
      // Predicated region
      $region9: #{block_forward.1} parent=5 // pred_check
        _
      $region10: #{block_forward.1} parent=5 // pred_check_branch
        %324 = sbr.rel (%p321) target = $region12
      $region11: #{block_forward.1} parent=5 // pred_region
        %s325 = ssub.s32 %s28, 1
        // Predicated region
        $region13: #{block_forward.1} parent=11 // pred_check
          %p326 = pneg %p75
        $region14: #{block_forward.1} parent=11 // pred_check_branch
          %328 = sbr.rel (%p326) target = $region16
        $region15: #{block_forward.1} parent=11 // pred_region
          _
        $region16: #{block_forward.1} parent=11 // pred_fallthru
          _
        // Predicated region
        $region17: #{block_forward.1} parent=11 // pred_check
          %p329 = pneg %p96
        $region18: #{block_forward.1} parent=11 // pred_check_branch
          %331 = sbr.rel (%p329) target = $region20
        $region19: #{block_forward.1} parent=11 // pred_region
          _
        $region20: #{block_forward.1} parent=11 // pred_fallthru
          _
        // Predicated region
        $region21: #{block_forward.1} parent=11 // pred_check
          %p332 = pneg %p117
        $region22: #{block_forward.1} parent=11 // pred_check_branch
          %334 = sbr.rel (%p332) target = $region24
        $region23: #{block_forward.1} parent=11 // pred_region
          %336 = vsyncadd [#allocation6], 0
          %s337 = sshll.u32 %s3, 4
          %s338 = int_to_ptr.hbm [resolvable:$true] %s337
          %s339 = sshll.u32 [#allocation5], 4
          %s340 = int_to_ptr.vmem [resolvable:$true] %s339
          %345 = dma.hbm_to_vmem [thread:$0]  %s338, 3072, %s340, [#allocation6], 192, 192, 12
        $region24: #{block_forward.1} parent=11 // pred_fallthru
          _
        // Predicated region
        $region25: #{block_forward.1} parent=11 // pred_check
          %p346 = pneg %p138
        $region26: #{block_forward.1} parent=11 // pred_check_branch
          %348 = sbr.rel (%p346) target = $region28
        $region27: #{block_forward.1} parent=11 // pred_region
          %350 = vsyncadd [#allocation6], 0
          %s351 = sshll.u32 %s4, 4
          %s352 = int_to_ptr.hbm [resolvable:$true] %s351
          %s353 = sshll.u32 [#allocation7], 4
          %s354 = int_to_ptr.vmem [resolvable:$true] %s353
          %359 = dma.hbm_to_vmem [thread:$0]  %s352, 1024, %s354, [#allocation6], 64, 64, 4
        $region28: #{block_forward.1} parent=11 // pred_fallthru
          _
        // Predicated region
        $region29: #{block_forward.1} parent=11 // pred_check
          %p360 = pneg %p159
        $region30: #{block_forward.1} parent=11 // pred_check_branch
          %362 = sbr.rel (%p360) target = $region32
        $region31: #{block_forward.1} parent=11 // pred_region
          %364 = vsyncadd [#allocation9], 0
          %s366 = sshll.u32 %s5, 4
          %s367 = int_to_ptr.hbm [resolvable:$true] %s366
          %s368 = sshll.u32 [#allocation8], 4
          %s369 = int_to_ptr.vmem [resolvable:$true] %s368
          %371 = dma.hbm_to_vmem [thread:$0]  %s367, 16, %s369, [#allocation9]
        $region32: #{block_forward.1} parent=11 // pred_fallthru
          _
        // Predicated region
        $region33: #{block_forward.1} parent=11 // pred_check
          %p372 = pneg %p180
        $region34: #{block_forward.1} parent=11 // pred_check_branch
          %374 = sbr.rel (%p372) target = $region36
        $region35: #{block_forward.1} parent=11 // pred_region
          _
        $region36: #{block_forward.1} parent=11 // pred_fallthru
          _
        // Predicated region
        $region37: #{block_forward.1} parent=11 // pred_check
          %p375 = pneg %p201
        $region38: #{block_forward.1} parent=11 // pred_check_branch
          %377 = sbr.rel (%p375) target = $region40
        $region39: #{block_forward.1} parent=11 // pred_region
          _
        $region40: #{block_forward.1} parent=11 // pred_fallthru
          _
        // Predicated region
        $region41: #{block_forward.1} parent=11 // pred_check
          %p378 = pneg %p222
        $region42: #{block_forward.1} parent=11 // pred_check_branch
          %380 = sbr.rel (%p378) target = $region44
        $region43: #{block_forward.1} parent=11 // pred_region
          %382 = vsyncadd [#allocation9], 0
          %s383 = sshll.u32 %s8, 4
          %s384 = int_to_ptr.hbm [resolvable:$true] %s383
          %s385 = sshll.u32 [#allocation10], 4
          %s386 = int_to_ptr.vmem [resolvable:$true] %s385
          %391 = dma.hbm_to_vmem [thread:$0]  %s384, 4096, %s386, [#allocation9], 256, 256, 16
        $region44: #{block_forward.1} parent=11 // pred_fallthru
          _
        // Predicated region
        $region45: #{block_forward.1} parent=11 // pred_check
          %p392 = pneg %p243
        $region46: #{block_forward.1} parent=11 // pred_check_branch
          %394 = sbr.rel (%p392) target = $region48
        $region47: #{block_forward.1} parent=11 // pred_region
          %396 = vsyncadd [#allocation12], 0
          %s398 = sshll.u32 %s9, 4
          %s399 = int_to_ptr.hbm [resolvable:$true] %s398
          %s400 = sshll.u32 [#allocation11], 4
          %s401 = int_to_ptr.vmem [resolvable:$true] %s400
          %403 = dma.hbm_to_vmem [thread:$0]  %s399, 64, %s401, [#allocation12]
        $region48: #{block_forward.1} parent=11 // pred_fallthru
          _
        // Predicated region
        $region49: #{block_forward.1} parent=11 // pred_check
          %p404 = pneg %p264
        $region50: #{block_forward.1} parent=11 // pred_check_branch
          %406 = sbr.rel (%p404) target = $region52
        $region51: #{block_forward.1} parent=11 // pred_region
          %408 = vsyncadd [#allocation12], 0
          %s409 = sshll.u32 %s10, 4
          %s410 = int_to_ptr.hbm [resolvable:$true] %s409
          %s411 = sshll.u32 [#allocation13], 4
          %s412 = int_to_ptr.vmem [resolvable:$true] %s411
          %417 = dma.hbm_to_vmem [thread:$0]  %s410, 4096, %s412, [#allocation12], 64, 64, 4
        $region52: #{block_forward.1} parent=11 // pred_fallthru
          _
        // Predicated region
        $region53: #{block_forward.1} parent=11 // pred_check
          %p418 = pneg %p285
        $region54: #{block_forward.1} parent=11 // pred_check_branch
          %420 = sbr.rel (%p418) target = $region56
        $region55: #{block_forward.1} parent=11 // pred_region
          %422 = vsyncadd [#allocation15], 0
          %s424 = sshll.u32 %s11, 4
          %s425 = int_to_ptr.hbm [resolvable:$true] %s424
          %s426 = sshll.u32 [#allocation14], 4
          %s427 = int_to_ptr.vmem [resolvable:$true] %s426
          %429 = dma.hbm_to_vmem [thread:$0]  %s425, 16, %s427, [#allocation15]
        $region56: #{block_forward.1} parent=11 // pred_fallthru
          _
      $region12: #{block_forward.1} parent=5 // pred_fallthru
        _
      %p430 = scmp.lt.s32.totalorder %s28, 2
      // Predicated region
      $region57: #{block_forward.1} parent=5 // pred_check
        %p431 = pneg %p430
      $region58: #{block_forward.1} parent=5 // pred_check_branch
        %433 = sbr.rel (%p431) target = $region60
      $region59: #{block_forward.1} parent=5 // pred_region
        // Predicated region
        $region61: #{block_forward.1} parent=59 // pred_check
          %p434 = pneg %p48
        $region62: #{block_forward.1} parent=59 // pred_check_branch
          %436 = sbr.rel (%p434) target = $region64
        $region63: #{block_forward.1} parent=59 // pred_region
          %s437 = sand.u32 %s38, 1
          %s438 = scalar_lea.sflag [#allocation3], %s437
          %s439 = sand.u32 %s38, 1
          %s440 = smul.addr %s439, 128
          %s441 = scalar_lea.vmem [#allocation2], %s440
          %s442 = smul.u32 2, %s28
          %444 = vsyncadd %s438, 0
          %s445 = smul.addr %s442, 8
          %s446 = smul.addr %s445, 8
          %s447 = scalar_lea.hbm %s0, %s446
          %s448 = sshll.u32 %s447, 4
          %s449 = int_to_ptr.hbm [resolvable:$true] %s448
          %s450 = sshll.u32 %s441, 4
          %s451 = int_to_ptr.vmem [resolvable:$true] %s450
          %456 = dma.hbm_to_vmem [thread:$0]  %s449, 2048, %s451, %s438, 128, 128, 8
        $region64: #{block_forward.1} parent=59 // pred_fallthru
          _
      $region60: #{block_forward.1} parent=5 // pred_fallthru
        _
      %p457 = scmp.le.s32.totalorder 1, %s28
      %p458 = scmp.lt.s32.totalorder %s28, 3
      %p459 = pnand %p457, %p458
      %p460 = pneg %p459
      // Predicated region
      $region65: #{block_forward.1} parent=5 // pred_check
        _
      $region66: #{block_forward.1} parent=5 // pred_check_branch
        %462 = sbr.rel (%p459) target = $region68
      $region67: #{block_forward.1} parent=5 // pred_region
        %s463 = ssub.s32 %s28, 1
        %s464 = sand.u32 %s41, 1
        %s465 = scalar_lea.sflag [#allocation3], %s464
        %s466 = sand.u32 %s41, 1
        %s467 = smul.addr %s466, 128
        %s468 = scalar_lea.vmem [#allocation2], %s467
        // Predicated region
        $region69: #{block_forward.1} parent=67 // pred_check
          %p469 = pneg %p54
        $region70: #{block_forward.1} parent=67 // pred_check_branch
          %471 = sbr.rel (%p469) target = $region72
        $region71: #{block_forward.1} parent=67 // pred_region
          %473 = dma.done %s465, 2048
        $region72: #{block_forward.1} parent=67 // pred_fallthru
          _
        // Predicated region
        $region73: #{block_forward.1} parent=67 // pred_check
          %p474 = pneg %p117
        $region74: #{block_forward.1} parent=67 // pred_check_branch
          %476 = sbr.rel (%p474) target = $region76
        $region75: #{block_forward.1} parent=67 // pred_region
          %478 = dma.done [#allocation6], 3072
        $region76: #{block_forward.1} parent=67 // pred_fallthru
          _
        // Predicated region
        $region77: #{block_forward.1} parent=67 // pred_check
          %p479 = pneg %p138
        $region78: #{block_forward.1} parent=67 // pred_check_branch
          %481 = sbr.rel (%p479) target = $region80
        $region79: #{block_forward.1} parent=67 // pred_region
          %483 = dma.done [#allocation6], 1024
        $region80: #{block_forward.1} parent=67 // pred_fallthru
          _
        // Predicated region
        $region81: #{block_forward.1} parent=67 // pred_check
          %p484 = pneg %p159
        $region82: #{block_forward.1} parent=67 // pred_check_branch
          %486 = sbr.rel (%p484) target = $region84
        $region83: #{block_forward.1} parent=67 // pred_region
          %488 = dma.done [#allocation9], 16
        $region84: #{block_forward.1} parent=67 // pred_fallthru
          _
        // Predicated region
        $region85: #{block_forward.1} parent=67 // pred_check
          %p489 = pneg %p222
        $region86: #{block_forward.1} parent=67 // pred_check_branch
          %491 = sbr.rel (%p489) target = $region88
        $region87: #{block_forward.1} parent=67 // pred_region
          %493 = dma.done [#allocation9], 4096
        $region88: #{block_forward.1} parent=67 // pred_fallthru
          _
        // Predicated region
        $region89: #{block_forward.1} parent=67 // pred_check
          %p494 = pneg %p243
        $region90: #{block_forward.1} parent=67 // pred_check_branch
          %496 = sbr.rel (%p494) target = $region92
        $region91: #{block_forward.1} parent=67 // pred_region
          %498 = dma.done [#allocation12], 64
        $region92: #{block_forward.1} parent=67 // pred_fallthru
          _
        // Predicated region
        $region93: #{block_forward.1} parent=67 // pred_check
          %p499 = pneg %p264
        $region94: #{block_forward.1} parent=67 // pred_check_branch
          %501 = sbr.rel (%p499) target = $region96
        $region95: #{block_forward.1} parent=67 // pred_region
          %503 = dma.done [#allocation12], 4096
        $region96: #{block_forward.1} parent=67 // pred_fallthru
          _
        // Predicated region
        $region97: #{block_forward.1} parent=67 // pred_check
          %p504 = pneg %p285
        $region98: #{block_forward.1} parent=67 // pred_check_branch
          %506 = sbr.rel (%p504) target = $region100
        $region99: #{block_forward.1} parent=67 // pred_region
          %508 = dma.done [#allocation15], 16
        $region100: #{block_forward.1} parent=67 // pred_fallthru
          _
        %s509 = sand.u32 %s41, 1
        %s510 = scalar_lea.sflag [#allocation3], %s509
        %s511 = sand.u32 %s41, 1
        %s512 = smul.addr %s511, 128
        %s513 = scalar_lea.vmem [#allocation2], %s512
        %p514 = pneg %p54
        %p515 = pneg %p51
        %p516 = pneg %p75
        %p517 = pneg %p72
        %p518 = pneg %p96
        %p519 = pneg %p93
        %p520 = pneg %p117
        %p521 = pneg %p114
        %p522 = pneg %p138
        %p523 = pneg %p135
        %p524 = pneg %p159
        %p525 = pneg %p156
        %p526 = pneg %p180
        %p527 = pneg %p177
        %p528 = pneg %p201
        %p529 = pneg %p198
        %p530 = pneg %p222
        %p531 = pneg %p219
        %p532 = pneg %p243
        %p533 = pneg %p240
        %p534 = pneg %p264
        %p535 = pneg %p261
        %p536 = pneg %p285
        %p537 = pneg %p282
        %p538 = pneg %p311
        %p539 = pneg %p308
        %s540 = sand.u32 %s298, 1
        %s541 = scalar_lea.sflag [#allocation4], %s540
        %s542 = sand.u32 %s298, 1
        %s543 = smul.addr %s542, 128
        %s544 = scalar_lea.vmem [#allocation16], %s543
        %s545 = smul.u32 2, %s33
        %s546 = smul.u32 2, %s33
        %v548 = vld [vmem:[%s468] sm:$0xff]
        %v549 = vld [vmem:[%s468 + $0x8] sm:$0xff]
        %v550 = vld [vmem:[%s468 + $0x10] sm:$0xff]
        %v551 = vld [vmem:[%s468 + $0x18] sm:$0xff]
        %v552 = vld [vmem:[%s468 + $0x20] sm:$0xff]
        %v553 = vld [vmem:[%s468 + $0x28] sm:$0xff]
        %v554 = vld [vmem:[%s468 + $0x30] sm:$0xff]
        %v555 = vld [vmem:[%s468 + $0x38] sm:$0xff]
        %v556 = vld [vmem:[%s468 + $0x40] sm:$0xff]
        %v557 = vld [vmem:[%s468 + $0x48] sm:$0xff]
        %v558 = vld [vmem:[%s468 + $0x50] sm:$0xff]
        %v559 = vld [vmem:[%s468 + $0x58] sm:$0xff]
        %v560 = vld [vmem:[%s468 + $0x60] sm:$0xff]
        %v561 = vld [vmem:[%s468 + $0x68] sm:$0xff]
        %v562 = vld [vmem:[%s468 + $0x70] sm:$0xff]
        %v563 = vld [vmem:[%s468 + $0x78] sm:$0xff]
        %v564 = vld [vmem:[%s1] sm:$0x1]
        %v565 = vld [vmem:[%s2] sm:$0x1]
        %566 = vadd.xlane.f32.xlu0 %v548
        %v567 = vpop.xlane.xlu0 %566
        %568 = vadd.xlane.f32.xlu0 %v549
        %v569 = vpop.xlane.xlu0 %568
        %570 = vadd.xlane.f32.xlu0 %v550
        %v571 = vpop.xlane.xlu0 %570
        %572 = vadd.xlane.f32.xlu0 %v551
        %v573 = vpop.xlane.xlu0 %572
        %574 = vadd.xlane.f32.xlu0 %v552
        %v575 = vpop.xlane.xlu0 %574
        %576 = vadd.xlane.f32.xlu0 %v553
        %v577 = vpop.xlane.xlu0 %576
        %578 = vadd.xlane.f32.xlu0 %v554
        %v579 = vpop.xlane.xlu0 %578
        %580 = vadd.xlane.f32.xlu0 %v555
        %v581 = vpop.xlane.xlu0 %580
        %582 = vadd.xlane.f32.xlu0 %v556
        %v583 = vpop.xlane.xlu0 %582
        %584 = vadd.xlane.f32.xlu0 %v557
        %v585 = vpop.xlane.xlu0 %584
        %586 = vadd.xlane.f32.xlu0 %v558
        %v587 = vpop.xlane.xlu0 %586
        %588 = vadd.xlane.f32.xlu0 %v559
        %v589 = vpop.xlane.xlu0 %588
        %590 = vadd.xlane.f32.xlu0 %v560
        %v591 = vpop.xlane.xlu0 %590
        %592 = vadd.xlane.f32.xlu0 %v561
        %v593 = vpop.xlane.xlu0 %592
        %594 = vadd.xlane.f32.xlu0 %v562
        %v595 = vpop.xlane.xlu0 %594
        %596 = vadd.xlane.f32.xlu0 %v563
        %v597 = vpop.xlane.xlu0 %596
        %v598 = vrcp.pop 128.0
        %v599 = vmul.f32 128.0, %v598
        %v600 = vsub.f32 1.0, %v599
        %v601 = vmul.f32 %v598, %v600
        %v602 = vadd.f32 %v598, %v601
        %vm603 = vweird.f32 %v598
        %v604 = vsel %vm603, %v598, %v602
        %v605 = vmul.f32 %v567, %v604
        %v606 = vmul.f32 %v569, %v604
        %v607 = vmul.f32 %v571, %v604
        %v608 = vmul.f32 %v573, %v604
        %v609 = vmul.f32 %v575, %v604
        %v610 = vmul.f32 %v577, %v604
        %v611 = vmul.f32 %v579, %v604
        %v612 = vmul.f32 %v581, %v604
        %v613 = vmul.f32 %v583, %v604
        %v614 = vmul.f32 %v585, %v604
        %v615 = vmul.f32 %v587, %v604
        %v616 = vmul.f32 %v589, %v604
        %v617 = vmul.f32 %v591, %v604
        %v618 = vmul.f32 %v593, %v604
        %v619 = vmul.f32 %v595, %v604
        %v620 = vmul.f32 %v597, %v604
        %v621 = vsub.f32 %v548, %v605
        %v622 = vsub.f32 %v549, %v606
        %v623 = vsub.f32 %v550, %v607
        %v624 = vsub.f32 %v551, %v608
        %v625 = vsub.f32 %v552, %v609
        %v626 = vsub.f32 %v553, %v610
        %v627 = vsub.f32 %v554, %v611
        %v628 = vsub.f32 %v555, %v612
        %v629 = vsub.f32 %v556, %v613
        %v630 = vsub.f32 %v557, %v614
        %v631 = vsub.f32 %v558, %v615
        %v632 = vsub.f32 %v559, %v616
        %v633 = vsub.f32 %v560, %v617
        %v634 = vsub.f32 %v561, %v618
        %v635 = vsub.f32 %v562, %v619
        %v636 = vsub.f32 %v563, %v620
        %v637 = vmul.f32 %v621, %v621
        %v638 = vmul.f32 %v622, %v622
        %v639 = vmul.f32 %v623, %v623
        %v640 = vmul.f32 %v624, %v624
        %v641 = vmul.f32 %v625, %v625
        %v642 = vmul.f32 %v626, %v626
        %v643 = vmul.f32 %v627, %v627
        %v644 = vmul.f32 %v628, %v628
        %v645 = vmul.f32 %v629, %v629
        %v646 = vmul.f32 %v630, %v630
        %v647 = vmul.f32 %v631, %v631
        %v648 = vmul.f32 %v632, %v632
        %v649 = vmul.f32 %v633, %v633
        %v650 = vmul.f32 %v634, %v634
        %v651 = vmul.f32 %v635, %v635
        %v652 = vmul.f32 %v636, %v636
        %653 = vadd.xlane.f32.xlu0 %v637
        %v654 = vpop.xlane.xlu0 %653
        %655 = vadd.xlane.f32.xlu0 %v638
        %v656 = vpop.xlane.xlu0 %655
        %657 = vadd.xlane.f32.xlu0 %v639
        %v658 = vpop.xlane.xlu0 %657
        %659 = vadd.xlane.f32.xlu0 %v640
        %v660 = vpop.xlane.xlu0 %659
        %661 = vadd.xlane.f32.xlu0 %v641
        %v662 = vpop.xlane.xlu0 %661
        %663 = vadd.xlane.f32.xlu0 %v642
        %v664 = vpop.xlane.xlu0 %663
        %665 = vadd.xlane.f32.xlu0 %v643
        %v666 = vpop.xlane.xlu0 %665
        %667 = vadd.xlane.f32.xlu0 %v644
        %v668 = vpop.xlane.xlu0 %667
        %669 = vadd.xlane.f32.xlu0 %v645
        %v670 = vpop.xlane.xlu0 %669
        %671 = vadd.xlane.f32.xlu0 %v646
        %v672 = vpop.xlane.xlu0 %671
        %673 = vadd.xlane.f32.xlu0 %v647
        %v674 = vpop.xlane.xlu0 %673
        %675 = vadd.xlane.f32.xlu0 %v648
        %v676 = vpop.xlane.xlu0 %675
        %677 = vadd.xlane.f32.xlu0 %v649
        %v678 = vpop.xlane.xlu0 %677
        %679 = vadd.xlane.f32.xlu0 %v650
        %v680 = vpop.xlane.xlu0 %679
        %681 = vadd.xlane.f32.xlu0 %v651
        %v682 = vpop.xlane.xlu0 %681
        %683 = vadd.xlane.f32.xlu0 %v652
        %v684 = vpop.xlane.xlu0 %683
        %v685 = vmul.f32 %v654, %v604
        %v686 = vmul.f32 %v656, %v604
        %v687 = vmul.f32 %v658, %v604
        %v688 = vmul.f32 %v660, %v604
        %v689 = vmul.f32 %v662, %v604
        %v690 = vmul.f32 %v664, %v604
        %v691 = vmul.f32 %v666, %v604
        %v692 = vmul.f32 %v668, %v604
        %v693 = vmul.f32 %v670, %v604
        %v694 = vmul.f32 %v672, %v604
        %v695 = vmul.f32 %v674, %v604
        %v696 = vmul.f32 %v676, %v604
        %v697 = vmul.f32 %v678, %v604
        %v698 = vmul.f32 %v680, %v604
        %v699 = vmul.f32 %v682, %v604
        %v700 = vmul.f32 %v684, %v604
        %v701 = vadd.f32 %v685, 1e-05
        %v702 = vadd.f32 %v686, 1e-05
        %v703 = vadd.f32 %v687, 1e-05
        %v704 = vadd.f32 %v688, 1e-05
        %v705 = vadd.f32 %v689, 1e-05
        %v706 = vadd.f32 %v690, 1e-05
        %v707 = vadd.f32 %v691, 1e-05
        %v708 = vadd.f32 %v692, 1e-05
        %v709 = vadd.f32 %v693, 1e-05
        %v710 = vadd.f32 %v694, 1e-05
        %v711 = vadd.f32 %v695, 1e-05
        %v712 = vadd.f32 %v696, 1e-05
        %v713 = vadd.f32 %v697, 1e-05
        %v714 = vadd.f32 %v698, 1e-05
        %v715 = vadd.f32 %v699, 1e-05
        %v716 = vadd.f32 %v700, 1e-05
        %v717 = vrsqrt.pop %v701
        %v718 = vmul.f32 %v717, %v701
        %v719 = vmul.f32 %v718, %v717
        %v720 = vmul.f32 0.5, %v719
        %v721 = vsub.f32 1.5, %v720
        %v722 = vmul.f32 %v717, %v721
        %vm723 = vweird.f32 %v701
        %vm724 = vweird.f32 %v717
        %vm725 = vmor %vm723, %vm724
        %v726 = vsel %vm725, %v717, %v722
        %v727 = vrsqrt.pop %v702
        %v728 = vmul.f32 %v727, %v702
        %v729 = vmul.f32 %v728, %v727
        %v730 = vmul.f32 0.5, %v729
        %v731 = vsub.f32 1.5, %v730
        %v732 = vmul.f32 %v727, %v731
        %vm733 = vweird.f32 %v702
        %vm734 = vweird.f32 %v727
        %vm735 = vmor %vm733, %vm734
        %v736 = vsel %vm735, %v727, %v732
        %v737 = vrsqrt.pop %v703
        %v738 = vmul.f32 %v737, %v703
        %v739 = vmul.f32 %v738, %v737
        %v740 = vmul.f32 0.5, %v739
        %v741 = vsub.f32 1.5, %v740
        %v742 = vmul.f32 %v737, %v741
        %vm743 = vweird.f32 %v703
        %vm744 = vweird.f32 %v737
        %vm745 = vmor %vm743, %vm744
        %v746 = vsel %vm745, %v737, %v742
        %v747 = vrsqrt.pop %v704
        %v748 = vmul.f32 %v747, %v704
        %v749 = vmul.f32 %v748, %v747
        %v750 = vmul.f32 0.5, %v749
        %v751 = vsub.f32 1.5, %v750
        %v752 = vmul.f32 %v747, %v751
        %vm753 = vweird.f32 %v704
        %vm754 = vweird.f32 %v747
        %vm755 = vmor %vm753, %vm754
        %v756 = vsel %vm755, %v747, %v752
        %v757 = vrsqrt.pop %v705
        %v758 = vmul.f32 %v757, %v705
        %v759 = vmul.f32 %v758, %v757
        %v760 = vmul.f32 0.5, %v759
        %v761 = vsub.f32 1.5, %v760
        %v762 = vmul.f32 %v757, %v761
        %vm763 = vweird.f32 %v705
        %vm764 = vweird.f32 %v757
        %vm765 = vmor %vm763, %vm764
        %v766 = vsel %vm765, %v757, %v762
        %v767 = vrsqrt.pop %v706
        %v768 = vmul.f32 %v767, %v706
        %v769 = vmul.f32 %v768, %v767
        %v770 = vmul.f32 0.5, %v769
        %v771 = vsub.f32 1.5, %v770
        %v772 = vmul.f32 %v767, %v771
        %vm773 = vweird.f32 %v706
        %vm774 = vweird.f32 %v767
        %vm775 = vmor %vm773, %vm774
        %v776 = vsel %vm775, %v767, %v772
        %v777 = vrsqrt.pop %v707
        %v778 = vmul.f32 %v777, %v707
        %v779 = vmul.f32 %v778, %v777
        %v780 = vmul.f32 0.5, %v779
        %v781 = vsub.f32 1.5, %v780
        %v782 = vmul.f32 %v777, %v781
        %vm783 = vweird.f32 %v707
        %vm784 = vweird.f32 %v777
        %vm785 = vmor %vm783, %vm784
        %v786 = vsel %vm785, %v777, %v782
        %v787 = vrsqrt.pop %v708
        %v788 = vmul.f32 %v787, %v708
        %v789 = vmul.f32 %v788, %v787
        %v790 = vmul.f32 0.5, %v789
        %v791 = vsub.f32 1.5, %v790
        %v792 = vmul.f32 %v787, %v791
        %vm793 = vweird.f32 %v708
        %vm794 = vweird.f32 %v787
        %vm795 = vmor %vm793, %vm794
        %v796 = vsel %vm795, %v787, %v792
        %v797 = vrsqrt.pop %v709
        %v798 = vmul.f32 %v797, %v709
        %v799 = vmul.f32 %v798, %v797
        %v800 = vmul.f32 0.5, %v799
        %v801 = vsub.f32 1.5, %v800
        %v802 = vmul.f32 %v797, %v801
        %vm803 = vweird.f32 %v709
        %vm804 = vweird.f32 %v797
        %vm805 = vmor %vm803, %vm804
        %v806 = vsel %vm805, %v797, %v802
        %v807 = vrsqrt.pop %v710
        %v808 = vmul.f32 %v807, %v710
        %v809 = vmul.f32 %v808, %v807
        %v810 = vmul.f32 0.5, %v809
        %v811 = vsub.f32 1.5, %v810
        %v812 = vmul.f32 %v807, %v811
        %vm813 = vweird.f32 %v710
        %vm814 = vweird.f32 %v807
        %vm815 = vmor %vm813, %vm814
        %v816 = vsel %vm815, %v807, %v812
        %v817 = vrsqrt.pop %v711
        %v818 = vmul.f32 %v817, %v711
        %v819 = vmul.f32 %v818, %v817
        %v820 = vmul.f32 0.5, %v819
        %v821 = vsub.f32 1.5, %v820
        %v822 = vmul.f32 %v817, %v821
        %vm823 = vweird.f32 %v711
        %vm824 = vweird.f32 %v817
        %vm825 = vmor %vm823, %vm824
        %v826 = vsel %vm825, %v817, %v822
        %v827 = vrsqrt.pop %v712
        %v828 = vmul.f32 %v827, %v712
        %v829 = vmul.f32 %v828, %v827
        %v830 = vmul.f32 0.5, %v829
        %v831 = vsub.f32 1.5, %v830
        %v832 = vmul.f32 %v827, %v831
        %vm833 = vweird.f32 %v712
        %vm834 = vweird.f32 %v827
        %vm835 = vmor %vm833, %vm834
        %v836 = vsel %vm835, %v827, %v832
        %v837 = vrsqrt.pop %v713
        %v838 = vmul.f32 %v837, %v713
        %v839 = vmul.f32 %v838, %v837
        %v840 = vmul.f32 0.5, %v839
        %v841 = vsub.f32 1.5, %v840
        %v842 = vmul.f32 %v837, %v841
        %vm843 = vweird.f32 %v713
        %vm844 = vweird.f32 %v837
        %vm845 = vmor %vm843, %vm844
        %v846 = vsel %vm845, %v837, %v842
        %v847 = vrsqrt.pop %v714
        %v848 = vmul.f32 %v847, %v714
        %v849 = vmul.f32 %v848, %v847
        %v850 = vmul.f32 0.5, %v849
        %v851 = vsub.f32 1.5, %v850
        %v852 = vmul.f32 %v847, %v851
        %vm853 = vweird.f32 %v714
        %vm854 = vweird.f32 %v847
        %vm855 = vmor %vm853, %vm854
        %v856 = vsel %vm855, %v847, %v852
        %v857 = vrsqrt.pop %v715
        %v858 = vmul.f32 %v857, %v715
        %v859 = vmul.f32 %v858, %v857
        %v860 = vmul.f32 0.5, %v859
        %v861 = vsub.f32 1.5, %v860
        %v862 = vmul.f32 %v857, %v861
        %vm863 = vweird.f32 %v715
        %vm864 = vweird.f32 %v857
        %vm865 = vmor %vm863, %vm864
        %v866 = vsel %vm865, %v857, %v862
        %v867 = vrsqrt.pop %v716
        %v868 = vmul.f32 %v867, %v716
        %v869 = vmul.f32 %v868, %v867
        %v870 = vmul.f32 0.5, %v869
        %v871 = vsub.f32 1.5, %v870
        %v872 = vmul.f32 %v867, %v871
        %vm873 = vweird.f32 %v716
        %vm874 = vweird.f32 %v867
        %vm875 = vmor %vm873, %vm874
        %v876 = vsel %vm875, %v867, %v872
        %v877 = vmul.f32 %v621, %v726
        %v878 = vmul.f32 %v622, %v736
        %v879 = vmul.f32 %v623, %v746
        %v880 = vmul.f32 %v624, %v756
        %v881 = vmul.f32 %v625, %v766
        %v882 = vmul.f32 %v626, %v776
        %v883 = vmul.f32 %v627, %v786
        %v884 = vmul.f32 %v628, %v796
        %v885 = vmul.f32 %v629, %v806
        %v886 = vmul.f32 %v630, %v816
        %v887 = vmul.f32 %v631, %v826
        %v888 = vmul.f32 %v632, %v836
        %v889 = vmul.f32 %v633, %v846
        %v890 = vmul.f32 %v634, %v856
        %v891 = vmul.f32 %v635, %v866
        %v892 = vmul.f32 %v636, %v876
        %v894 = vperm.slane %v564, 0
        %v896 = vmul.f32 %v877, %v894
        %v897 = vmul.f32 %v878, %v894
        %v898 = vmul.f32 %v879, %v894
        %v899 = vmul.f32 %v880, %v894
        %v900 = vmul.f32 %v881, %v894
        %v901 = vmul.f32 %v882, %v894
        %v902 = vmul.f32 %v883, %v894
        %v903 = vmul.f32 %v884, %v894
        %v904 = vmul.f32 %v885, %v894
        %v905 = vmul.f32 %v886, %v894
        %v906 = vmul.f32 %v887, %v894
        %v907 = vmul.f32 %v888, %v894
        %v908 = vmul.f32 %v889, %v894
        %v909 = vmul.f32 %v890, %v894
        %v910 = vmul.f32 %v891, %v894
        %v911 = vmul.f32 %v892, %v894
        %v913 = vperm.slane %v565, 0
        %v915 = vadd.f32 %v896, %v913
        %v916 = vadd.f32 %v897, %v913
        %v917 = vadd.f32 %v898, %v913
        %v918 = vadd.f32 %v899, %v913
        %v919 = vadd.f32 %v900, %v913
        %v920 = vadd.f32 %v901, %v913
        %v921 = vadd.f32 %v902, %v913
        %v922 = vadd.f32 %v903, %v913
        %v923 = vadd.f32 %v904, %v913
        %v924 = vadd.f32 %v905, %v913
        %v925 = vadd.f32 %v906, %v913
        %v926 = vadd.f32 %v907, %v913
        %v927 = vadd.f32 %v908, %v913
        %v928 = vadd.f32 %v909, %v913
        %v929 = vadd.f32 %v910, %v913
        %v930 = vadd.f32 %v911, %v913
        %v931 = vpack.c.bf16 %v916, %v915
        %v932 = vpack.c.bf16 %v918, %v917
        %v933 = vpack.c.bf16 %v920, %v919
        %v934 = vpack.c.bf16 %v922, %v921
        %v935 = vpack.c.bf16 %v924, %v923
        %v936 = vpack.c.bf16 %v926, %v925
        %v937 = vpack.c.bf16 %v928, %v927
        %v938 = vpack.c.bf16 %v930, %v929
        %v939 = vld [vmem:[#allocation5] sm:$0xff]
        %v940 = vld [vmem:[#allocation5 + $0x8] sm:$0xf]
        %v941 = vld [vmem:[#allocation5 + $0xc] sm:$0xff]
        %v942 = vld [vmem:[#allocation5 + $0x14] sm:$0xf]
        %v943 = vld [vmem:[#allocation5 + $0x18] sm:$0xff]
        %v944 = vld [vmem:[#allocation5 + $0x20] sm:$0xf]
        %v945 = vld [vmem:[#allocation5 + $0x24] sm:$0xff]
        %v946 = vld [vmem:[#allocation5 + $0x2c] sm:$0xf]
        %v947 = vld [vmem:[#allocation5 + $0x30] sm:$0xff]
        %v948 = vld [vmem:[#allocation5 + $0x38] sm:$0xf]
        %v949 = vld [vmem:[#allocation5 + $0x3c] sm:$0xff]
        %v950 = vld [vmem:[#allocation5 + $0x44] sm:$0xf]
        %v951 = vld [vmem:[#allocation5 + $0x48] sm:$0xff]
        %v952 = vld [vmem:[#allocation5 + $0x50] sm:$0xf]
        %v953 = vld [vmem:[#allocation5 + $0x54] sm:$0xff]
        %v954 = vld [vmem:[#allocation5 + $0x5c] sm:$0xf]
        %v955 = vld [vmem:[#allocation5 + $0x60] sm:$0xff]
        %v956 = vld [vmem:[#allocation5 + $0x68] sm:$0xf]
        %v957 = vld [vmem:[#allocation5 + $0x6c] sm:$0xff]
        %v958 = vld [vmem:[#allocation5 + $0x74] sm:$0xf]
        %v959 = vld [vmem:[#allocation5 + $0x78] sm:$0xff]
        %v960 = vld [vmem:[#allocation5 + $0x80] sm:$0xf]
        %v961 = vld [vmem:[#allocation5 + $0x84] sm:$0xff]
        %v962 = vld [vmem:[#allocation5 + $0x8c] sm:$0xf]
        %v963 = vld [vmem:[#allocation5 + $0x90] sm:$0xff]
        %v964 = vld [vmem:[#allocation5 + $0x98] sm:$0xf]
        %v965 = vld [vmem:[#allocation5 + $0x9c] sm:$0xff]
        %v966 = vld [vmem:[#allocation5 + $0xa4] sm:$0xf]
        %v967 = vld [vmem:[#allocation5 + $0xa8] sm:$0xff]
        %v968 = vld [vmem:[#allocation5 + $0xb0] sm:$0xf]
        %v969 = vld [vmem:[#allocation5 + $0xb4] sm:$0xff]
        %v970 = vld [vmem:[#allocation5 + $0xbc] sm:$0xf]
        %v1003 = vunpack.c.l.b16 %v939
        %v1004 = vunpack.c.h.b16 %v939
        %v1005 = vunpack.c.l.b16 %v940
        %v1006 = vunpack.c.l.b16 %v941
        %v1007 = vunpack.c.h.b16 %v941
        %v1008 = vunpack.c.l.b16 %v942
        %v1009 = vunpack.c.l.b16 %v943
        %v1010 = vunpack.c.h.b16 %v943
        %v1011 = vunpack.c.l.b16 %v944
        %v1012 = vunpack.c.l.b16 %v945
        %v1013 = vunpack.c.h.b16 %v945
        %v1014 = vunpack.c.l.b16 %v946
        %v1015 = vunpack.c.l.b16 %v947
        %v1016 = vunpack.c.h.b16 %v947
        %v1017 = vunpack.c.l.b16 %v948
        %v1018 = vunpack.c.l.b16 %v949
        %v1019 = vunpack.c.h.b16 %v949
        %v1020 = vunpack.c.l.b16 %v950
        %v1021 = vunpack.c.l.b16 %v951
        %v1022 = vunpack.c.h.b16 %v951
        %v1023 = vunpack.c.l.b16 %v952
        %v1024 = vunpack.c.l.b16 %v953
        %v1025 = vunpack.c.h.b16 %v953
        %v1026 = vunpack.c.l.b16 %v954
        %v1027 = vunpack.c.l.b16 %v955
        %v1028 = vunpack.c.h.b16 %v955
        %v1029 = vunpack.c.l.b16 %v956
        %v1030 = vunpack.c.l.b16 %v957
        %v1031 = vunpack.c.h.b16 %v957
        %v1032 = vunpack.c.l.b16 %v958
        %v1033 = vunpack.c.l.b16 %v959
        %v1034 = vunpack.c.h.b16 %v959
        %v1035 = vunpack.c.l.b16 %v960
        %v1036 = vunpack.c.l.b16 %v961
        %v1037 = vunpack.c.h.b16 %v961
        %v1038 = vunpack.c.l.b16 %v962
        %v1039 = vunpack.c.l.b16 %v963
        %v1040 = vunpack.c.h.b16 %v963
        %v1041 = vunpack.c.l.b16 %v964
        %v1042 = vunpack.c.l.b16 %v965
        %v1043 = vunpack.c.h.b16 %v965
        %v1044 = vunpack.c.l.b16 %v966
        %v1045 = vunpack.c.l.b16 %v967
        %v1046 = vunpack.c.h.b16 %v967
        %v1047 = vunpack.c.l.b16 %v968
        %v1048 = vunpack.c.l.b16 %v969
        %v1049 = vunpack.c.h.b16 %v969
        %v1050 = vunpack.c.l.b16 %v970
        %v1051 = vpack.c.b16 %v1006, %v1003
        %v1052 = vpack.c.b16 %v1007, %v1004
        %v1053 = vpack.c.b16 %v1008, %v1005
        %v1054 = vpack.c.b16 %v1012, %v1009
        %v1055 = vpack.c.b16 %v1013, %v1010
        %v1056 = vpack.c.b16 %v1014, %v1011
        %v1057 = vpack.c.b16 %v1018, %v1015
        %v1058 = vpack.c.b16 %v1019, %v1016
        %v1059 = vpack.c.b16 %v1020, %v1017
        %v1060 = vpack.c.b16 %v1024, %v1021
        %v1061 = vpack.c.b16 %v1025, %v1022
        %v1062 = vpack.c.b16 %v1026, %v1023
        %v1063 = vpack.c.b16 %v1030, %v1027
        %v1064 = vpack.c.b16 %v1031, %v1028
        %v1065 = vpack.c.b16 %v1032, %v1029
        %v1066 = vpack.c.b16 %v1036, %v1033
        %v1067 = vpack.c.b16 %v1037, %v1034
        %v1068 = vpack.c.b16 %v1038, %v1035
        %v1069 = vpack.c.b16 %v1042, %v1039
        %v1070 = vpack.c.b16 %v1043, %v1040
        %v1071 = vpack.c.b16 %v1044, %v1041
        %v1072 = vpack.c.b16 %v1048, %v1045
        %v1073 = vpack.c.b16 %v1049, %v1046
        %v1074 = vpack.c.b16 %v1050, %v1047
        %1099 = vmatpush.bf16.msra.mxu0 %v1072
        %1100 = vmatpush.bf16.msra.mxu0 %v1069
        %1101 = vmatpush.bf16.msra.mxu0 %v1066
        %1102 = vmatpush.bf16.msra.mxu0 %v1063
        %1103 = vmatpush.bf16.msra.mxu0 %v1060
        %1104 = vmatpush.bf16.msra.mxu0 %v1057
        %1105 = vmatpush.bf16.msra.mxu0 %v1054
        %1106 = vmatpush.bf16.msra.mxu0 %v1051
        %1107 = vmatmul.bf16.gmra.mxu0 %v931
        %v1108 = vpop.f32.mrf.mxu0
        %v1109 = vadd.f32 0.0, %v1108
        %v1110 = vpop.f32.mrf.mxu0
        %v1111 = vadd.f32 0.0, %v1110
        %1112 = vmatmul.bf16.gmra.mxu0 %v932
        %v1113 = vpop.f32.mrf.mxu0
        %v1114 = vadd.f32 0.0, %v1113
        %v1115 = vpop.f32.mrf.mxu0
        %v1116 = vadd.f32 0.0, %v1115
        %1117 = vmatmul.bf16.gmra.mxu0 %v933
        %v1118 = vpop.f32.mrf.mxu0
        %v1119 = vadd.f32 0.0, %v1118
        %v1120 = vpop.f32.mrf.mxu0
        %v1121 = vadd.f32 0.0, %v1120
        %1122 = vmatmul.bf16.gmra.mxu0 %v934
        %v1123 = vpop.f32.mrf.mxu0
        %v1124 = vadd.f32 0.0, %v1123
        %v1125 = vpop.f32.mrf.mxu0
        %v1126 = vadd.f32 0.0, %v1125
        %1127 = vmatmul.bf16.gmra.mxu0 %v935
        %v1128 = vpop.f32.mrf.mxu0
        %v1129 = vadd.f32 0.0, %v1128
        %v1130 = vpop.f32.mrf.mxu0
        %v1131 = vadd.f32 0.0, %v1130
        %1132 = vmatmul.bf16.gmra.mxu0 %v936
        %v1133 = vpop.f32.mrf.mxu0
        %v1134 = vadd.f32 0.0, %v1133
        %v1135 = vpop.f32.mrf.mxu0
        %v1136 = vadd.f32 0.0, %v1135
        %1137 = vmatmul.bf16.gmra.mxu0 %v937
        %v1138 = vpop.f32.mrf.mxu0
        %v1139 = vadd.f32 0.0, %v1138
        %v1140 = vpop.f32.mrf.mxu0
        %v1141 = vadd.f32 0.0, %v1140
        %1142 = vmatmul.bf16.gmra.mxu0 %v938
        %v1143 = vpop.f32.mrf.mxu0
        %v1144 = vadd.f32 0.0, %v1143
        %v1145 = vpop.f32.mrf.mxu0
        %v1146 = vadd.f32 0.0, %v1145
        %1147 = vdwg.mxu0
        %1148 = vmatpush.bf16.msra.mxu0 %v1073
        %1149 = vmatpush.bf16.msra.mxu0 %v1070
        %1150 = vmatpush.bf16.msra.mxu0 %v1067
        %1151 = vmatpush.bf16.msra.mxu0 %v1064
        %1152 = vmatpush.bf16.msra.mxu0 %v1061
        %1153 = vmatpush.bf16.msra.mxu0 %v1058
        %1154 = vmatpush.bf16.msra.mxu0 %v1055
        %1155 = vmatpush.bf16.msra.mxu0 %v1052
        %1156 = vmatmul.bf16.gmra.mxu0 %v931
        %v1157 = vpop.f32.mrf.mxu0
        %v1158 = vadd.f32 0.0, %v1157
        %v1159 = vpop.f32.mrf.mxu0
        %v1160 = vadd.f32 0.0, %v1159
        %1161 = vmatmul.bf16.gmra.mxu0 %v932
        %v1162 = vpop.f32.mrf.mxu0
        %v1163 = vadd.f32 0.0, %v1162
        %v1164 = vpop.f32.mrf.mxu0
        %v1165 = vadd.f32 0.0, %v1164
        %1166 = vmatmul.bf16.gmra.mxu0 %v933
        %v1167 = vpop.f32.mrf.mxu0
        %v1168 = vadd.f32 0.0, %v1167
        %v1169 = vpop.f32.mrf.mxu0
        %v1170 = vadd.f32 0.0, %v1169
        %1171 = vmatmul.bf16.gmra.mxu0 %v934
        %v1172 = vpop.f32.mrf.mxu0
        %v1173 = vadd.f32 0.0, %v1172
        %v1174 = vpop.f32.mrf.mxu0
        %v1175 = vadd.f32 0.0, %v1174
        %1176 = vmatmul.bf16.gmra.mxu0 %v935
        %v1177 = vpop.f32.mrf.mxu0
        %v1178 = vadd.f32 0.0, %v1177
        %v1179 = vpop.f32.mrf.mxu0
        %v1180 = vadd.f32 0.0, %v1179
        %1181 = vmatmul.bf16.gmra.mxu0 %v936
        %v1182 = vpop.f32.mrf.mxu0
        %v1183 = vadd.f32 0.0, %v1182
        %v1184 = vpop.f32.mrf.mxu0
        %v1185 = vadd.f32 0.0, %v1184
        %1186 = vmatmul.bf16.gmra.mxu0 %v937
        %v1187 = vpop.f32.mrf.mxu0
        %v1188 = vadd.f32 0.0, %v1187
        %v1189 = vpop.f32.mrf.mxu0
        %v1190 = vadd.f32 0.0, %v1189
        %1191 = vmatmul.bf16.gmra.mxu0 %v938
        %v1192 = vpop.f32.mrf.mxu0
        %v1193 = vadd.f32 0.0, %v1192
        %v1194 = vpop.f32.mrf.mxu0
        %v1195 = vadd.f32 0.0, %v1194
        %1196 = vdwg.mxu0
        %1197 = vmatpush.bf16.msra.mxu0 %v1074
        %1198 = vmatpush.bf16.msra.mxu0 %v1071
        %1199 = vmatpush.bf16.msra.mxu0 %v1068
        %1200 = vmatpush.bf16.msra.mxu0 %v1065
        %1201 = vmatpush.bf16.msra.mxu0 %v1062
        %1202 = vmatpush.bf16.msra.mxu0 %v1059
        %1203 = vmatpush.bf16.msra.mxu0 %v1056
        %1204 = vmatpush.bf16.msra.mxu0 %v1053
        %1205 = vmatmul.bf16.gmra.mxu0 %v931
        %v1206 = vpop.f32.mrf.mxu0
        %v1207 = vadd.f32 0.0, %v1206
        %v1208 = vpop.f32.mrf.mxu0
        %v1209 = vadd.f32 0.0, %v1208
        %1210 = vmatmul.bf16.gmra.mxu0 %v932
        %v1211 = vpop.f32.mrf.mxu0
        %v1212 = vadd.f32 0.0, %v1211
        %v1213 = vpop.f32.mrf.mxu0
        %v1214 = vadd.f32 0.0, %v1213
        %1215 = vmatmul.bf16.gmra.mxu0 %v933
        %v1216 = vpop.f32.mrf.mxu0
        %v1217 = vadd.f32 0.0, %v1216
        %v1218 = vpop.f32.mrf.mxu0
        %v1219 = vadd.f32 0.0, %v1218
        %1220 = vmatmul.bf16.gmra.mxu0 %v934
        %v1221 = vpop.f32.mrf.mxu0
        %v1222 = vadd.f32 0.0, %v1221
        %v1223 = vpop.f32.mrf.mxu0
        %v1224 = vadd.f32 0.0, %v1223
        %1225 = vmatmul.bf16.gmra.mxu0 %v935
        %v1226 = vpop.f32.mrf.mxu0
        %v1227 = vadd.f32 0.0, %v1226
        %v1228 = vpop.f32.mrf.mxu0
        %v1229 = vadd.f32 0.0, %v1228
        %1230 = vmatmul.bf16.gmra.mxu0 %v936
        %v1231 = vpop.f32.mrf.mxu0
        %v1232 = vadd.f32 0.0, %v1231
        %v1233 = vpop.f32.mrf.mxu0
        %v1234 = vadd.f32 0.0, %v1233
        %1235 = vmatmul.bf16.gmra.mxu0 %v937
        %v1236 = vpop.f32.mrf.mxu0
        %v1237 = vadd.f32 0.0, %v1236
        %v1238 = vpop.f32.mrf.mxu0
        %v1239 = vadd.f32 0.0, %v1238
        %1240 = vmatmul.bf16.gmra.mxu0 %v938
        %v1241 = vpop.f32.mrf.mxu0
        %v1242 = vadd.f32 0.0, %v1241
        %v1243 = vpop.f32.mrf.mxu0
        %v1244 = vadd.f32 0.0, %v1243
        %1245 = vdwg.mxu0
        %v1246 = vmul.f32 %v1109, 0.088388346
        %v1247 = vmul.f32 %v1111, 0.088388346
        %v1248 = vmul.f32 %v1114, 0.088388346
        %v1249 = vmul.f32 %v1116, 0.088388346
        %v1250 = vmul.f32 %v1119, 0.088388346
        %v1251 = vmul.f32 %v1121, 0.088388346
        %v1252 = vmul.f32 %v1124, 0.088388346
        %v1253 = vmul.f32 %v1126, 0.088388346
        %v1254 = vmul.f32 %v1129, 0.088388346
        %v1255 = vmul.f32 %v1131, 0.088388346
        %v1256 = vmul.f32 %v1134, 0.088388346
        %v1257 = vmul.f32 %v1136, 0.088388346
        %v1258 = vmul.f32 %v1139, 0.088388346
        %v1259 = vmul.f32 %v1141, 0.088388346
        %v1260 = vmul.f32 %v1144, 0.088388346
        %v1261 = vmul.f32 %v1146, 0.088388346
        %v1262 = vpack.c.bf16 %v1246, %v1246
        %v1263 = vpack.c.bf16 %v1247, %v1247
        %v1264 = vpack.c.bf16 %v1248, %v1248
        %v1265 = vpack.c.bf16 %v1249, %v1249
        %v1266 = vpack.c.bf16 %v1250, %v1250
        %v1267 = vpack.c.bf16 %v1251, %v1251
        %v1268 = vpack.c.bf16 %v1252, %v1252
        %v1269 = vpack.c.bf16 %v1253, %v1253
        %v1270 = vpack.c.bf16 %v1254, %v1254
        %v1271 = vpack.c.bf16 %v1255, %v1255
        %v1272 = vpack.c.bf16 %v1256, %v1256
        %v1273 = vpack.c.bf16 %v1257, %v1257
        %v1274 = vpack.c.bf16 %v1258, %v1258
        %v1275 = vpack.c.bf16 %v1259, %v1259
        %v1276 = vpack.c.bf16 %v1260, %v1260
        %v1277 = vpack.c.bf16 %v1261, %v1261
        %v1278 = vpack.c.bf16 %v1158, %v1158
        %v1279 = vpack.c.bf16 %v1160, %v1160
        %v1280 = vpack.c.bf16 %v1163, %v1163
        %v1281 = vpack.c.bf16 %v1165, %v1165
        %v1282 = vpack.c.bf16 %v1168, %v1168
        %v1283 = vpack.c.bf16 %v1170, %v1170
        %v1284 = vpack.c.bf16 %v1173, %v1173
        %v1285 = vpack.c.bf16 %v1175, %v1175
        %v1286 = vpack.c.bf16 %v1178, %v1178
        %v1287 = vpack.c.bf16 %v1180, %v1180
        %v1288 = vpack.c.bf16 %v1183, %v1183
        %v1289 = vpack.c.bf16 %v1185, %v1185
        %v1290 = vpack.c.bf16 %v1188, %v1188
        %v1291 = vpack.c.bf16 %v1190, %v1190
        %v1292 = vpack.c.bf16 %v1193, %v1193
        %v1293 = vpack.c.bf16 %v1195, %v1195
        %v1294 = vpack.c.bf16 %v1207, %v1207
        %v1295 = vpack.c.bf16 %v1209, %v1209
        %v1296 = vpack.c.bf16 %v1212, %v1212
        %v1297 = vpack.c.bf16 %v1214, %v1214
        %v1298 = vpack.c.bf16 %v1217, %v1217
        %v1299 = vpack.c.bf16 %v1219, %v1219
        %v1300 = vpack.c.bf16 %v1222, %v1222
        %v1301 = vpack.c.bf16 %v1224, %v1224
        %v1302 = vpack.c.bf16 %v1227, %v1227
        %v1303 = vpack.c.bf16 %v1229, %v1229
        %v1304 = vpack.c.bf16 %v1232, %v1232
        %v1305 = vpack.c.bf16 %v1234, %v1234
        %v1306 = vpack.c.bf16 %v1237, %v1237
        %v1307 = vpack.c.bf16 %v1239, %v1239
        %v1308 = vpack.c.bf16 %v1242, %v1242
        %v1309 = vpack.c.bf16 %v1244, %v1244
        %v1310 = vlaneseq
        %v1311 = vshrl.u32 %v1310, 7
        %v1312 = vadd.s32 %v1311, 8
        %v1313 = vadd.s32 %v1311, 16
        %v1314 = vadd.s32 %v1311, 24
        %v1315 = vadd.s32 %v1311, 32
        %v1316 = vadd.s32 %v1311, 40
        %v1317 = vadd.s32 %v1311, 48
        %v1318 = vadd.s32 %v1311, 56
        %v1319 = vlaneseq
        %v1320 = vand.u32 %v1319, 127
        %vm1321 = vcmp.ge.s32.totalorder %v1311, %v1320
        %vm1322 = vcmp.ge.s32.totalorder %v1312, %v1320
        %vm1323 = vcmp.ge.s32.totalorder %v1313, %v1320
        %vm1324 = vcmp.ge.s32.totalorder %v1314, %v1320
        %vm1325 = vcmp.ge.s32.totalorder %v1315, %v1320
        %vm1326 = vcmp.ge.s32.totalorder %v1316, %v1320
        %vm1327 = vcmp.ge.s32.totalorder %v1317, %v1320
        %vm1328 = vcmp.ge.s32.totalorder %v1318, %v1320
        %v1337 = vunpack.c.l.b16 %v1262
        %v1338 = vunpack.c.l.b16 %v1263
        %v1339 = vunpack.c.l.b16 %v1264
        %v1340 = vunpack.c.l.b16 %v1265
        %v1341 = vunpack.c.l.b16 %v1266
        %v1342 = vunpack.c.l.b16 %v1267
        %v1343 = vunpack.c.l.b16 %v1268
        %v1344 = vunpack.c.l.b16 %v1269
        %v1345 = vpack.c.b16 %v1338, %v1337
        %v1346 = vpack.c.b16 %v1340, %v1339
        %v1347 = vpack.c.b16 %v1342, %v1341
        %v1348 = vpack.c.b16 %v1344, %v1343
        %v1357 = vunpack.c.l.b16 %v1278
        %v1358 = vunpack.c.l.b16 %v1279
        %v1359 = vunpack.c.l.b16 %v1280
        %v1360 = vunpack.c.l.b16 %v1281
        %v1361 = vunpack.c.l.b16 %v1282
        %v1362 = vunpack.c.l.b16 %v1283
        %v1363 = vunpack.c.l.b16 %v1284
        %v1364 = vunpack.c.l.b16 %v1285
        %v1365 = vpack.c.b16 %v1358, %v1357
        %v1366 = vpack.c.b16 %v1360, %v1359
        %v1367 = vpack.c.b16 %v1362, %v1361
        %v1368 = vpack.c.b16 %v1364, %v1363
        %vm1369 = vcmask 261120
        %v1371 = vsel %vm1369, %v1345, 0
        %v1374 = vsel %vm1369, %v1346, 0
        %v1377 = vsel %vm1369, %v1347, 0
        %v1380 = vsel %vm1369, %v1348, 0
        %v1383 = vsel %vm1369, %v1365, 0
        %v1386 = vsel %vm1369, %v1366, 0
        %v1389 = vsel %vm1369, %v1367, 0
        %v1392 = vsel %vm1369, %v1368, 0
        %1394 = vmatpush.bf16.xpose.msra.mxu0 0
        %1395 = vmatpush.bf16.xpose.msra.mxu0 0
        %1396 = vmatpush.bf16.xpose.msra.mxu0 0
        %1397 = vmatpush.bf16.xpose.msra.mxu0 0
        %1398 = vmatpush.bf16.xpose.msra.mxu0 %v1392
        %1399 = vmatpush.bf16.xpose.msra.mxu0 %v1389
        %1400 = vmatpush.bf16.xpose.msra.mxu0 %v1386
        %1401 = vmatpush.bf16.xpose.msra.mxu0 %v1383
        %1402 = vmatmul.bf16.gmra.mxu0 %v1371
        %v1403 = vpop.f32.mrf.mxu0
        %v1404 = vadd.f32 0.0, %v1403
        %v1405 = vpop.f32.mrf.mxu0
        %v1406 = vadd.f32 0.0, %v1405
        %1407 = vmatmul.bf16.gmra.mxu0 %v1374
        %v1408 = vpop.f32.mrf.mxu0
        %v1409 = vadd.f32 0.0, %v1408
        %v1410 = vpop.f32.mrf.mxu0
        %v1411 = vadd.f32 0.0, %v1410
        %1412 = vmatmul.bf16.gmra.mxu0 %v1377
        %v1413 = vpop.f32.mrf.mxu0
        %v1414 = vadd.f32 0.0, %v1413
        %v1415 = vpop.f32.mrf.mxu0
        %v1416 = vadd.f32 0.0, %v1415
        %1417 = vmatmul.bf16.gmra.mxu0 %v1380
        %v1418 = vpop.f32.mrf.mxu0
        %v1419 = vadd.f32 0.0, %v1418
        %v1420 = vpop.f32.mrf.mxu0
        %v1421 = vadd.f32 0.0, %v1420
        %1422 = vdwg.mxu0
        %v1431 = vunpack.c.l.b16 %v1270
        %v1432 = vunpack.c.l.b16 %v1271
        %v1433 = vunpack.c.l.b16 %v1272
        %v1434 = vunpack.c.l.b16 %v1273
        %v1435 = vunpack.c.l.b16 %v1274
        %v1436 = vunpack.c.l.b16 %v1275
        %v1437 = vunpack.c.l.b16 %v1276
        %v1438 = vunpack.c.l.b16 %v1277
        %v1439 = vpack.c.b16 %v1432, %v1431
        %v1440 = vpack.c.b16 %v1434, %v1433
        %v1441 = vpack.c.b16 %v1436, %v1435
        %v1442 = vpack.c.b16 %v1438, %v1437
        %v1451 = vunpack.c.l.b16 %v1286
        %v1452 = vunpack.c.l.b16 %v1287
        %v1453 = vunpack.c.l.b16 %v1288
        %v1454 = vunpack.c.l.b16 %v1289
        %v1455 = vunpack.c.l.b16 %v1290
        %v1456 = vunpack.c.l.b16 %v1291
        %v1457 = vunpack.c.l.b16 %v1292
        %v1458 = vunpack.c.l.b16 %v1293
        %v1459 = vpack.c.b16 %v1452, %v1451
        %v1460 = vpack.c.b16 %v1454, %v1453
        %v1461 = vpack.c.b16 %v1456, %v1455
        %v1462 = vpack.c.b16 %v1458, %v1457
        %v1464 = vsel %vm1369, %v1439, 0
        %v1467 = vsel %vm1369, %v1440, 0
        %v1470 = vsel %vm1369, %v1441, 0
        %v1473 = vsel %vm1369, %v1442, 0
        %v1476 = vsel %vm1369, %v1459, 0
        %v1479 = vsel %vm1369, %v1460, 0
        %v1482 = vsel %vm1369, %v1461, 0
        %v1485 = vsel %vm1369, %v1462, 0
        %1487 = vmatpush.bf16.xpose.msra.mxu0 0
        %1488 = vmatpush.bf16.xpose.msra.mxu0 0
        %1489 = vmatpush.bf16.xpose.msra.mxu0 0
        %1490 = vmatpush.bf16.xpose.msra.mxu0 0
        %1491 = vmatpush.bf16.xpose.msra.mxu0 %v1485
        %1492 = vmatpush.bf16.xpose.msra.mxu0 %v1482
        %1493 = vmatpush.bf16.xpose.msra.mxu0 %v1479
        %1494 = vmatpush.bf16.xpose.msra.mxu0 %v1476
        %1495 = vmatmul.bf16.gmra.mxu0 %v1464
        %v1496 = vpop.f32.mrf.mxu0
        %v1497 = vadd.f32 0.0, %v1496
        %v1498 = vpop.f32.mrf.mxu0
        %v1499 = vadd.f32 0.0, %v1498
        %1500 = vmatmul.bf16.gmra.mxu0 %v1467
        %v1501 = vpop.f32.mrf.mxu0
        %v1502 = vadd.f32 0.0, %v1501
        %v1503 = vpop.f32.mrf.mxu0
        %v1504 = vadd.f32 0.0, %v1503
        %1505 = vmatmul.bf16.gmra.mxu0 %v1470
        %v1506 = vpop.f32.mrf.mxu0
        %v1507 = vadd.f32 0.0, %v1506
        %v1508 = vpop.f32.mrf.mxu0
        %v1509 = vadd.f32 0.0, %v1508
        %1510 = vmatmul.bf16.gmra.mxu0 %v1473
        %v1511 = vpop.f32.mrf.mxu0
        %v1512 = vadd.f32 0.0, %v1511
        %v1513 = vpop.f32.mrf.mxu0
        %v1514 = vadd.f32 0.0, %v1513
        %1515 = vdwg.mxu0
        %v1516 = vsel %vm1321, %v1404, -1e+30
        %v1517 = vsel %vm1322, %v1406, -1e+30
        %v1518 = vsel %vm1323, %v1409, -1e+30
        %v1519 = vsel %vm1324, %v1411, -1e+30
        %v1520 = vsel %vm1325, %v1414, -1e+30
        %v1521 = vsel %vm1326, %v1416, -1e+30
        %v1522 = vsel %vm1327, %v1419, -1e+30
        %v1523 = vsel %vm1328, %v1421, -1e+30
        %v1524 = vsel %vm1321, %v1497, -1e+30
        %v1525 = vsel %vm1322, %v1499, -1e+30
        %v1526 = vsel %vm1323, %v1502, -1e+30
        %v1527 = vsel %vm1324, %v1504, -1e+30
        %v1528 = vsel %vm1325, %v1507, -1e+30
        %v1529 = vsel %vm1326, %v1509, -1e+30
        %v1530 = vsel %vm1327, %v1512, -1e+30
        %v1531 = vsel %vm1328, %v1514, -1e+30
        %vm1532 = vcmask 523264
        %v1533 = vsel %vm1532, %v1516, -inf
        %1534 = vmax.xlane.f32.xlu0 %v1533
        %v1535 = vpop.xlane.xlu0 %1534
        %v1536 = vsel %vm1532, %v1517, -inf
        %1537 = vmax.xlane.f32.xlu0 %v1536
        %v1538 = vpop.xlane.xlu0 %1537
        %v1539 = vsel %vm1532, %v1518, -inf
        %1540 = vmax.xlane.f32.xlu0 %v1539
        %v1541 = vpop.xlane.xlu0 %1540
        %v1542 = vsel %vm1532, %v1519, -inf
        %1543 = vmax.xlane.f32.xlu0 %v1542
        %v1544 = vpop.xlane.xlu0 %1543
        %v1545 = vsel %vm1532, %v1520, -inf
        %1546 = vmax.xlane.f32.xlu0 %v1545
        %v1547 = vpop.xlane.xlu0 %1546
        %v1548 = vsel %vm1532, %v1521, -inf
        %1549 = vmax.xlane.f32.xlu0 %v1548
        %v1550 = vpop.xlane.xlu0 %1549
        %v1551 = vsel %vm1532, %v1522, -inf
        %1552 = vmax.xlane.f32.xlu0 %v1551
        %v1553 = vpop.xlane.xlu0 %1552
        %v1554 = vsel %vm1532, %v1523, -inf
        %1555 = vmax.xlane.f32.xlu0 %v1554
        %v1556 = vpop.xlane.xlu0 %1555
        %v1557 = vsel %vm1532, %v1524, -inf
        %1558 = vmax.xlane.f32.xlu0 %v1557
        %v1559 = vpop.xlane.xlu0 %1558
        %v1560 = vsel %vm1532, %v1525, -inf
        %1561 = vmax.xlane.f32.xlu0 %v1560
        %v1562 = vpop.xlane.xlu0 %1561
        %v1563 = vsel %vm1532, %v1526, -inf
        %1564 = vmax.xlane.f32.xlu0 %v1563
        %v1565 = vpop.xlane.xlu0 %1564
        %v1566 = vsel %vm1532, %v1527, -inf
        %1567 = vmax.xlane.f32.xlu0 %v1566
        %v1568 = vpop.xlane.xlu0 %1567
        %v1569 = vsel %vm1532, %v1528, -inf
        %1570 = vmax.xlane.f32.xlu0 %v1569
        %v1571 = vpop.xlane.xlu0 %1570
        %v1572 = vsel %vm1532, %v1529, -inf
        %1573 = vmax.xlane.f32.xlu0 %v1572
        %v1574 = vpop.xlane.xlu0 %1573
        %v1575 = vsel %vm1532, %v1530, -inf
        %1576 = vmax.xlane.f32.xlu0 %v1575
        %v1577 = vpop.xlane.xlu0 %1576
        %v1578 = vsel %vm1532, %v1531, -inf
        %1579 = vmax.xlane.f32.xlu0 %v1578
        %v1580 = vpop.xlane.xlu0 %1579
        %v1581 = vsub.f32 %v1516, %v1535
        %v1582 = vsub.f32 %v1517, %v1538
        %v1583 = vsub.f32 %v1518, %v1541
        %v1584 = vsub.f32 %v1519, %v1544
        %v1585 = vsub.f32 %v1520, %v1547
        %v1586 = vsub.f32 %v1521, %v1550
        %v1587 = vsub.f32 %v1522, %v1553
        %v1588 = vsub.f32 %v1523, %v1556
        %v1589 = vsub.f32 %v1524, %v1559
        %v1590 = vsub.f32 %v1525, %v1562
        %v1591 = vsub.f32 %v1526, %v1565
        %v1592 = vsub.f32 %v1527, %v1568
        %v1593 = vsub.f32 %v1528, %v1571
        %v1594 = vsub.f32 %v1529, %v1574
        %v1595 = vsub.f32 %v1530, %v1577
        %v1596 = vsub.f32 %v1531, %v1580
        %v1597 = vmul.f32 %v1581, 1.442695
        %v1598 = vpow.pop %v1597
        %v1599 = vmul.f32 %v1582, 1.442695
        %v1600 = vpow.pop %v1599
        %v1601 = vmul.f32 %v1583, 1.442695
        %v1602 = vpow.pop %v1601
        %v1603 = vmul.f32 %v1584, 1.442695
        %v1604 = vpow.pop %v1603
        %v1605 = vmul.f32 %v1585, 1.442695
        %v1606 = vpow.pop %v1605
        %v1607 = vmul.f32 %v1586, 1.442695
        %v1608 = vpow.pop %v1607
        %v1609 = vmul.f32 %v1587, 1.442695
        %v1610 = vpow.pop %v1609
        %v1611 = vmul.f32 %v1588, 1.442695
        %v1612 = vpow.pop %v1611
        %v1613 = vmul.f32 %v1589, 1.442695
        %v1614 = vpow.pop %v1613
        %v1615 = vmul.f32 %v1590, 1.442695
        %v1616 = vpow.pop %v1615
        %v1617 = vmul.f32 %v1591, 1.442695
        %v1618 = vpow.pop %v1617
        %v1619 = vmul.f32 %v1592, 1.442695
        %v1620 = vpow.pop %v1619
        %v1621 = vmul.f32 %v1593, 1.442695
        %v1622 = vpow.pop %v1621
        %v1623 = vmul.f32 %v1594, 1.442695
        %v1624 = vpow.pop %v1623
        %v1625 = vmul.f32 %v1595, 1.442695
        %v1626 = vpow.pop %v1625
        %v1627 = vmul.f32 %v1596, 1.442695
        %v1628 = vpow.pop %v1627
        %v1629 = vsel %vm1532, %v1598, 0.0
        %1630 = vadd.xlane.f32.xlu0 %v1629
        %v1631 = vpop.xlane.xlu0 %1630
        %v1632 = vsel %vm1532, %v1600, 0.0
        %1633 = vadd.xlane.f32.xlu0 %v1632
        %v1634 = vpop.xlane.xlu0 %1633
        %v1635 = vsel %vm1532, %v1602, 0.0
        %1636 = vadd.xlane.f32.xlu0 %v1635
        %v1637 = vpop.xlane.xlu0 %1636
        %v1638 = vsel %vm1532, %v1604, 0.0
        %1639 = vadd.xlane.f32.xlu0 %v1638
        %v1640 = vpop.xlane.xlu0 %1639
        %v1641 = vsel %vm1532, %v1606, 0.0
        %1642 = vadd.xlane.f32.xlu0 %v1641
        %v1643 = vpop.xlane.xlu0 %1642
        %v1644 = vsel %vm1532, %v1608, 0.0
        %1645 = vadd.xlane.f32.xlu0 %v1644
        %v1646 = vpop.xlane.xlu0 %1645
        %v1647 = vsel %vm1532, %v1610, 0.0
        %1648 = vadd.xlane.f32.xlu0 %v1647
        %v1649 = vpop.xlane.xlu0 %1648
        %v1650 = vsel %vm1532, %v1612, 0.0
        %1651 = vadd.xlane.f32.xlu0 %v1650
        %v1652 = vpop.xlane.xlu0 %1651
        %v1653 = vsel %vm1532, %v1614, 0.0
        %1654 = vadd.xlane.f32.xlu0 %v1653
        %v1655 = vpop.xlane.xlu0 %1654
        %v1656 = vsel %vm1532, %v1616, 0.0
        %1657 = vadd.xlane.f32.xlu0 %v1656
        %v1658 = vpop.xlane.xlu0 %1657
        %v1659 = vsel %vm1532, %v1618, 0.0
        %1660 = vadd.xlane.f32.xlu0 %v1659
        %v1661 = vpop.xlane.xlu0 %1660
        %v1662 = vsel %vm1532, %v1620, 0.0
        %1663 = vadd.xlane.f32.xlu0 %v1662
        %v1664 = vpop.xlane.xlu0 %1663
        %v1665 = vsel %vm1532, %v1622, 0.0
        %1666 = vadd.xlane.f32.xlu0 %v1665
        %v1667 = vpop.xlane.xlu0 %1666
        %v1668 = vsel %vm1532, %v1624, 0.0
        %1669 = vadd.xlane.f32.xlu0 %v1668
        %v1670 = vpop.xlane.xlu0 %1669
        %v1671 = vsel %vm1532, %v1626, 0.0
        %1672 = vadd.xlane.f32.xlu0 %v1671
        %v1673 = vpop.xlane.xlu0 %1672
        %v1674 = vsel %vm1532, %v1628, 0.0
        %1675 = vadd.xlane.f32.xlu0 %v1674
        %v1676 = vpop.xlane.xlu0 %1675
        %v1677 = vrcp.pop %v1631
        %v1678 = vrcp.pop %v1634
        %v1679 = vrcp.pop %v1637
        %v1680 = vrcp.pop %v1640
        %v1681 = vrcp.pop %v1643
        %v1682 = vrcp.pop %v1646
        %v1683 = vrcp.pop %v1649
        %v1684 = vrcp.pop %v1652
        %v1685 = vrcp.pop %v1655
        %v1686 = vrcp.pop %v1658
        %v1687 = vrcp.pop %v1661
        %v1688 = vrcp.pop %v1664
        %v1689 = vrcp.pop %v1667
        %v1690 = vrcp.pop %v1670
        %v1691 = vrcp.pop %v1673
        %v1692 = vrcp.pop %v1676
        %v1693 = vmul.f32 %v1598, %v1677
        %v1694 = vmul.f32 %v1600, %v1678
        %v1695 = vmul.f32 %v1602, %v1679
        %v1696 = vmul.f32 %v1604, %v1680
        %v1697 = vmul.f32 %v1606, %v1681
        %v1698 = vmul.f32 %v1608, %v1682
        %v1699 = vmul.f32 %v1610, %v1683
        %v1700 = vmul.f32 %v1612, %v1684
        %v1701 = vmul.f32 %v1614, %v1685
        %v1702 = vmul.f32 %v1616, %v1686
        %v1703 = vmul.f32 %v1618, %v1687
        %v1704 = vmul.f32 %v1620, %v1688
        %v1705 = vmul.f32 %v1622, %v1689
        %v1706 = vmul.f32 %v1624, %v1690
        %v1707 = vmul.f32 %v1626, %v1691
        %v1708 = vmul.f32 %v1628, %v1692
        %v1709 = vpack.c.bf16 %v1693, %v1693
        %v1710 = vpack.c.bf16 %v1694, %v1694
        %v1711 = vpack.c.bf16 %v1695, %v1695
        %v1712 = vpack.c.bf16 %v1696, %v1696
        %v1713 = vpack.c.bf16 %v1697, %v1697
        %v1714 = vpack.c.bf16 %v1698, %v1698
        %v1715 = vpack.c.bf16 %v1699, %v1699
        %v1716 = vpack.c.bf16 %v1700, %v1700
        %v1717 = vpack.c.bf16 %v1701, %v1701
        %v1718 = vpack.c.bf16 %v1702, %v1702
        %v1719 = vpack.c.bf16 %v1703, %v1703
        %v1720 = vpack.c.bf16 %v1704, %v1704
        %v1721 = vpack.c.bf16 %v1705, %v1705
        %v1722 = vpack.c.bf16 %v1706, %v1706
        %v1723 = vpack.c.bf16 %v1707, %v1707
        %v1724 = vpack.c.bf16 %v1708, %v1708
        %v1733 = vunpack.c.l.b16 %v1709
        %v1734 = vunpack.c.l.b16 %v1710
        %v1735 = vunpack.c.l.b16 %v1711
        %v1736 = vunpack.c.l.b16 %v1712
        %v1737 = vunpack.c.l.b16 %v1713
        %v1738 = vunpack.c.l.b16 %v1714
        %v1739 = vunpack.c.l.b16 %v1715
        %v1740 = vunpack.c.l.b16 %v1716
        %v1741 = vpack.c.b16 %v1734, %v1733
        %v1742 = vpack.c.b16 %v1736, %v1735
        %v1743 = vpack.c.b16 %v1738, %v1737
        %v1744 = vpack.c.b16 %v1740, %v1739
        %v1753 = vunpack.c.l.b16 %v1294
        %v1754 = vunpack.c.l.b16 %v1295
        %v1755 = vunpack.c.l.b16 %v1296
        %v1756 = vunpack.c.l.b16 %v1297
        %v1757 = vunpack.c.l.b16 %v1298
        %v1758 = vunpack.c.l.b16 %v1299
        %v1759 = vunpack.c.l.b16 %v1300
        %v1760 = vunpack.c.l.b16 %v1301
        %v1761 = vpack.c.b16 %v1754, %v1753
        %v1762 = vpack.c.b16 %v1756, %v1755
        %v1763 = vpack.c.b16 %v1758, %v1757
        %v1764 = vpack.c.b16 %v1760, %v1759
        %v1770 = vsel %vm1532, %v1741, 0
        %v1773 = vsel %vm1532, %v1742, 0
        %v1776 = vsel %vm1532, %v1743, 0
        %v1779 = vsel %vm1532, %v1744, 0
        %1781 = vmatpush.bf16.msra.mxu0 0
        %1782 = vmatpush.bf16.msra.mxu0 0
        %1783 = vmatpush.bf16.msra.mxu0 0
        %1784 = vmatpush.bf16.msra.mxu0 0
        %1785 = vmatpush.bf16.msra.mxu0 %v1764
        %1786 = vmatpush.bf16.msra.mxu0 %v1763
        %1787 = vmatpush.bf16.msra.mxu0 %v1762
        %1788 = vmatpush.bf16.msra.mxu0 %v1761
        %1789 = vmatmul.bf16.gmra.mxu0 %v1770
        %v1790 = vpop.f32.mrf.mxu0
        %v1791 = vadd.f32 0.0, %v1790
        %v1792 = vpop.f32.mrf.mxu0
        %v1793 = vadd.f32 0.0, %v1792
        %1794 = vmatmul.bf16.gmra.mxu0 %v1773
        %v1795 = vpop.f32.mrf.mxu0
        %v1796 = vadd.f32 0.0, %v1795
        %v1797 = vpop.f32.mrf.mxu0
        %v1798 = vadd.f32 0.0, %v1797
        %1799 = vmatmul.bf16.gmra.mxu0 %v1776
        %v1800 = vpop.f32.mrf.mxu0
        %v1801 = vadd.f32 0.0, %v1800
        %v1802 = vpop.f32.mrf.mxu0
        %v1803 = vadd.f32 0.0, %v1802
        %1804 = vmatmul.bf16.gmra.mxu0 %v1779
        %v1805 = vpop.f32.mrf.mxu0
        %v1806 = vadd.f32 0.0, %v1805
        %v1807 = vpop.f32.mrf.mxu0
        %v1808 = vadd.f32 0.0, %v1807
        %1809 = vdwg.mxu0
        %v1818 = vunpack.c.l.b16 %v1717
        %v1819 = vunpack.c.l.b16 %v1718
        %v1820 = vunpack.c.l.b16 %v1719
        %v1821 = vunpack.c.l.b16 %v1720
        %v1822 = vunpack.c.l.b16 %v1721
        %v1823 = vunpack.c.l.b16 %v1722
        %v1824 = vunpack.c.l.b16 %v1723
        %v1825 = vunpack.c.l.b16 %v1724
        %v1826 = vpack.c.b16 %v1819, %v1818
        %v1827 = vpack.c.b16 %v1821, %v1820
        %v1828 = vpack.c.b16 %v1823, %v1822
        %v1829 = vpack.c.b16 %v1825, %v1824
        %v1838 = vunpack.c.l.b16 %v1302
        %v1839 = vunpack.c.l.b16 %v1303
        %v1840 = vunpack.c.l.b16 %v1304
        %v1841 = vunpack.c.l.b16 %v1305
        %v1842 = vunpack.c.l.b16 %v1306
        %v1843 = vunpack.c.l.b16 %v1307
        %v1844 = vunpack.c.l.b16 %v1308
        %v1845 = vunpack.c.l.b16 %v1309
        %v1846 = vpack.c.b16 %v1839, %v1838
        %v1847 = vpack.c.b16 %v1841, %v1840
        %v1848 = vpack.c.b16 %v1843, %v1842
        %v1849 = vpack.c.b16 %v1845, %v1844
        %v1855 = vsel %vm1532, %v1826, 0
        %v1858 = vsel %vm1532, %v1827, 0
        %v1861 = vsel %vm1532, %v1828, 0
        %v1864 = vsel %vm1532, %v1829, 0
        %1866 = vmatpush.bf16.msra.mxu0 0
        %1867 = vmatpush.bf16.msra.mxu0 0
        %1868 = vmatpush.bf16.msra.mxu0 0
        %1869 = vmatpush.bf16.msra.mxu0 0
        %1870 = vmatpush.bf16.msra.mxu0 %v1849
        %1871 = vmatpush.bf16.msra.mxu0 %v1848
        %1872 = vmatpush.bf16.msra.mxu0 %v1847
        %1873 = vmatpush.bf16.msra.mxu0 %v1846
        %1874 = vmatmul.bf16.gmra.mxu0 %v1855
        %v1875 = vpop.f32.mrf.mxu0
        %v1876 = vadd.f32 0.0, %v1875
        %v1877 = vpop.f32.mrf.mxu0
        %v1878 = vadd.f32 0.0, %v1877
        %1879 = vmatmul.bf16.gmra.mxu0 %v1858
        %v1880 = vpop.f32.mrf.mxu0
        %v1881 = vadd.f32 0.0, %v1880
        %v1882 = vpop.f32.mrf.mxu0
        %v1883 = vadd.f32 0.0, %v1882
        %1884 = vmatmul.bf16.gmra.mxu0 %v1861
        %v1885 = vpop.f32.mrf.mxu0
        %v1886 = vadd.f32 0.0, %v1885
        %v1887 = vpop.f32.mrf.mxu0
        %v1888 = vadd.f32 0.0, %v1887
        %1889 = vmatmul.bf16.gmra.mxu0 %v1864
        %v1890 = vpop.f32.mrf.mxu0
        %v1891 = vadd.f32 0.0, %v1890
        %v1892 = vpop.f32.mrf.mxu0
        %v1893 = vadd.f32 0.0, %v1892
        %1894 = vdwg.mxu0
        %v1895 = vpack.c.bf16 %v1791, %v1791
        %v1896 = vpack.c.bf16 %v1793, %v1793
        %v1897 = vpack.c.bf16 %v1796, %v1796
        %v1898 = vpack.c.bf16 %v1798, %v1798
        %v1899 = vpack.c.bf16 %v1801, %v1801
        %v1900 = vpack.c.bf16 %v1803, %v1803
        %v1901 = vpack.c.bf16 %v1806, %v1806
        %v1902 = vpack.c.bf16 %v1808, %v1808
        %v1903 = vpack.c.bf16 %v1876, %v1876
        %v1904 = vpack.c.bf16 %v1878, %v1878
        %v1905 = vpack.c.bf16 %v1881, %v1881
        %v1906 = vpack.c.bf16 %v1883, %v1883
        %v1907 = vpack.c.bf16 %v1886, %v1886
        %v1908 = vpack.c.bf16 %v1888, %v1888
        %v1909 = vpack.c.bf16 %v1891, %v1891
        %v1910 = vpack.c.bf16 %v1893, %v1893
        %1911 = vrot.lane.b32.xlu0 %v1345, 96
        %v1912 = vpop.permute.xlu0 %1911
        %1913 = vrot.lane.b32.xlu0 %v1346, 96
        %v1914 = vpop.permute.xlu0 %1913
        %1915 = vrot.lane.b32.xlu0 %v1347, 96
        %v1916 = vpop.permute.xlu0 %1915
        %1917 = vrot.lane.b32.xlu0 %v1348, 96
        %v1918 = vpop.permute.xlu0 %1917
        %1919 = vrot.lane.b32.xlu0 %v1365, 96
        %v1920 = vpop.permute.xlu0 %1919
        %1921 = vrot.lane.b32.xlu0 %v1366, 96
        %v1922 = vpop.permute.xlu0 %1921
        %1923 = vrot.lane.b32.xlu0 %v1367, 96
        %v1924 = vpop.permute.xlu0 %1923
        %1925 = vrot.lane.b32.xlu0 %v1368, 96
        %v1926 = vpop.permute.xlu0 %1925
        %v1928 = vsel %vm1369, %v1912, 0
        %v1931 = vsel %vm1369, %v1914, 0
        %v1934 = vsel %vm1369, %v1916, 0
        %v1937 = vsel %vm1369, %v1918, 0
        %v1940 = vsel %vm1369, %v1920, 0
        %v1943 = vsel %vm1369, %v1922, 0
        %v1946 = vsel %vm1369, %v1924, 0
        %v1949 = vsel %vm1369, %v1926, 0
        %1951 = vmatpush.bf16.xpose.msra.mxu0 0
        %1952 = vmatpush.bf16.xpose.msra.mxu0 0
        %1953 = vmatpush.bf16.xpose.msra.mxu0 0
        %1954 = vmatpush.bf16.xpose.msra.mxu0 0
        %1955 = vmatpush.bf16.xpose.msra.mxu0 %v1949
        %1956 = vmatpush.bf16.xpose.msra.mxu0 %v1946
        %1957 = vmatpush.bf16.xpose.msra.mxu0 %v1943
        %1958 = vmatpush.bf16.xpose.msra.mxu0 %v1940
        %1959 = vmatmul.bf16.gmra.mxu0 %v1928
        %v1960 = vpop.f32.mrf.mxu0
        %v1961 = vadd.f32 0.0, %v1960
        %v1962 = vpop.f32.mrf.mxu0
        %v1963 = vadd.f32 0.0, %v1962
        %1964 = vmatmul.bf16.gmra.mxu0 %v1931
        %v1965 = vpop.f32.mrf.mxu0
        %v1966 = vadd.f32 0.0, %v1965
        %v1967 = vpop.f32.mrf.mxu0
        %v1968 = vadd.f32 0.0, %v1967
        %1969 = vmatmul.bf16.gmra.mxu0 %v1934
        %v1970 = vpop.f32.mrf.mxu0
        %v1971 = vadd.f32 0.0, %v1970
        %v1972 = vpop.f32.mrf.mxu0
        %v1973 = vadd.f32 0.0, %v1972
        %1974 = vmatmul.bf16.gmra.mxu0 %v1937
        %v1975 = vpop.f32.mrf.mxu0
        %v1976 = vadd.f32 0.0, %v1975
        %v1977 = vpop.f32.mrf.mxu0
        %v1978 = vadd.f32 0.0, %v1977
        %1979 = vdwg.mxu0
        %1980 = vrot.lane.b32.xlu0 %v1439, 96
        %v1981 = vpop.permute.xlu0 %1980
        %1982 = vrot.lane.b32.xlu0 %v1440, 96
        %v1983 = vpop.permute.xlu0 %1982
        %1984 = vrot.lane.b32.xlu0 %v1441, 96
        %v1985 = vpop.permute.xlu0 %1984
        %1986 = vrot.lane.b32.xlu0 %v1442, 96
        %v1987 = vpop.permute.xlu0 %1986
        %1988 = vrot.lane.b32.xlu0 %v1459, 96
        %v1989 = vpop.permute.xlu0 %1988
        %1990 = vrot.lane.b32.xlu0 %v1460, 96
        %v1991 = vpop.permute.xlu0 %1990
        %1992 = vrot.lane.b32.xlu0 %v1461, 96
        %v1993 = vpop.permute.xlu0 %1992
        %1994 = vrot.lane.b32.xlu0 %v1462, 96
        %v1995 = vpop.permute.xlu0 %1994
        %v1997 = vsel %vm1369, %v1981, 0
        %v2000 = vsel %vm1369, %v1983, 0
        %v2003 = vsel %vm1369, %v1985, 0
        %v2006 = vsel %vm1369, %v1987, 0
        %v2009 = vsel %vm1369, %v1989, 0
        %v2012 = vsel %vm1369, %v1991, 0
        %v2015 = vsel %vm1369, %v1993, 0
        %v2018 = vsel %vm1369, %v1995, 0
        %2020 = vmatpush.bf16.xpose.msra.mxu0 0
        %2021 = vmatpush.bf16.xpose.msra.mxu0 0
        %2022 = vmatpush.bf16.xpose.msra.mxu0 0
        %2023 = vmatpush.bf16.xpose.msra.mxu0 0
        %2024 = vmatpush.bf16.xpose.msra.mxu0 %v2018
        %2025 = vmatpush.bf16.xpose.msra.mxu0 %v2015
        %2026 = vmatpush.bf16.xpose.msra.mxu0 %v2012
        %2027 = vmatpush.bf16.xpose.msra.mxu0 %v2009
        %2028 = vmatmul.bf16.gmra.mxu0 %v1997
        %v2029 = vpop.f32.mrf.mxu0
        %v2030 = vadd.f32 0.0, %v2029
        %v2031 = vpop.f32.mrf.mxu0
        %v2032 = vadd.f32 0.0, %v2031
        %2033 = vmatmul.bf16.gmra.mxu0 %v2000
        %v2034 = vpop.f32.mrf.mxu0
        %v2035 = vadd.f32 0.0, %v2034
        %v2036 = vpop.f32.mrf.mxu0
        %v2037 = vadd.f32 0.0, %v2036
        %2038 = vmatmul.bf16.gmra.mxu0 %v2003
        %v2039 = vpop.f32.mrf.mxu0
        %v2040 = vadd.f32 0.0, %v2039
        %v2041 = vpop.f32.mrf.mxu0
        %v2042 = vadd.f32 0.0, %v2041
        %2043 = vmatmul.bf16.gmra.mxu0 %v2006
        %v2044 = vpop.f32.mrf.mxu0
        %v2045 = vadd.f32 0.0, %v2044
        %v2046 = vpop.f32.mrf.mxu0
        %v2047 = vadd.f32 0.0, %v2046
        %2048 = vdwg.mxu0
        %v2049 = vsel %vm1321, %v1961, -1e+30
        %v2050 = vsel %vm1322, %v1963, -1e+30
        %v2051 = vsel %vm1323, %v1966, -1e+30
        %v2052 = vsel %vm1324, %v1968, -1e+30
        %v2053 = vsel %vm1325, %v1971, -1e+30
        %v2054 = vsel %vm1326, %v1973, -1e+30
        %v2055 = vsel %vm1327, %v1976, -1e+30
        %v2056 = vsel %vm1328, %v1978, -1e+30
        %v2057 = vsel %vm1321, %v2030, -1e+30
        %v2058 = vsel %vm1322, %v2032, -1e+30
        %v2059 = vsel %vm1323, %v2035, -1e+30
        %v2060 = vsel %vm1324, %v2037, -1e+30
        %v2061 = vsel %vm1325, %v2040, -1e+30
        %v2062 = vsel %vm1326, %v2042, -1e+30
        %v2063 = vsel %vm1327, %v2045, -1e+30
        %v2064 = vsel %vm1328, %v2047, -1e+30
        %v2065 = vsel %vm1532, %v2049, -inf
        %2066 = vmax.xlane.f32.xlu0 %v2065
        %v2067 = vpop.xlane.xlu0 %2066
        %v2068 = vsel %vm1532, %v2050, -inf
        %2069 = vmax.xlane.f32.xlu0 %v2068
        %v2070 = vpop.xlane.xlu0 %2069
        %v2071 = vsel %vm1532, %v2051, -inf
        %2072 = vmax.xlane.f32.xlu0 %v2071
        %v2073 = vpop.xlane.xlu0 %2072
        %v2074 = vsel %vm1532, %v2052, -inf
        %2075 = vmax.xlane.f32.xlu0 %v2074
        %v2076 = vpop.xlane.xlu0 %2075
        %v2077 = vsel %vm1532, %v2053, -inf
        %2078 = vmax.xlane.f32.xlu0 %v2077
        %v2079 = vpop.xlane.xlu0 %2078
        %v2080 = vsel %vm1532, %v2054, -inf
        %2081 = vmax.xlane.f32.xlu0 %v2080
        %v2082 = vpop.xlane.xlu0 %2081
        %v2083 = vsel %vm1532, %v2055, -inf
        %2084 = vmax.xlane.f32.xlu0 %v2083
        %v2085 = vpop.xlane.xlu0 %2084
        %v2086 = vsel %vm1532, %v2056, -inf
        %2087 = vmax.xlane.f32.xlu0 %v2086
        %v2088 = vpop.xlane.xlu0 %2087
        %v2089 = vsel %vm1532, %v2057, -inf
        %2090 = vmax.xlane.f32.xlu0 %v2089
        %v2091 = vpop.xlane.xlu0 %2090
        %v2092 = vsel %vm1532, %v2058, -inf
        %2093 = vmax.xlane.f32.xlu0 %v2092
        %v2094 = vpop.xlane.xlu0 %2093
        %v2095 = vsel %vm1532, %v2059, -inf
        %2096 = vmax.xlane.f32.xlu0 %v2095
        %v2097 = vpop.xlane.xlu0 %2096
        %v2098 = vsel %vm1532, %v2060, -inf
        %2099 = vmax.xlane.f32.xlu0 %v2098
        %v2100 = vpop.xlane.xlu0 %2099
        %v2101 = vsel %vm1532, %v2061, -inf
        %2102 = vmax.xlane.f32.xlu0 %v2101
        %v2103 = vpop.xlane.xlu0 %2102
        %v2104 = vsel %vm1532, %v2062, -inf
        %2105 = vmax.xlane.f32.xlu0 %v2104
        %v2106 = vpop.xlane.xlu0 %2105
        %v2107 = vsel %vm1532, %v2063, -inf
        %2108 = vmax.xlane.f32.xlu0 %v2107
        %v2109 = vpop.xlane.xlu0 %2108
        %v2110 = vsel %vm1532, %v2064, -inf
        %2111 = vmax.xlane.f32.xlu0 %v2110
        %v2112 = vpop.xlane.xlu0 %2111
        %v2113 = vsub.f32 %v2049, %v2067
        %v2114 = vsub.f32 %v2050, %v2070
        %v2115 = vsub.f32 %v2051, %v2073
        %v2116 = vsub.f32 %v2052, %v2076
        %v2117 = vsub.f32 %v2053, %v2079
        %v2118 = vsub.f32 %v2054, %v2082
        %v2119 = vsub.f32 %v2055, %v2085
        %v2120 = vsub.f32 %v2056, %v2088
        %v2121 = vsub.f32 %v2057, %v2091
        %v2122 = vsub.f32 %v2058, %v2094
        %v2123 = vsub.f32 %v2059, %v2097
        %v2124 = vsub.f32 %v2060, %v2100
        %v2125 = vsub.f32 %v2061, %v2103
        %v2126 = vsub.f32 %v2062, %v2106
        %v2127 = vsub.f32 %v2063, %v2109
        %v2128 = vsub.f32 %v2064, %v2112
        %v2129 = vmul.f32 %v2113, 1.442695
        %v2130 = vpow.pop %v2129
        %v2131 = vmul.f32 %v2114, 1.442695
        %v2132 = vpow.pop %v2131
        %v2133 = vmul.f32 %v2115, 1.442695
        %v2134 = vpow.pop %v2133
        %v2135 = vmul.f32 %v2116, 1.442695
        %v2136 = vpow.pop %v2135
        %v2137 = vmul.f32 %v2117, 1.442695
        %v2138 = vpow.pop %v2137
        %v2139 = vmul.f32 %v2118, 1.442695
        %v2140 = vpow.pop %v2139
        %v2141 = vmul.f32 %v2119, 1.442695
        %v2142 = vpow.pop %v2141
        %v2143 = vmul.f32 %v2120, 1.442695
        %v2144 = vpow.pop %v2143
        %v2145 = vmul.f32 %v2121, 1.442695
        %v2146 = vpow.pop %v2145
        %v2147 = vmul.f32 %v2122, 1.442695
        %v2148 = vpow.pop %v2147
        %v2149 = vmul.f32 %v2123, 1.442695
        %v2150 = vpow.pop %v2149
        %v2151 = vmul.f32 %v2124, 1.442695
        %v2152 = vpow.pop %v2151
        %v2153 = vmul.f32 %v2125, 1.442695
        %v2154 = vpow.pop %v2153
        %v2155 = vmul.f32 %v2126, 1.442695
        %v2156 = vpow.pop %v2155
        %v2157 = vmul.f32 %v2127, 1.442695
        %v2158 = vpow.pop %v2157
        %v2159 = vmul.f32 %v2128, 1.442695
        %v2160 = vpow.pop %v2159
        %v2161 = vsel %vm1532, %v2130, 0.0
        %2162 = vadd.xlane.f32.xlu0 %v2161
        %v2163 = vpop.xlane.xlu0 %2162
        %v2164 = vsel %vm1532, %v2132, 0.0
        %2165 = vadd.xlane.f32.xlu0 %v2164
        %v2166 = vpop.xlane.xlu0 %2165
        %v2167 = vsel %vm1532, %v2134, 0.0
        %2168 = vadd.xlane.f32.xlu0 %v2167
        %v2169 = vpop.xlane.xlu0 %2168
        %v2170 = vsel %vm1532, %v2136, 0.0
        %2171 = vadd.xlane.f32.xlu0 %v2170
        %v2172 = vpop.xlane.xlu0 %2171
        %v2173 = vsel %vm1532, %v2138, 0.0
        %2174 = vadd.xlane.f32.xlu0 %v2173
        %v2175 = vpop.xlane.xlu0 %2174
        %v2176 = vsel %vm1532, %v2140, 0.0
        %2177 = vadd.xlane.f32.xlu0 %v2176
        %v2178 = vpop.xlane.xlu0 %2177
        %v2179 = vsel %vm1532, %v2142, 0.0
        %2180 = vadd.xlane.f32.xlu0 %v2179
        %v2181 = vpop.xlane.xlu0 %2180
        %v2182 = vsel %vm1532, %v2144, 0.0
        %2183 = vadd.xlane.f32.xlu0 %v2182
        %v2184 = vpop.xlane.xlu0 %2183
        %v2185 = vsel %vm1532, %v2146, 0.0
        %2186 = vadd.xlane.f32.xlu0 %v2185
        %v2187 = vpop.xlane.xlu0 %2186
        %v2188 = vsel %vm1532, %v2148, 0.0
        %2189 = vadd.xlane.f32.xlu0 %v2188
        %v2190 = vpop.xlane.xlu0 %2189
        %v2191 = vsel %vm1532, %v2150, 0.0
        %2192 = vadd.xlane.f32.xlu0 %v2191
        %v2193 = vpop.xlane.xlu0 %2192
        %v2194 = vsel %vm1532, %v2152, 0.0
        %2195 = vadd.xlane.f32.xlu0 %v2194
        %v2196 = vpop.xlane.xlu0 %2195
        %v2197 = vsel %vm1532, %v2154, 0.0
        %2198 = vadd.xlane.f32.xlu0 %v2197
        %v2199 = vpop.xlane.xlu0 %2198
        %v2200 = vsel %vm1532, %v2156, 0.0
        %2201 = vadd.xlane.f32.xlu0 %v2200
        %v2202 = vpop.xlane.xlu0 %2201
        %v2203 = vsel %vm1532, %v2158, 0.0
        %2204 = vadd.xlane.f32.xlu0 %v2203
        %v2205 = vpop.xlane.xlu0 %2204
        %v2206 = vsel %vm1532, %v2160, 0.0
        %2207 = vadd.xlane.f32.xlu0 %v2206
        %v2208 = vpop.xlane.xlu0 %2207
        %v2209 = vrcp.pop %v2163
        %v2210 = vrcp.pop %v2166
        %v2211 = vrcp.pop %v2169
        %v2212 = vrcp.pop %v2172
        %v2213 = vrcp.pop %v2175
        %v2214 = vrcp.pop %v2178
        %v2215 = vrcp.pop %v2181
        %v2216 = vrcp.pop %v2184
        %v2217 = vrcp.pop %v2187
        %v2218 = vrcp.pop %v2190
        %v2219 = vrcp.pop %v2193
        %v2220 = vrcp.pop %v2196
        %v2221 = vrcp.pop %v2199
        %v2222 = vrcp.pop %v2202
        %v2223 = vrcp.pop %v2205
        %v2224 = vrcp.pop %v2208
        %v2225 = vmul.f32 %v2130, %v2209
        %v2226 = vmul.f32 %v2132, %v2210
        %v2227 = vmul.f32 %v2134, %v2211
        %v2228 = vmul.f32 %v2136, %v2212
        %v2229 = vmul.f32 %v2138, %v2213
        %v2230 = vmul.f32 %v2140, %v2214
        %v2231 = vmul.f32 %v2142, %v2215
        %v2232 = vmul.f32 %v2144, %v2216
        %v2233 = vmul.f32 %v2146, %v2217
        %v2234 = vmul.f32 %v2148, %v2218
        %v2235 = vmul.f32 %v2150, %v2219
        %v2236 = vmul.f32 %v2152, %v2220
        %v2237 = vmul.f32 %v2154, %v2221
        %v2238 = vmul.f32 %v2156, %v2222
        %v2239 = vmul.f32 %v2158, %v2223
        %v2240 = vmul.f32 %v2160, %v2224
        %v2241 = vpack.c.bf16 %v2225, %v2225
        %v2242 = vpack.c.bf16 %v2226, %v2226
        %v2243 = vpack.c.bf16 %v2227, %v2227
        %v2244 = vpack.c.bf16 %v2228, %v2228
        %v2245 = vpack.c.bf16 %v2229, %v2229
        %v2246 = vpack.c.bf16 %v2230, %v2230
        %v2247 = vpack.c.bf16 %v2231, %v2231
        %v2248 = vpack.c.bf16 %v2232, %v2232
        %v2249 = vpack.c.bf16 %v2233, %v2233
        %v2250 = vpack.c.bf16 %v2234, %v2234
        %v2251 = vpack.c.bf16 %v2235, %v2235
        %v2252 = vpack.c.bf16 %v2236, %v2236
        %v2253 = vpack.c.bf16 %v2237, %v2237
        %v2254 = vpack.c.bf16 %v2238, %v2238
        %v2255 = vpack.c.bf16 %v2239, %v2239
        %v2256 = vpack.c.bf16 %v2240, %v2240
        %v2265 = vunpack.c.l.b16 %v2241
        %v2266 = vunpack.c.l.b16 %v2242
        %v2267 = vunpack.c.l.b16 %v2243
        %v2268 = vunpack.c.l.b16 %v2244
        %v2269 = vunpack.c.l.b16 %v2245
        %v2270 = vunpack.c.l.b16 %v2246
        %v2271 = vunpack.c.l.b16 %v2247
        %v2272 = vunpack.c.l.b16 %v2248
        %v2273 = vpack.c.b16 %v2266, %v2265
        %v2274 = vpack.c.b16 %v2268, %v2267
        %v2275 = vpack.c.b16 %v2270, %v2269
        %v2276 = vpack.c.b16 %v2272, %v2271
        %2277 = vrot.lane.b32.xlu0 %v1761, 96
        %v2278 = vpop.permute.xlu0 %2277
        %2279 = vrot.lane.b32.xlu0 %v1762, 96
        %v2280 = vpop.permute.xlu0 %2279
        %2281 = vrot.lane.b32.xlu0 %v1763, 96
        %v2282 = vpop.permute.xlu0 %2281
        %2283 = vrot.lane.b32.xlu0 %v1764, 96
        %v2284 = vpop.permute.xlu0 %2283
        %v2290 = vsel %vm1532, %v2273, 0
        %v2293 = vsel %vm1532, %v2274, 0
        %v2296 = vsel %vm1532, %v2275, 0
        %v2299 = vsel %vm1532, %v2276, 0
        %2301 = vmatpush.bf16.msra.mxu0 0
        %2302 = vmatpush.bf16.msra.mxu0 0
        %2303 = vmatpush.bf16.msra.mxu0 0
        %2304 = vmatpush.bf16.msra.mxu0 0
        %2305 = vmatpush.bf16.msra.mxu0 %v2284
        %2306 = vmatpush.bf16.msra.mxu0 %v2282
        %2307 = vmatpush.bf16.msra.mxu0 %v2280
        %2308 = vmatpush.bf16.msra.mxu0 %v2278
        %2309 = vmatmul.bf16.gmra.mxu0 %v2290
        %v2310 = vpop.f32.mrf.mxu0
        %v2311 = vadd.f32 0.0, %v2310
        %v2312 = vpop.f32.mrf.mxu0
        %v2313 = vadd.f32 0.0, %v2312
        %2314 = vmatmul.bf16.gmra.mxu0 %v2293
        %v2315 = vpop.f32.mrf.mxu0
        %v2316 = vadd.f32 0.0, %v2315
        %v2317 = vpop.f32.mrf.mxu0
        %v2318 = vadd.f32 0.0, %v2317
        %2319 = vmatmul.bf16.gmra.mxu0 %v2296
        %v2320 = vpop.f32.mrf.mxu0
        %v2321 = vadd.f32 0.0, %v2320
        %v2322 = vpop.f32.mrf.mxu0
        %v2323 = vadd.f32 0.0, %v2322
        %2324 = vmatmul.bf16.gmra.mxu0 %v2299
        %v2325 = vpop.f32.mrf.mxu0
        %v2326 = vadd.f32 0.0, %v2325
        %v2327 = vpop.f32.mrf.mxu0
        %v2328 = vadd.f32 0.0, %v2327
        %2329 = vdwg.mxu0
        %v2338 = vunpack.c.l.b16 %v2249
        %v2339 = vunpack.c.l.b16 %v2250
        %v2340 = vunpack.c.l.b16 %v2251
        %v2341 = vunpack.c.l.b16 %v2252
        %v2342 = vunpack.c.l.b16 %v2253
        %v2343 = vunpack.c.l.b16 %v2254
        %v2344 = vunpack.c.l.b16 %v2255
        %v2345 = vunpack.c.l.b16 %v2256
        %v2346 = vpack.c.b16 %v2339, %v2338
        %v2347 = vpack.c.b16 %v2341, %v2340
        %v2348 = vpack.c.b16 %v2343, %v2342
        %v2349 = vpack.c.b16 %v2345, %v2344
        %2350 = vrot.lane.b32.xlu0 %v1846, 96
        %v2351 = vpop.permute.xlu0 %2350
        %2352 = vrot.lane.b32.xlu0 %v1847, 96
        %v2353 = vpop.permute.xlu0 %2352
        %2354 = vrot.lane.b32.xlu0 %v1848, 96
        %v2355 = vpop.permute.xlu0 %2354
        %2356 = vrot.lane.b32.xlu0 %v1849, 96
        %v2357 = vpop.permute.xlu0 %2356
        %v2363 = vsel %vm1532, %v2346, 0
        %v2366 = vsel %vm1532, %v2347, 0
        %v2369 = vsel %vm1532, %v2348, 0
        %v2372 = vsel %vm1532, %v2349, 0
        %2374 = vmatpush.bf16.msra.mxu0 0
        %2375 = vmatpush.bf16.msra.mxu0 0
        %2376 = vmatpush.bf16.msra.mxu0 0
        %2377 = vmatpush.bf16.msra.mxu0 0
        %2378 = vmatpush.bf16.msra.mxu0 %v2357
        %2379 = vmatpush.bf16.msra.mxu0 %v2355
        %2380 = vmatpush.bf16.msra.mxu0 %v2353
        %2381 = vmatpush.bf16.msra.mxu0 %v2351
        %2382 = vmatmul.bf16.gmra.mxu0 %v2363
        %v2383 = vpop.f32.mrf.mxu0
        %v2384 = vadd.f32 0.0, %v2383
        %v2385 = vpop.f32.mrf.mxu0
        %v2386 = vadd.f32 0.0, %v2385
        %2387 = vmatmul.bf16.gmra.mxu0 %v2366
        %v2388 = vpop.f32.mrf.mxu0
        %v2389 = vadd.f32 0.0, %v2388
        %v2390 = vpop.f32.mrf.mxu0
        %v2391 = vadd.f32 0.0, %v2390
        %2392 = vmatmul.bf16.gmra.mxu0 %v2369
        %v2393 = vpop.f32.mrf.mxu0
        %v2394 = vadd.f32 0.0, %v2393
        %v2395 = vpop.f32.mrf.mxu0
        %v2396 = vadd.f32 0.0, %v2395
        %2397 = vmatmul.bf16.gmra.mxu0 %v2372
        %v2398 = vpop.f32.mrf.mxu0
        %v2399 = vadd.f32 0.0, %v2398
        %v2400 = vpop.f32.mrf.mxu0
        %v2401 = vadd.f32 0.0, %v2400
        %2402 = vdwg.mxu0
        %v2403 = vpack.c.bf16 %v2311, %v2311
        %v2404 = vpack.c.bf16 %v2313, %v2313
        %v2405 = vpack.c.bf16 %v2316, %v2316
        %v2406 = vpack.c.bf16 %v2318, %v2318
        %v2407 = vpack.c.bf16 %v2321, %v2321
        %v2408 = vpack.c.bf16 %v2323, %v2323
        %v2409 = vpack.c.bf16 %v2326, %v2326
        %v2410 = vpack.c.bf16 %v2328, %v2328
        %v2411 = vpack.c.bf16 %v2384, %v2384
        %v2412 = vpack.c.bf16 %v2386, %v2386
        %v2413 = vpack.c.bf16 %v2389, %v2389
        %v2414 = vpack.c.bf16 %v2391, %v2391
        %v2415 = vpack.c.bf16 %v2394, %v2394
        %v2416 = vpack.c.bf16 %v2396, %v2396
        %v2417 = vpack.c.bf16 %v2399, %v2399
        %v2418 = vpack.c.bf16 %v2401, %v2401
        %2419 = vrot.lane.b32.xlu0 %v1345, 64
        %v2420 = vpop.permute.xlu0 %2419
        %2421 = vrot.lane.b32.xlu0 %v1346, 64
        %v2422 = vpop.permute.xlu0 %2421
        %2423 = vrot.lane.b32.xlu0 %v1347, 64
        %v2424 = vpop.permute.xlu0 %2423
        %2425 = vrot.lane.b32.xlu0 %v1348, 64
        %v2426 = vpop.permute.xlu0 %2425
        %2427 = vrot.lane.b32.xlu0 %v1365, 64
        %v2428 = vpop.permute.xlu0 %2427
        %2429 = vrot.lane.b32.xlu0 %v1366, 64
        %v2430 = vpop.permute.xlu0 %2429
        %2431 = vrot.lane.b32.xlu0 %v1367, 64
        %v2432 = vpop.permute.xlu0 %2431
        %2433 = vrot.lane.b32.xlu0 %v1368, 64
        %v2434 = vpop.permute.xlu0 %2433
        %v2436 = vsel %vm1369, %v2420, 0
        %v2439 = vsel %vm1369, %v2422, 0
        %v2442 = vsel %vm1369, %v2424, 0
        %v2445 = vsel %vm1369, %v2426, 0
        %v2448 = vsel %vm1369, %v2428, 0
        %v2451 = vsel %vm1369, %v2430, 0
        %v2454 = vsel %vm1369, %v2432, 0
        %v2457 = vsel %vm1369, %v2434, 0
        %2459 = vmatpush.bf16.xpose.msra.mxu0 0
        %2460 = vmatpush.bf16.xpose.msra.mxu0 0
        %2461 = vmatpush.bf16.xpose.msra.mxu0 0
        %2462 = vmatpush.bf16.xpose.msra.mxu0 0
        %2463 = vmatpush.bf16.xpose.msra.mxu0 %v2457
        %2464 = vmatpush.bf16.xpose.msra.mxu0 %v2454
        %2465 = vmatpush.bf16.xpose.msra.mxu0 %v2451
        %2466 = vmatpush.bf16.xpose.msra.mxu0 %v2448
        %2467 = vmatmul.bf16.gmra.mxu0 %v2436
        %v2468 = vpop.f32.mrf.mxu0
        %v2469 = vadd.f32 0.0, %v2468
        %v2470 = vpop.f32.mrf.mxu0
        %v2471 = vadd.f32 0.0, %v2470
        %2472 = vmatmul.bf16.gmra.mxu0 %v2439
        %v2473 = vpop.f32.mrf.mxu0
        %v2474 = vadd.f32 0.0, %v2473
        %v2475 = vpop.f32.mrf.mxu0
        %v2476 = vadd.f32 0.0, %v2475
        %2477 = vmatmul.bf16.gmra.mxu0 %v2442
        %v2478 = vpop.f32.mrf.mxu0
        %v2479 = vadd.f32 0.0, %v2478
        %v2480 = vpop.f32.mrf.mxu0
        %v2481 = vadd.f32 0.0, %v2480
        %2482 = vmatmul.bf16.gmra.mxu0 %v2445
        %v2483 = vpop.f32.mrf.mxu0
        %v2484 = vadd.f32 0.0, %v2483
        %v2485 = vpop.f32.mrf.mxu0
        %v2486 = vadd.f32 0.0, %v2485
        %2487 = vdwg.mxu0
        %2488 = vrot.lane.b32.xlu0 %v1439, 64
        %v2489 = vpop.permute.xlu0 %2488
        %2490 = vrot.lane.b32.xlu0 %v1440, 64
        %v2491 = vpop.permute.xlu0 %2490
        %2492 = vrot.lane.b32.xlu0 %v1441, 64
        %v2493 = vpop.permute.xlu0 %2492
        %2494 = vrot.lane.b32.xlu0 %v1442, 64
        %v2495 = vpop.permute.xlu0 %2494
        %2496 = vrot.lane.b32.xlu0 %v1459, 64
        %v2497 = vpop.permute.xlu0 %2496
        %2498 = vrot.lane.b32.xlu0 %v1460, 64
        %v2499 = vpop.permute.xlu0 %2498
        %2500 = vrot.lane.b32.xlu0 %v1461, 64
        %v2501 = vpop.permute.xlu0 %2500
        %2502 = vrot.lane.b32.xlu0 %v1462, 64
        %v2503 = vpop.permute.xlu0 %2502
        %v2505 = vsel %vm1369, %v2489, 0
        %v2508 = vsel %vm1369, %v2491, 0
        %v2511 = vsel %vm1369, %v2493, 0
        %v2514 = vsel %vm1369, %v2495, 0
        %v2517 = vsel %vm1369, %v2497, 0
        %v2520 = vsel %vm1369, %v2499, 0
        %v2523 = vsel %vm1369, %v2501, 0
        %v2526 = vsel %vm1369, %v2503, 0
        %2528 = vmatpush.bf16.xpose.msra.mxu0 0
        %2529 = vmatpush.bf16.xpose.msra.mxu0 0
        %2530 = vmatpush.bf16.xpose.msra.mxu0 0
        %2531 = vmatpush.bf16.xpose.msra.mxu0 0
        %2532 = vmatpush.bf16.xpose.msra.mxu0 %v2526
        %2533 = vmatpush.bf16.xpose.msra.mxu0 %v2523
        %2534 = vmatpush.bf16.xpose.msra.mxu0 %v2520
        %2535 = vmatpush.bf16.xpose.msra.mxu0 %v2517
        %2536 = vmatmul.bf16.gmra.mxu0 %v2505
        %v2537 = vpop.f32.mrf.mxu0
        %v2538 = vadd.f32 0.0, %v2537
        %v2539 = vpop.f32.mrf.mxu0
        %v2540 = vadd.f32 0.0, %v2539
        %2541 = vmatmul.bf16.gmra.mxu0 %v2508
        %v2542 = vpop.f32.mrf.mxu0
        %v2543 = vadd.f32 0.0, %v2542
        %v2544 = vpop.f32.mrf.mxu0
        %v2545 = vadd.f32 0.0, %v2544
        %2546 = vmatmul.bf16.gmra.mxu0 %v2511
        %v2547 = vpop.f32.mrf.mxu0
        %v2548 = vadd.f32 0.0, %v2547
        %v2549 = vpop.f32.mrf.mxu0
        %v2550 = vadd.f32 0.0, %v2549
        %2551 = vmatmul.bf16.gmra.mxu0 %v2514
        %v2552 = vpop.f32.mrf.mxu0
        %v2553 = vadd.f32 0.0, %v2552
        %v2554 = vpop.f32.mrf.mxu0
        %v2555 = vadd.f32 0.0, %v2554
        %2556 = vdwg.mxu0
        %v2557 = vsel %vm1321, %v2469, -1e+30
        %v2558 = vsel %vm1322, %v2471, -1e+30
        %v2559 = vsel %vm1323, %v2474, -1e+30
        %v2560 = vsel %vm1324, %v2476, -1e+30
        %v2561 = vsel %vm1325, %v2479, -1e+30
        %v2562 = vsel %vm1326, %v2481, -1e+30
        %v2563 = vsel %vm1327, %v2484, -1e+30
        %v2564 = vsel %vm1328, %v2486, -1e+30
        %v2565 = vsel %vm1321, %v2538, -1e+30
        %v2566 = vsel %vm1322, %v2540, -1e+30
        %v2567 = vsel %vm1323, %v2543, -1e+30
        %v2568 = vsel %vm1324, %v2545, -1e+30
        %v2569 = vsel %vm1325, %v2548, -1e+30
        %v2570 = vsel %vm1326, %v2550, -1e+30
        %v2571 = vsel %vm1327, %v2553, -1e+30
        %v2572 = vsel %vm1328, %v2555, -1e+30
        %v2573 = vsel %vm1532, %v2557, -inf
        %2574 = vmax.xlane.f32.xlu0 %v2573
        %v2575 = vpop.xlane.xlu0 %2574
        %v2576 = vsel %vm1532, %v2558, -inf
        %2577 = vmax.xlane.f32.xlu0 %v2576
        %v2578 = vpop.xlane.xlu0 %2577
        %v2579 = vsel %vm1532, %v2559, -inf
        %2580 = vmax.xlane.f32.xlu0 %v2579
        %v2581 = vpop.xlane.xlu0 %2580
        %v2582 = vsel %vm1532, %v2560, -inf
        %2583 = vmax.xlane.f32.xlu0 %v2582
        %v2584 = vpop.xlane.xlu0 %2583
        %v2585 = vsel %vm1532, %v2561, -inf
        %2586 = vmax.xlane.f32.xlu0 %v2585
        %v2587 = vpop.xlane.xlu0 %2586
        %v2588 = vsel %vm1532, %v2562, -inf
        %2589 = vmax.xlane.f32.xlu0 %v2588
        %v2590 = vpop.xlane.xlu0 %2589
        %v2591 = vsel %vm1532, %v2563, -inf
        %2592 = vmax.xlane.f32.xlu0 %v2591
        %v2593 = vpop.xlane.xlu0 %2592
        %v2594 = vsel %vm1532, %v2564, -inf
        %2595 = vmax.xlane.f32.xlu0 %v2594
        %v2596 = vpop.xlane.xlu0 %2595
        %v2597 = vsel %vm1532, %v2565, -inf
        %2598 = vmax.xlane.f32.xlu0 %v2597
        %v2599 = vpop.xlane.xlu0 %2598
        %v2600 = vsel %vm1532, %v2566, -inf
        %2601 = vmax.xlane.f32.xlu0 %v2600
        %v2602 = vpop.xlane.xlu0 %2601
        %v2603 = vsel %vm1532, %v2567, -inf
        %2604 = vmax.xlane.f32.xlu0 %v2603
        %v2605 = vpop.xlane.xlu0 %2604
        %v2606 = vsel %vm1532, %v2568, -inf
        %2607 = vmax.xlane.f32.xlu0 %v2606
        %v2608 = vpop.xlane.xlu0 %2607
        %v2609 = vsel %vm1532, %v2569, -inf
        %2610 = vmax.xlane.f32.xlu0 %v2609
        %v2611 = vpop.xlane.xlu0 %2610
        %v2612 = vsel %vm1532, %v2570, -inf
        %2613 = vmax.xlane.f32.xlu0 %v2612
        %v2614 = vpop.xlane.xlu0 %2613
        %v2615 = vsel %vm1532, %v2571, -inf
        %2616 = vmax.xlane.f32.xlu0 %v2615
        %v2617 = vpop.xlane.xlu0 %2616
        %v2618 = vsel %vm1532, %v2572, -inf
        %2619 = vmax.xlane.f32.xlu0 %v2618
        %v2620 = vpop.xlane.xlu0 %2619
        %v2621 = vsub.f32 %v2557, %v2575
        %v2622 = vsub.f32 %v2558, %v2578
        %v2623 = vsub.f32 %v2559, %v2581
        %v2624 = vsub.f32 %v2560, %v2584
        %v2625 = vsub.f32 %v2561, %v2587
        %v2626 = vsub.f32 %v2562, %v2590
        %v2627 = vsub.f32 %v2563, %v2593
        %v2628 = vsub.f32 %v2564, %v2596
        %v2629 = vsub.f32 %v2565, %v2599
        %v2630 = vsub.f32 %v2566, %v2602
        %v2631 = vsub.f32 %v2567, %v2605
        %v2632 = vsub.f32 %v2568, %v2608
        %v2633 = vsub.f32 %v2569, %v2611
        %v2634 = vsub.f32 %v2570, %v2614
        %v2635 = vsub.f32 %v2571, %v2617
        %v2636 = vsub.f32 %v2572, %v2620
        %v2637 = vmul.f32 %v2621, 1.442695
        %v2638 = vpow.pop %v2637
        %v2639 = vmul.f32 %v2622, 1.442695
        %v2640 = vpow.pop %v2639
        %v2641 = vmul.f32 %v2623, 1.442695
        %v2642 = vpow.pop %v2641
        %v2643 = vmul.f32 %v2624, 1.442695
        %v2644 = vpow.pop %v2643
        %v2645 = vmul.f32 %v2625, 1.442695
        %v2646 = vpow.pop %v2645
        %v2647 = vmul.f32 %v2626, 1.442695
        %v2648 = vpow.pop %v2647
        %v2649 = vmul.f32 %v2627, 1.442695
        %v2650 = vpow.pop %v2649
        %v2651 = vmul.f32 %v2628, 1.442695
        %v2652 = vpow.pop %v2651
        %v2653 = vmul.f32 %v2629, 1.442695
        %v2654 = vpow.pop %v2653
        %v2655 = vmul.f32 %v2630, 1.442695
        %v2656 = vpow.pop %v2655
        %v2657 = vmul.f32 %v2631, 1.442695
        %v2658 = vpow.pop %v2657
        %v2659 = vmul.f32 %v2632, 1.442695
        %v2660 = vpow.pop %v2659
        %v2661 = vmul.f32 %v2633, 1.442695
        %v2662 = vpow.pop %v2661
        %v2663 = vmul.f32 %v2634, 1.442695
        %v2664 = vpow.pop %v2663
        %v2665 = vmul.f32 %v2635, 1.442695
        %v2666 = vpow.pop %v2665
        %v2667 = vmul.f32 %v2636, 1.442695
        %v2668 = vpow.pop %v2667
        %v2669 = vsel %vm1532, %v2638, 0.0
        %2670 = vadd.xlane.f32.xlu0 %v2669
        %v2671 = vpop.xlane.xlu0 %2670
        %v2672 = vsel %vm1532, %v2640, 0.0
        %2673 = vadd.xlane.f32.xlu0 %v2672
        %v2674 = vpop.xlane.xlu0 %2673
        %v2675 = vsel %vm1532, %v2642, 0.0
        %2676 = vadd.xlane.f32.xlu0 %v2675
        %v2677 = vpop.xlane.xlu0 %2676
        %v2678 = vsel %vm1532, %v2644, 0.0
        %2679 = vadd.xlane.f32.xlu0 %v2678
        %v2680 = vpop.xlane.xlu0 %2679
        %v2681 = vsel %vm1532, %v2646, 0.0
        %2682 = vadd.xlane.f32.xlu0 %v2681
        %v2683 = vpop.xlane.xlu0 %2682
        %v2684 = vsel %vm1532, %v2648, 0.0
        %2685 = vadd.xlane.f32.xlu0 %v2684
        %v2686 = vpop.xlane.xlu0 %2685
        %v2687 = vsel %vm1532, %v2650, 0.0
        %2688 = vadd.xlane.f32.xlu0 %v2687
        %v2689 = vpop.xlane.xlu0 %2688
        %v2690 = vsel %vm1532, %v2652, 0.0
        %2691 = vadd.xlane.f32.xlu0 %v2690
        %v2692 = vpop.xlane.xlu0 %2691
        %v2693 = vsel %vm1532, %v2654, 0.0
        %2694 = vadd.xlane.f32.xlu0 %v2693
        %v2695 = vpop.xlane.xlu0 %2694
        %v2696 = vsel %vm1532, %v2656, 0.0
        %2697 = vadd.xlane.f32.xlu0 %v2696
        %v2698 = vpop.xlane.xlu0 %2697
        %v2699 = vsel %vm1532, %v2658, 0.0
        %2700 = vadd.xlane.f32.xlu0 %v2699
        %v2701 = vpop.xlane.xlu0 %2700
        %v2702 = vsel %vm1532, %v2660, 0.0
        %2703 = vadd.xlane.f32.xlu0 %v2702
        %v2704 = vpop.xlane.xlu0 %2703
        %v2705 = vsel %vm1532, %v2662, 0.0
        %2706 = vadd.xlane.f32.xlu0 %v2705
        %v2707 = vpop.xlane.xlu0 %2706
        %v2708 = vsel %vm1532, %v2664, 0.0
        %2709 = vadd.xlane.f32.xlu0 %v2708
        %v2710 = vpop.xlane.xlu0 %2709
        %v2711 = vsel %vm1532, %v2666, 0.0
        %2712 = vadd.xlane.f32.xlu0 %v2711
        %v2713 = vpop.xlane.xlu0 %2712
        %v2714 = vsel %vm1532, %v2668, 0.0
        %2715 = vadd.xlane.f32.xlu0 %v2714
        %v2716 = vpop.xlane.xlu0 %2715
        %v2717 = vrcp.pop %v2671
        %v2718 = vrcp.pop %v2674
        %v2719 = vrcp.pop %v2677
        %v2720 = vrcp.pop %v2680
        %v2721 = vrcp.pop %v2683
        %v2722 = vrcp.pop %v2686
        %v2723 = vrcp.pop %v2689
        %v2724 = vrcp.pop %v2692
        %v2725 = vrcp.pop %v2695
        %v2726 = vrcp.pop %v2698
        %v2727 = vrcp.pop %v2701
        %v2728 = vrcp.pop %v2704
        %v2729 = vrcp.pop %v2707
        %v2730 = vrcp.pop %v2710
        %v2731 = vrcp.pop %v2713
        %v2732 = vrcp.pop %v2716
        %v2733 = vmul.f32 %v2638, %v2717
        %v2734 = vmul.f32 %v2640, %v2718
        %v2735 = vmul.f32 %v2642, %v2719
        %v2736 = vmul.f32 %v2644, %v2720
        %v2737 = vmul.f32 %v2646, %v2721
        %v2738 = vmul.f32 %v2648, %v2722
        %v2739 = vmul.f32 %v2650, %v2723
        %v2740 = vmul.f32 %v2652, %v2724
        %v2741 = vmul.f32 %v2654, %v2725
        %v2742 = vmul.f32 %v2656, %v2726
        %v2743 = vmul.f32 %v2658, %v2727
        %v2744 = vmul.f32 %v2660, %v2728
        %v2745 = vmul.f32 %v2662, %v2729
        %v2746 = vmul.f32 %v2664, %v2730
        %v2747 = vmul.f32 %v2666, %v2731
        %v2748 = vmul.f32 %v2668, %v2732
        %v2749 = vpack.c.bf16 %v2733, %v2733
        %v2750 = vpack.c.bf16 %v2734, %v2734
        %v2751 = vpack.c.bf16 %v2735, %v2735
        %v2752 = vpack.c.bf16 %v2736, %v2736
        %v2753 = vpack.c.bf16 %v2737, %v2737
        %v2754 = vpack.c.bf16 %v2738, %v2738
        %v2755 = vpack.c.bf16 %v2739, %v2739
        %v2756 = vpack.c.bf16 %v2740, %v2740
        %v2757 = vpack.c.bf16 %v2741, %v2741
        %v2758 = vpack.c.bf16 %v2742, %v2742
        %v2759 = vpack.c.bf16 %v2743, %v2743
        %v2760 = vpack.c.bf16 %v2744, %v2744
        %v2761 = vpack.c.bf16 %v2745, %v2745
        %v2762 = vpack.c.bf16 %v2746, %v2746
        %v2763 = vpack.c.bf16 %v2747, %v2747
        %v2764 = vpack.c.bf16 %v2748, %v2748
        %v2773 = vunpack.c.l.b16 %v2749
        %v2774 = vunpack.c.l.b16 %v2750
        %v2775 = vunpack.c.l.b16 %v2751
        %v2776 = vunpack.c.l.b16 %v2752
        %v2777 = vunpack.c.l.b16 %v2753
        %v2778 = vunpack.c.l.b16 %v2754
        %v2779 = vunpack.c.l.b16 %v2755
        %v2780 = vunpack.c.l.b16 %v2756
        %v2781 = vpack.c.b16 %v2774, %v2773
        %v2782 = vpack.c.b16 %v2776, %v2775
        %v2783 = vpack.c.b16 %v2778, %v2777
        %v2784 = vpack.c.b16 %v2780, %v2779
        %2785 = vrot.lane.b32.xlu0 %v1761, 64
        %v2786 = vpop.permute.xlu0 %2785
        %2787 = vrot.lane.b32.xlu0 %v1762, 64
        %v2788 = vpop.permute.xlu0 %2787
        %2789 = vrot.lane.b32.xlu0 %v1763, 64
        %v2790 = vpop.permute.xlu0 %2789
        %2791 = vrot.lane.b32.xlu0 %v1764, 64
        %v2792 = vpop.permute.xlu0 %2791
        %v2798 = vsel %vm1532, %v2781, 0
        %v2801 = vsel %vm1532, %v2782, 0
        %v2804 = vsel %vm1532, %v2783, 0
        %v2807 = vsel %vm1532, %v2784, 0
        %2809 = vmatpush.bf16.msra.mxu0 0
        %2810 = vmatpush.bf16.msra.mxu0 0
        %2811 = vmatpush.bf16.msra.mxu0 0
        %2812 = vmatpush.bf16.msra.mxu0 0
        %2813 = vmatpush.bf16.msra.mxu0 %v2792
        %2814 = vmatpush.bf16.msra.mxu0 %v2790
        %2815 = vmatpush.bf16.msra.mxu0 %v2788
        %2816 = vmatpush.bf16.msra.mxu0 %v2786
        %2817 = vmatmul.bf16.gmra.mxu0 %v2798
        %v2818 = vpop.f32.mrf.mxu0
        %v2819 = vadd.f32 0.0, %v2818
        %v2820 = vpop.f32.mrf.mxu0
        %v2821 = vadd.f32 0.0, %v2820
        %2822 = vmatmul.bf16.gmra.mxu0 %v2801
        %v2823 = vpop.f32.mrf.mxu0
        %v2824 = vadd.f32 0.0, %v2823
        %v2825 = vpop.f32.mrf.mxu0
        %v2826 = vadd.f32 0.0, %v2825
        %2827 = vmatmul.bf16.gmra.mxu0 %v2804
        %v2828 = vpop.f32.mrf.mxu0
        %v2829 = vadd.f32 0.0, %v2828
        %v2830 = vpop.f32.mrf.mxu0
        %v2831 = vadd.f32 0.0, %v2830
        %2832 = vmatmul.bf16.gmra.mxu0 %v2807
        %v2833 = vpop.f32.mrf.mxu0
        %v2834 = vadd.f32 0.0, %v2833
        %v2835 = vpop.f32.mrf.mxu0
        %v2836 = vadd.f32 0.0, %v2835
        %2837 = vdwg.mxu0
        %v2846 = vunpack.c.l.b16 %v2757
        %v2847 = vunpack.c.l.b16 %v2758
        %v2848 = vunpack.c.l.b16 %v2759
        %v2849 = vunpack.c.l.b16 %v2760
        %v2850 = vunpack.c.l.b16 %v2761
        %v2851 = vunpack.c.l.b16 %v2762
        %v2852 = vunpack.c.l.b16 %v2763
        %v2853 = vunpack.c.l.b16 %v2764
        %v2854 = vpack.c.b16 %v2847, %v2846
        %v2855 = vpack.c.b16 %v2849, %v2848
        %v2856 = vpack.c.b16 %v2851, %v2850
        %v2857 = vpack.c.b16 %v2853, %v2852
        %2858 = vrot.lane.b32.xlu0 %v1846, 64
        %v2859 = vpop.permute.xlu0 %2858
        %2860 = vrot.lane.b32.xlu0 %v1847, 64
        %v2861 = vpop.permute.xlu0 %2860
        %2862 = vrot.lane.b32.xlu0 %v1848, 64
        %v2863 = vpop.permute.xlu0 %2862
        %2864 = vrot.lane.b32.xlu0 %v1849, 64
        %v2865 = vpop.permute.xlu0 %2864
        %v2871 = vsel %vm1532, %v2854, 0
        %v2874 = vsel %vm1532, %v2855, 0
        %v2877 = vsel %vm1532, %v2856, 0
        %v2880 = vsel %vm1532, %v2857, 0
        %2882 = vmatpush.bf16.msra.mxu0 0
        %2883 = vmatpush.bf16.msra.mxu0 0
        %2884 = vmatpush.bf16.msra.mxu0 0
        %2885 = vmatpush.bf16.msra.mxu0 0
        %2886 = vmatpush.bf16.msra.mxu0 %v2865
        %2887 = vmatpush.bf16.msra.mxu0 %v2863
        %2888 = vmatpush.bf16.msra.mxu0 %v2861
        %2889 = vmatpush.bf16.msra.mxu0 %v2859
        %2890 = vmatmul.bf16.gmra.mxu0 %v2871
        %v2891 = vpop.f32.mrf.mxu0
        %v2892 = vadd.f32 0.0, %v2891
        %v2893 = vpop.f32.mrf.mxu0
        %v2894 = vadd.f32 0.0, %v2893
        %2895 = vmatmul.bf16.gmra.mxu0 %v2874
        %v2896 = vpop.f32.mrf.mxu0
        %v2897 = vadd.f32 0.0, %v2896
        %v2898 = vpop.f32.mrf.mxu0
        %v2899 = vadd.f32 0.0, %v2898
        %2900 = vmatmul.bf16.gmra.mxu0 %v2877
        %v2901 = vpop.f32.mrf.mxu0
        %v2902 = vadd.f32 0.0, %v2901
        %v2903 = vpop.f32.mrf.mxu0
        %v2904 = vadd.f32 0.0, %v2903
        %2905 = vmatmul.bf16.gmra.mxu0 %v2880
        %v2906 = vpop.f32.mrf.mxu0
        %v2907 = vadd.f32 0.0, %v2906
        %v2908 = vpop.f32.mrf.mxu0
        %v2909 = vadd.f32 0.0, %v2908
        %2910 = vdwg.mxu0
        %v2911 = vpack.c.bf16 %v2819, %v2819
        %v2912 = vpack.c.bf16 %v2821, %v2821
        %v2913 = vpack.c.bf16 %v2824, %v2824
        %v2914 = vpack.c.bf16 %v2826, %v2826
        %v2915 = vpack.c.bf16 %v2829, %v2829
        %v2916 = vpack.c.bf16 %v2831, %v2831
        %v2917 = vpack.c.bf16 %v2834, %v2834
        %v2918 = vpack.c.bf16 %v2836, %v2836
        %v2919 = vpack.c.bf16 %v2892, %v2892
        %v2920 = vpack.c.bf16 %v2894, %v2894
        %v2921 = vpack.c.bf16 %v2897, %v2897
        %v2922 = vpack.c.bf16 %v2899, %v2899
        %v2923 = vpack.c.bf16 %v2902, %v2902
        %v2924 = vpack.c.bf16 %v2904, %v2904
        %v2925 = vpack.c.bf16 %v2907, %v2907
        %v2926 = vpack.c.bf16 %v2909, %v2909
        %2927 = vrot.lane.b32.xlu0 %v1345, 32
        %v2928 = vpop.permute.xlu0 %2927
        %2929 = vrot.lane.b32.xlu0 %v1346, 32
        %v2930 = vpop.permute.xlu0 %2929
        %2931 = vrot.lane.b32.xlu0 %v1347, 32
        %v2932 = vpop.permute.xlu0 %2931
        %2933 = vrot.lane.b32.xlu0 %v1348, 32
        %v2934 = vpop.permute.xlu0 %2933
        %2935 = vrot.lane.b32.xlu0 %v1365, 32
        %v2936 = vpop.permute.xlu0 %2935
        %2937 = vrot.lane.b32.xlu0 %v1366, 32
        %v2938 = vpop.permute.xlu0 %2937
        %2939 = vrot.lane.b32.xlu0 %v1367, 32
        %v2940 = vpop.permute.xlu0 %2939
        %2941 = vrot.lane.b32.xlu0 %v1368, 32
        %v2942 = vpop.permute.xlu0 %2941
        %v2944 = vsel %vm1369, %v2928, 0
        %v2947 = vsel %vm1369, %v2930, 0
        %v2950 = vsel %vm1369, %v2932, 0
        %v2953 = vsel %vm1369, %v2934, 0
        %v2956 = vsel %vm1369, %v2936, 0
        %v2959 = vsel %vm1369, %v2938, 0
        %v2962 = vsel %vm1369, %v2940, 0
        %v2965 = vsel %vm1369, %v2942, 0
        %2967 = vmatpush.bf16.xpose.msra.mxu0 0
        %2968 = vmatpush.bf16.xpose.msra.mxu0 0
        %2969 = vmatpush.bf16.xpose.msra.mxu0 0
        %2970 = vmatpush.bf16.xpose.msra.mxu0 0
        %2971 = vmatpush.bf16.xpose.msra.mxu0 %v2965
        %2972 = vmatpush.bf16.xpose.msra.mxu0 %v2962
        %2973 = vmatpush.bf16.xpose.msra.mxu0 %v2959
        %2974 = vmatpush.bf16.xpose.msra.mxu0 %v2956
        %2975 = vmatmul.bf16.gmra.mxu0 %v2944
        %v2976 = vpop.f32.mrf.mxu0
        %v2977 = vadd.f32 0.0, %v2976
        %v2978 = vpop.f32.mrf.mxu0
        %v2979 = vadd.f32 0.0, %v2978
        %2980 = vmatmul.bf16.gmra.mxu0 %v2947
        %v2981 = vpop.f32.mrf.mxu0
        %v2982 = vadd.f32 0.0, %v2981
        %v2983 = vpop.f32.mrf.mxu0
        %v2984 = vadd.f32 0.0, %v2983
        %2985 = vmatmul.bf16.gmra.mxu0 %v2950
        %v2986 = vpop.f32.mrf.mxu0
        %v2987 = vadd.f32 0.0, %v2986
        %v2988 = vpop.f32.mrf.mxu0
        %v2989 = vadd.f32 0.0, %v2988
        %2990 = vmatmul.bf16.gmra.mxu0 %v2953
        %v2991 = vpop.f32.mrf.mxu0
        %v2992 = vadd.f32 0.0, %v2991
        %v2993 = vpop.f32.mrf.mxu0
        %v2994 = vadd.f32 0.0, %v2993
        %2995 = vdwg.mxu0
        %2996 = vrot.lane.b32.xlu0 %v1439, 32
        %v2997 = vpop.permute.xlu0 %2996
        %2998 = vrot.lane.b32.xlu0 %v1440, 32
        %v2999 = vpop.permute.xlu0 %2998
        %3000 = vrot.lane.b32.xlu0 %v1441, 32
        %v3001 = vpop.permute.xlu0 %3000
        %3002 = vrot.lane.b32.xlu0 %v1442, 32
        %v3003 = vpop.permute.xlu0 %3002
        %3004 = vrot.lane.b32.xlu0 %v1459, 32
        %v3005 = vpop.permute.xlu0 %3004
        %3006 = vrot.lane.b32.xlu0 %v1460, 32
        %v3007 = vpop.permute.xlu0 %3006
        %3008 = vrot.lane.b32.xlu0 %v1461, 32
        %v3009 = vpop.permute.xlu0 %3008
        %3010 = vrot.lane.b32.xlu0 %v1462, 32
        %v3011 = vpop.permute.xlu0 %3010
        %v3013 = vsel %vm1369, %v2997, 0
        %v3016 = vsel %vm1369, %v2999, 0
        %v3019 = vsel %vm1369, %v3001, 0
        %v3022 = vsel %vm1369, %v3003, 0
        %v3025 = vsel %vm1369, %v3005, 0
        %v3028 = vsel %vm1369, %v3007, 0
        %v3031 = vsel %vm1369, %v3009, 0
        %v3034 = vsel %vm1369, %v3011, 0
        %3036 = vmatpush.bf16.xpose.msra.mxu0 0
        %3037 = vmatpush.bf16.xpose.msra.mxu0 0
        %3038 = vmatpush.bf16.xpose.msra.mxu0 0
        %3039 = vmatpush.bf16.xpose.msra.mxu0 0
        %3040 = vmatpush.bf16.xpose.msra.mxu0 %v3034
        %3041 = vmatpush.bf16.xpose.msra.mxu0 %v3031
        %3042 = vmatpush.bf16.xpose.msra.mxu0 %v3028
        %3043 = vmatpush.bf16.xpose.msra.mxu0 %v3025
        %3044 = vmatmul.bf16.gmra.mxu0 %v3013
        %v3045 = vpop.f32.mrf.mxu0
        %v3046 = vadd.f32 0.0, %v3045
        %v3047 = vpop.f32.mrf.mxu0
        %v3048 = vadd.f32 0.0, %v3047
        %3049 = vmatmul.bf16.gmra.mxu0 %v3016
        %v3050 = vpop.f32.mrf.mxu0
        %v3051 = vadd.f32 0.0, %v3050
        %v3052 = vpop.f32.mrf.mxu0
        %v3053 = vadd.f32 0.0, %v3052
        %3054 = vmatmul.bf16.gmra.mxu0 %v3019
        %v3055 = vpop.f32.mrf.mxu0
        %v3056 = vadd.f32 0.0, %v3055
        %v3057 = vpop.f32.mrf.mxu0
        %v3058 = vadd.f32 0.0, %v3057
        %3059 = vmatmul.bf16.gmra.mxu0 %v3022
        %v3060 = vpop.f32.mrf.mxu0
        %v3061 = vadd.f32 0.0, %v3060
        %v3062 = vpop.f32.mrf.mxu0
        %v3063 = vadd.f32 0.0, %v3062
        %3064 = vdwg.mxu0
        %v3065 = vsel %vm1321, %v2977, -1e+30
        %v3066 = vsel %vm1322, %v2979, -1e+30
        %v3067 = vsel %vm1323, %v2982, -1e+30
        %v3068 = vsel %vm1324, %v2984, -1e+30
        %v3069 = vsel %vm1325, %v2987, -1e+30
        %v3070 = vsel %vm1326, %v2989, -1e+30
        %v3071 = vsel %vm1327, %v2992, -1e+30
        %v3072 = vsel %vm1328, %v2994, -1e+30
        %v3073 = vsel %vm1321, %v3046, -1e+30
        %v3074 = vsel %vm1322, %v3048, -1e+30
        %v3075 = vsel %vm1323, %v3051, -1e+30
        %v3076 = vsel %vm1324, %v3053, -1e+30
        %v3077 = vsel %vm1325, %v3056, -1e+30
        %v3078 = vsel %vm1326, %v3058, -1e+30
        %v3079 = vsel %vm1327, %v3061, -1e+30
        %v3080 = vsel %vm1328, %v3063, -1e+30
        %v3081 = vsel %vm1532, %v3065, -inf
        %3082 = vmax.xlane.f32.xlu0 %v3081
        %v3083 = vpop.xlane.xlu0 %3082
        %v3084 = vsel %vm1532, %v3066, -inf
        %3085 = vmax.xlane.f32.xlu0 %v3084
        %v3086 = vpop.xlane.xlu0 %3085
        %v3087 = vsel %vm1532, %v3067, -inf
        %3088 = vmax.xlane.f32.xlu0 %v3087
        %v3089 = vpop.xlane.xlu0 %3088
        %v3090 = vsel %vm1532, %v3068, -inf
        %3091 = vmax.xlane.f32.xlu0 %v3090
        %v3092 = vpop.xlane.xlu0 %3091
        %v3093 = vsel %vm1532, %v3069, -inf
        %3094 = vmax.xlane.f32.xlu0 %v3093
        %v3095 = vpop.xlane.xlu0 %3094
        %v3096 = vsel %vm1532, %v3070, -inf
        %3097 = vmax.xlane.f32.xlu0 %v3096
        %v3098 = vpop.xlane.xlu0 %3097
        %v3099 = vsel %vm1532, %v3071, -inf
        %3100 = vmax.xlane.f32.xlu0 %v3099
        %v3101 = vpop.xlane.xlu0 %3100
        %v3102 = vsel %vm1532, %v3072, -inf
        %3103 = vmax.xlane.f32.xlu0 %v3102
        %v3104 = vpop.xlane.xlu0 %3103
        %v3105 = vsel %vm1532, %v3073, -inf
        %3106 = vmax.xlane.f32.xlu0 %v3105
        %v3107 = vpop.xlane.xlu0 %3106
        %v3108 = vsel %vm1532, %v3074, -inf
        %3109 = vmax.xlane.f32.xlu0 %v3108
        %v3110 = vpop.xlane.xlu0 %3109
        %v3111 = vsel %vm1532, %v3075, -inf
        %3112 = vmax.xlane.f32.xlu0 %v3111
        %v3113 = vpop.xlane.xlu0 %3112
        %v3114 = vsel %vm1532, %v3076, -inf
        %3115 = vmax.xlane.f32.xlu0 %v3114
        %v3116 = vpop.xlane.xlu0 %3115
        %v3117 = vsel %vm1532, %v3077, -inf
        %3118 = vmax.xlane.f32.xlu0 %v3117
        %v3119 = vpop.xlane.xlu0 %3118
        %v3120 = vsel %vm1532, %v3078, -inf
        %3121 = vmax.xlane.f32.xlu0 %v3120
        %v3122 = vpop.xlane.xlu0 %3121
        %v3123 = vsel %vm1532, %v3079, -inf
        %3124 = vmax.xlane.f32.xlu0 %v3123
        %v3125 = vpop.xlane.xlu0 %3124
        %v3126 = vsel %vm1532, %v3080, -inf
        %3127 = vmax.xlane.f32.xlu0 %v3126
        %v3128 = vpop.xlane.xlu0 %3127
        %v3129 = vsub.f32 %v3065, %v3083
        %v3130 = vsub.f32 %v3066, %v3086
        %v3131 = vsub.f32 %v3067, %v3089
        %v3132 = vsub.f32 %v3068, %v3092
        %v3133 = vsub.f32 %v3069, %v3095
        %v3134 = vsub.f32 %v3070, %v3098
        %v3135 = vsub.f32 %v3071, %v3101
        %v3136 = vsub.f32 %v3072, %v3104
        %v3137 = vsub.f32 %v3073, %v3107
        %v3138 = vsub.f32 %v3074, %v3110
        %v3139 = vsub.f32 %v3075, %v3113
        %v3140 = vsub.f32 %v3076, %v3116
        %v3141 = vsub.f32 %v3077, %v3119
        %v3142 = vsub.f32 %v3078, %v3122
        %v3143 = vsub.f32 %v3079, %v3125
        %v3144 = vsub.f32 %v3080, %v3128
        %v3145 = vmul.f32 %v3129, 1.442695
        %v3146 = vpow.pop %v3145
        %v3147 = vmul.f32 %v3130, 1.442695
        %v3148 = vpow.pop %v3147
        %v3149 = vmul.f32 %v3131, 1.442695
        %v3150 = vpow.pop %v3149
        %v3151 = vmul.f32 %v3132, 1.442695
        %v3152 = vpow.pop %v3151
        %v3153 = vmul.f32 %v3133, 1.442695
        %v3154 = vpow.pop %v3153
        %v3155 = vmul.f32 %v3134, 1.442695
        %v3156 = vpow.pop %v3155
        %v3157 = vmul.f32 %v3135, 1.442695
        %v3158 = vpow.pop %v3157
        %v3159 = vmul.f32 %v3136, 1.442695
        %v3160 = vpow.pop %v3159
        %v3161 = vmul.f32 %v3137, 1.442695
        %v3162 = vpow.pop %v3161
        %v3163 = vmul.f32 %v3138, 1.442695
        %v3164 = vpow.pop %v3163
        %v3165 = vmul.f32 %v3139, 1.442695
        %v3166 = vpow.pop %v3165
        %v3167 = vmul.f32 %v3140, 1.442695
        %v3168 = vpow.pop %v3167
        %v3169 = vmul.f32 %v3141, 1.442695
        %v3170 = vpow.pop %v3169
        %v3171 = vmul.f32 %v3142, 1.442695
        %v3172 = vpow.pop %v3171
        %v3173 = vmul.f32 %v3143, 1.442695
        %v3174 = vpow.pop %v3173
        %v3175 = vmul.f32 %v3144, 1.442695
        %v3176 = vpow.pop %v3175
        %v3177 = vsel %vm1532, %v3146, 0.0
        %3178 = vadd.xlane.f32.xlu0 %v3177
        %v3179 = vpop.xlane.xlu0 %3178
        %v3180 = vsel %vm1532, %v3148, 0.0
        %3181 = vadd.xlane.f32.xlu0 %v3180
        %v3182 = vpop.xlane.xlu0 %3181
        %v3183 = vsel %vm1532, %v3150, 0.0
        %3184 = vadd.xlane.f32.xlu0 %v3183
        %v3185 = vpop.xlane.xlu0 %3184
        %v3186 = vsel %vm1532, %v3152, 0.0
        %3187 = vadd.xlane.f32.xlu0 %v3186
        %v3188 = vpop.xlane.xlu0 %3187
        %v3189 = vsel %vm1532, %v3154, 0.0
        %3190 = vadd.xlane.f32.xlu0 %v3189
        %v3191 = vpop.xlane.xlu0 %3190
        %v3192 = vsel %vm1532, %v3156, 0.0
        %3193 = vadd.xlane.f32.xlu0 %v3192
        %v3194 = vpop.xlane.xlu0 %3193
        %v3195 = vsel %vm1532, %v3158, 0.0
        %3196 = vadd.xlane.f32.xlu0 %v3195
        %v3197 = vpop.xlane.xlu0 %3196
        %v3198 = vsel %vm1532, %v3160, 0.0
        %3199 = vadd.xlane.f32.xlu0 %v3198
        %v3200 = vpop.xlane.xlu0 %3199
        %v3201 = vsel %vm1532, %v3162, 0.0
        %3202 = vadd.xlane.f32.xlu0 %v3201
        %v3203 = vpop.xlane.xlu0 %3202
        %v3204 = vsel %vm1532, %v3164, 0.0
        %3205 = vadd.xlane.f32.xlu0 %v3204
        %v3206 = vpop.xlane.xlu0 %3205
        %v3207 = vsel %vm1532, %v3166, 0.0
        %3208 = vadd.xlane.f32.xlu0 %v3207
        %v3209 = vpop.xlane.xlu0 %3208
        %v3210 = vsel %vm1532, %v3168, 0.0
        %3211 = vadd.xlane.f32.xlu0 %v3210
        %v3212 = vpop.xlane.xlu0 %3211
        %v3213 = vsel %vm1532, %v3170, 0.0
        %3214 = vadd.xlane.f32.xlu0 %v3213
        %v3215 = vpop.xlane.xlu0 %3214
        %v3216 = vsel %vm1532, %v3172, 0.0
        %3217 = vadd.xlane.f32.xlu0 %v3216
        %v3218 = vpop.xlane.xlu0 %3217
        %v3219 = vsel %vm1532, %v3174, 0.0
        %3220 = vadd.xlane.f32.xlu0 %v3219
        %v3221 = vpop.xlane.xlu0 %3220
        %v3222 = vsel %vm1532, %v3176, 0.0
        %3223 = vadd.xlane.f32.xlu0 %v3222
        %v3224 = vpop.xlane.xlu0 %3223
        %v3225 = vrcp.pop %v3179
        %v3226 = vrcp.pop %v3182
        %v3227 = vrcp.pop %v3185
        %v3228 = vrcp.pop %v3188
        %v3229 = vrcp.pop %v3191
        %v3230 = vrcp.pop %v3194
        %v3231 = vrcp.pop %v3197
        %v3232 = vrcp.pop %v3200
        %v3233 = vrcp.pop %v3203
        %v3234 = vrcp.pop %v3206
        %v3235 = vrcp.pop %v3209
        %v3236 = vrcp.pop %v3212
        %v3237 = vrcp.pop %v3215
        %v3238 = vrcp.pop %v3218
        %v3239 = vrcp.pop %v3221
        %v3240 = vrcp.pop %v3224
        %v3241 = vmul.f32 %v3146, %v3225
        %v3242 = vmul.f32 %v3148, %v3226
        %v3243 = vmul.f32 %v3150, %v3227
        %v3244 = vmul.f32 %v3152, %v3228
        %v3245 = vmul.f32 %v3154, %v3229
        %v3246 = vmul.f32 %v3156, %v3230
        %v3247 = vmul.f32 %v3158, %v3231
        %v3248 = vmul.f32 %v3160, %v3232
        %v3249 = vmul.f32 %v3162, %v3233
        %v3250 = vmul.f32 %v3164, %v3234
        %v3251 = vmul.f32 %v3166, %v3235
        %v3252 = vmul.f32 %v3168, %v3236
        %v3253 = vmul.f32 %v3170, %v3237
        %v3254 = vmul.f32 %v3172, %v3238
        %v3255 = vmul.f32 %v3174, %v3239
        %v3256 = vmul.f32 %v3176, %v3240
        %v3257 = vpack.c.bf16 %v3241, %v3241
        %v3258 = vpack.c.bf16 %v3242, %v3242
        %v3259 = vpack.c.bf16 %v3243, %v3243
        %v3260 = vpack.c.bf16 %v3244, %v3244
        %v3261 = vpack.c.bf16 %v3245, %v3245
        %v3262 = vpack.c.bf16 %v3246, %v3246
        %v3263 = vpack.c.bf16 %v3247, %v3247
        %v3264 = vpack.c.bf16 %v3248, %v3248
        %v3265 = vpack.c.bf16 %v3249, %v3249
        %v3266 = vpack.c.bf16 %v3250, %v3250
        %v3267 = vpack.c.bf16 %v3251, %v3251
        %v3268 = vpack.c.bf16 %v3252, %v3252
        %v3269 = vpack.c.bf16 %v3253, %v3253
        %v3270 = vpack.c.bf16 %v3254, %v3254
        %v3271 = vpack.c.bf16 %v3255, %v3255
        %v3272 = vpack.c.bf16 %v3256, %v3256
        %v3281 = vunpack.c.l.b16 %v3257
        %v3282 = vunpack.c.l.b16 %v3258
        %v3283 = vunpack.c.l.b16 %v3259
        %v3284 = vunpack.c.l.b16 %v3260
        %v3285 = vunpack.c.l.b16 %v3261
        %v3286 = vunpack.c.l.b16 %v3262
        %v3287 = vunpack.c.l.b16 %v3263
        %v3288 = vunpack.c.l.b16 %v3264
        %v3289 = vpack.c.b16 %v3282, %v3281
        %v3290 = vpack.c.b16 %v3284, %v3283
        %v3291 = vpack.c.b16 %v3286, %v3285
        %v3292 = vpack.c.b16 %v3288, %v3287
        %3293 = vrot.lane.b32.xlu0 %v1761, 32
        %v3294 = vpop.permute.xlu0 %3293
        %3295 = vrot.lane.b32.xlu0 %v1762, 32
        %v3296 = vpop.permute.xlu0 %3295
        %3297 = vrot.lane.b32.xlu0 %v1763, 32
        %v3298 = vpop.permute.xlu0 %3297
        %3299 = vrot.lane.b32.xlu0 %v1764, 32
        %v3300 = vpop.permute.xlu0 %3299
        %v3306 = vsel %vm1532, %v3289, 0
        %v3309 = vsel %vm1532, %v3290, 0
        %v3312 = vsel %vm1532, %v3291, 0
        %v3315 = vsel %vm1532, %v3292, 0
        %3317 = vmatpush.bf16.msra.mxu0 0
        %3318 = vmatpush.bf16.msra.mxu0 0
        %3319 = vmatpush.bf16.msra.mxu0 0
        %3320 = vmatpush.bf16.msra.mxu0 0
        %3321 = vmatpush.bf16.msra.mxu0 %v3300
        %3322 = vmatpush.bf16.msra.mxu0 %v3298
        %3323 = vmatpush.bf16.msra.mxu0 %v3296
        %3324 = vmatpush.bf16.msra.mxu0 %v3294
        %3325 = vmatmul.bf16.gmra.mxu0 %v3306
        %v3326 = vpop.f32.mrf.mxu0
        %v3327 = vadd.f32 0.0, %v3326
        %v3328 = vpop.f32.mrf.mxu0
        %v3329 = vadd.f32 0.0, %v3328
        %3330 = vmatmul.bf16.gmra.mxu0 %v3309
        %v3331 = vpop.f32.mrf.mxu0
        %v3332 = vadd.f32 0.0, %v3331
        %v3333 = vpop.f32.mrf.mxu0
        %v3334 = vadd.f32 0.0, %v3333
        %3335 = vmatmul.bf16.gmra.mxu0 %v3312
        %v3336 = vpop.f32.mrf.mxu0
        %v3337 = vadd.f32 0.0, %v3336
        %v3338 = vpop.f32.mrf.mxu0
        %v3339 = vadd.f32 0.0, %v3338
        %3340 = vmatmul.bf16.gmra.mxu0 %v3315
        %v3341 = vpop.f32.mrf.mxu0
        %v3342 = vadd.f32 0.0, %v3341
        %v3343 = vpop.f32.mrf.mxu0
        %v3344 = vadd.f32 0.0, %v3343
        %3345 = vdwg.mxu0
        %v3354 = vunpack.c.l.b16 %v3265
        %v3355 = vunpack.c.l.b16 %v3266
        %v3356 = vunpack.c.l.b16 %v3267
        %v3357 = vunpack.c.l.b16 %v3268
        %v3358 = vunpack.c.l.b16 %v3269
        %v3359 = vunpack.c.l.b16 %v3270
        %v3360 = vunpack.c.l.b16 %v3271
        %v3361 = vunpack.c.l.b16 %v3272
        %v3362 = vpack.c.b16 %v3355, %v3354
        %v3363 = vpack.c.b16 %v3357, %v3356
        %v3364 = vpack.c.b16 %v3359, %v3358
        %v3365 = vpack.c.b16 %v3361, %v3360
        %3366 = vrot.lane.b32.xlu0 %v1846, 32
        %v3367 = vpop.permute.xlu0 %3366
        %3368 = vrot.lane.b32.xlu0 %v1847, 32
        %v3369 = vpop.permute.xlu0 %3368
        %3370 = vrot.lane.b32.xlu0 %v1848, 32
        %v3371 = vpop.permute.xlu0 %3370
        %3372 = vrot.lane.b32.xlu0 %v1849, 32
        %v3373 = vpop.permute.xlu0 %3372
        %v3379 = vsel %vm1532, %v3362, 0
        %v3382 = vsel %vm1532, %v3363, 0
        %v3385 = vsel %vm1532, %v3364, 0
        %v3388 = vsel %vm1532, %v3365, 0
        %3390 = vmatpush.bf16.msra.mxu0 0
        %3391 = vmatpush.bf16.msra.mxu0 0
        %3392 = vmatpush.bf16.msra.mxu0 0
        %3393 = vmatpush.bf16.msra.mxu0 0
        %3394 = vmatpush.bf16.msra.mxu0 %v3373
        %3395 = vmatpush.bf16.msra.mxu0 %v3371
        %3396 = vmatpush.bf16.msra.mxu0 %v3369
        %3397 = vmatpush.bf16.msra.mxu0 %v3367
        %3398 = vmatmul.bf16.gmra.mxu0 %v3379
        %v3399 = vpop.f32.mrf.mxu0
        %v3400 = vadd.f32 0.0, %v3399
        %v3401 = vpop.f32.mrf.mxu0
        %v3402 = vadd.f32 0.0, %v3401
        %3403 = vmatmul.bf16.gmra.mxu0 %v3382
        %v3404 = vpop.f32.mrf.mxu0
        %v3405 = vadd.f32 0.0, %v3404
        %v3406 = vpop.f32.mrf.mxu0
        %v3407 = vadd.f32 0.0, %v3406
        %3408 = vmatmul.bf16.gmra.mxu0 %v3385
        %v3409 = vpop.f32.mrf.mxu0
        %v3410 = vadd.f32 0.0, %v3409
        %v3411 = vpop.f32.mrf.mxu0
        %v3412 = vadd.f32 0.0, %v3411
        %3413 = vmatmul.bf16.gmra.mxu0 %v3388
        %v3414 = vpop.f32.mrf.mxu0
        %v3415 = vadd.f32 0.0, %v3414
        %v3416 = vpop.f32.mrf.mxu0
        %v3417 = vadd.f32 0.0, %v3416
        %3418 = vdwg.mxu0
        %v3419 = vpack.c.bf16 %v3327, %v3327
        %v3420 = vpack.c.bf16 %v3329, %v3329
        %v3421 = vpack.c.bf16 %v3332, %v3332
        %v3422 = vpack.c.bf16 %v3334, %v3334
        %v3423 = vpack.c.bf16 %v3337, %v3337
        %v3424 = vpack.c.bf16 %v3339, %v3339
        %v3425 = vpack.c.bf16 %v3342, %v3342
        %v3426 = vpack.c.bf16 %v3344, %v3344
        %v3427 = vpack.c.bf16 %v3400, %v3400
        %v3428 = vpack.c.bf16 %v3402, %v3402
        %v3429 = vpack.c.bf16 %v3405, %v3405
        %v3430 = vpack.c.bf16 %v3407, %v3407
        %v3431 = vpack.c.bf16 %v3410, %v3410
        %v3432 = vpack.c.bf16 %v3412, %v3412
        %v3433 = vpack.c.bf16 %v3415, %v3415
        %v3434 = vpack.c.bf16 %v3417, %v3417
        %v3451 = vunpack.c.l.b16 %v1895
        %v3452 = vunpack.c.l.b16 %v1896
        %v3453 = vunpack.c.l.b16 %v1897
        %v3454 = vunpack.c.l.b16 %v1898
        %v3455 = vunpack.c.l.b16 %v1899
        %v3456 = vunpack.c.l.b16 %v1900
        %v3457 = vunpack.c.l.b16 %v1901
        %v3458 = vunpack.c.l.b16 %v1902
        %v3459 = vunpack.c.l.b16 %v1903
        %v3460 = vunpack.c.l.b16 %v1904
        %v3461 = vunpack.c.l.b16 %v1905
        %v3462 = vunpack.c.l.b16 %v1906
        %v3463 = vunpack.c.l.b16 %v1907
        %v3464 = vunpack.c.l.b16 %v1908
        %v3465 = vunpack.c.l.b16 %v1909
        %v3466 = vunpack.c.l.b16 %v1910
        %v3467 = vpack.c.b16 %v3452, %v3451
        %v3468 = vpack.c.b16 %v3454, %v3453
        %v3469 = vpack.c.b16 %v3456, %v3455
        %v3470 = vpack.c.b16 %v3458, %v3457
        %v3471 = vpack.c.b16 %v3460, %v3459
        %v3472 = vpack.c.b16 %v3462, %v3461
        %v3473 = vpack.c.b16 %v3464, %v3463
        %v3474 = vpack.c.b16 %v3466, %v3465
        %v3491 = vunpack.c.l.b16 %v2403
        %v3492 = vunpack.c.l.b16 %v2404
        %v3493 = vunpack.c.l.b16 %v2405
        %v3494 = vunpack.c.l.b16 %v2406
        %v3495 = vunpack.c.l.b16 %v2407
        %v3496 = vunpack.c.l.b16 %v2408
        %v3497 = vunpack.c.l.b16 %v2409
        %v3498 = vunpack.c.l.b16 %v2410
        %v3499 = vunpack.c.l.b16 %v2411
        %v3500 = vunpack.c.l.b16 %v2412
        %v3501 = vunpack.c.l.b16 %v2413
        %v3502 = vunpack.c.l.b16 %v2414
        %v3503 = vunpack.c.l.b16 %v2415
        %v3504 = vunpack.c.l.b16 %v2416
        %v3505 = vunpack.c.l.b16 %v2417
        %v3506 = vunpack.c.l.b16 %v2418
        %v3507 = vpack.c.b16 %v3492, %v3491
        %v3508 = vpack.c.b16 %v3494, %v3493
        %v3509 = vpack.c.b16 %v3496, %v3495
        %v3510 = vpack.c.b16 %v3498, %v3497
        %v3511 = vpack.c.b16 %v3500, %v3499
        %v3512 = vpack.c.b16 %v3502, %v3501
        %v3513 = vpack.c.b16 %v3504, %v3503
        %v3514 = vpack.c.b16 %v3506, %v3505
        %3515 = vrot.lane.b32.xlu0 %v3507, 32
        %v3516 = vpop.permute.xlu0 %3515
        %3517 = vrot.lane.b32.xlu0 %v3508, 32
        %v3518 = vpop.permute.xlu0 %3517
        %3519 = vrot.lane.b32.xlu0 %v3509, 32
        %v3520 = vpop.permute.xlu0 %3519
        %3521 = vrot.lane.b32.xlu0 %v3510, 32
        %v3522 = vpop.permute.xlu0 %3521
        %3523 = vrot.lane.b32.xlu0 %v3511, 32
        %v3524 = vpop.permute.xlu0 %3523
        %3525 = vrot.lane.b32.xlu0 %v3512, 32
        %v3526 = vpop.permute.xlu0 %3525
        %3527 = vrot.lane.b32.xlu0 %v3513, 32
        %v3528 = vpop.permute.xlu0 %3527
        %3529 = vrot.lane.b32.xlu0 %v3514, 32
        %v3530 = vpop.permute.xlu0 %3529
        %v3547 = vunpack.c.l.b16 %v2911
        %v3548 = vunpack.c.l.b16 %v2912
        %v3549 = vunpack.c.l.b16 %v2913
        %v3550 = vunpack.c.l.b16 %v2914
        %v3551 = vunpack.c.l.b16 %v2915
        %v3552 = vunpack.c.l.b16 %v2916
        %v3553 = vunpack.c.l.b16 %v2917
        %v3554 = vunpack.c.l.b16 %v2918
        %v3555 = vunpack.c.l.b16 %v2919
        %v3556 = vunpack.c.l.b16 %v2920
        %v3557 = vunpack.c.l.b16 %v2921
        %v3558 = vunpack.c.l.b16 %v2922
        %v3559 = vunpack.c.l.b16 %v2923
        %v3560 = vunpack.c.l.b16 %v2924
        %v3561 = vunpack.c.l.b16 %v2925
        %v3562 = vunpack.c.l.b16 %v2926
        %v3563 = vpack.c.b16 %v3548, %v3547
        %v3564 = vpack.c.b16 %v3550, %v3549
        %v3565 = vpack.c.b16 %v3552, %v3551
        %v3566 = vpack.c.b16 %v3554, %v3553
        %v3567 = vpack.c.b16 %v3556, %v3555
        %v3568 = vpack.c.b16 %v3558, %v3557
        %v3569 = vpack.c.b16 %v3560, %v3559
        %v3570 = vpack.c.b16 %v3562, %v3561
        %3571 = vrot.lane.b32.xlu0 %v3563, 64
        %v3572 = vpop.permute.xlu0 %3571
        %3573 = vrot.lane.b32.xlu0 %v3564, 64
        %v3574 = vpop.permute.xlu0 %3573
        %3575 = vrot.lane.b32.xlu0 %v3565, 64
        %v3576 = vpop.permute.xlu0 %3575
        %3577 = vrot.lane.b32.xlu0 %v3566, 64
        %v3578 = vpop.permute.xlu0 %3577
        %3579 = vrot.lane.b32.xlu0 %v3567, 64
        %v3580 = vpop.permute.xlu0 %3579
        %3581 = vrot.lane.b32.xlu0 %v3568, 64
        %v3582 = vpop.permute.xlu0 %3581
        %3583 = vrot.lane.b32.xlu0 %v3569, 64
        %v3584 = vpop.permute.xlu0 %3583
        %3585 = vrot.lane.b32.xlu0 %v3570, 64
        %v3586 = vpop.permute.xlu0 %3585
        %v3603 = vunpack.c.l.b16 %v3419
        %v3604 = vunpack.c.l.b16 %v3420
        %v3605 = vunpack.c.l.b16 %v3421
        %v3606 = vunpack.c.l.b16 %v3422
        %v3607 = vunpack.c.l.b16 %v3423
        %v3608 = vunpack.c.l.b16 %v3424
        %v3609 = vunpack.c.l.b16 %v3425
        %v3610 = vunpack.c.l.b16 %v3426
        %v3611 = vunpack.c.l.b16 %v3427
        %v3612 = vunpack.c.l.b16 %v3428
        %v3613 = vunpack.c.l.b16 %v3429
        %v3614 = vunpack.c.l.b16 %v3430
        %v3615 = vunpack.c.l.b16 %v3431
        %v3616 = vunpack.c.l.b16 %v3432
        %v3617 = vunpack.c.l.b16 %v3433
        %v3618 = vunpack.c.l.b16 %v3434
        %v3619 = vpack.c.b16 %v3604, %v3603
        %v3620 = vpack.c.b16 %v3606, %v3605
        %v3621 = vpack.c.b16 %v3608, %v3607
        %v3622 = vpack.c.b16 %v3610, %v3609
        %v3623 = vpack.c.b16 %v3612, %v3611
        %v3624 = vpack.c.b16 %v3614, %v3613
        %v3625 = vpack.c.b16 %v3616, %v3615
        %v3626 = vpack.c.b16 %v3618, %v3617
        %3627 = vrot.lane.b32.xlu0 %v3619, 96
        %v3628 = vpop.permute.xlu0 %3627
        %3629 = vrot.lane.b32.xlu0 %v3620, 96
        %v3630 = vpop.permute.xlu0 %3629
        %3631 = vrot.lane.b32.xlu0 %v3621, 96
        %v3632 = vpop.permute.xlu0 %3631
        %3633 = vrot.lane.b32.xlu0 %v3622, 96
        %v3634 = vpop.permute.xlu0 %3633
        %3635 = vrot.lane.b32.xlu0 %v3623, 96
        %v3636 = vpop.permute.xlu0 %3635
        %3637 = vrot.lane.b32.xlu0 %v3624, 96
        %v3638 = vpop.permute.xlu0 %3637
        %3639 = vrot.lane.b32.xlu0 %v3625, 96
        %v3640 = vpop.permute.xlu0 %3639
        %3641 = vrot.lane.b32.xlu0 %v3626, 96
        %v3642 = vpop.permute.xlu0 %3641
        %v3645 = vsel %vm1369, %v3467, %v3516
        %v3648 = vsel %vm1369, %v3468, %v3518
        %v3651 = vsel %vm1369, %v3469, %v3520
        %v3654 = vsel %vm1369, %v3470, %v3522
        %v3657 = vsel %vm1369, %v3471, %v3524
        %v3660 = vsel %vm1369, %v3472, %v3526
        %v3663 = vsel %vm1369, %v3473, %v3528
        %v3666 = vsel %vm1369, %v3474, %v3530
        %v3668 = vsel %vm1532, %v3645, %v3572
        %v3670 = vsel %vm1532, %v3648, %v3574
        %v3672 = vsel %vm1532, %v3651, %v3576
        %v3674 = vsel %vm1532, %v3654, %v3578
        %v3676 = vsel %vm1532, %v3657, %v3580
        %v3678 = vsel %vm1532, %v3660, %v3582
        %v3680 = vsel %vm1532, %v3663, %v3584
        %v3682 = vsel %vm1532, %v3666, %v3586
        %vm3683 = vcmask 785408
        %v3685 = vsel %vm3683, %v3668, %v3628
        %v3688 = vsel %vm3683, %v3670, %v3630
        %v3691 = vsel %vm3683, %v3672, %v3632
        %v3694 = vsel %vm3683, %v3674, %v3634
        %v3697 = vsel %vm3683, %v3676, %v3636
        %v3700 = vsel %vm3683, %v3678, %v3638
        %v3703 = vsel %vm3683, %v3680, %v3640
        %v3706 = vsel %vm3683, %v3682, %v3642
        %v3708 = vld [vmem:[#allocation7] sm:$0xf]
        %v3709 = vld [vmem:[#allocation7 + $0x4] sm:$0xf]
        %v3710 = vld [vmem:[#allocation7 + $0x8] sm:$0xf]
        %v3711 = vld [vmem:[#allocation7 + $0xc] sm:$0xf]
        %v3712 = vld [vmem:[#allocation7 + $0x10] sm:$0xf]
        %v3713 = vld [vmem:[#allocation7 + $0x14] sm:$0xf]
        %v3714 = vld [vmem:[#allocation7 + $0x18] sm:$0xf]
        %v3715 = vld [vmem:[#allocation7 + $0x1c] sm:$0xf]
        %v3716 = vld [vmem:[#allocation7 + $0x20] sm:$0xf]
        %v3717 = vld [vmem:[#allocation7 + $0x24] sm:$0xf]
        %v3718 = vld [vmem:[#allocation7 + $0x28] sm:$0xf]
        %v3719 = vld [vmem:[#allocation7 + $0x2c] sm:$0xf]
        %v3720 = vld [vmem:[#allocation7 + $0x30] sm:$0xf]
        %v3721 = vld [vmem:[#allocation7 + $0x34] sm:$0xf]
        %v3722 = vld [vmem:[#allocation7 + $0x38] sm:$0xf]
        %v3723 = vld [vmem:[#allocation7 + $0x3c] sm:$0xf]
        %v3724 = vld [vmem:[#allocation8] sm:$0x1]
        %v3726 = vperm.slane %v3724, 0
        %v3744 = vunpack.c.l.b16 %v3708
        %v3745 = vunpack.c.l.b16 %v3709
        %v3746 = vunpack.c.l.b16 %v3710
        %v3747 = vunpack.c.l.b16 %v3711
        %v3748 = vunpack.c.l.b16 %v3712
        %v3749 = vunpack.c.l.b16 %v3713
        %v3750 = vunpack.c.l.b16 %v3714
        %v3751 = vunpack.c.l.b16 %v3715
        %v3752 = vunpack.c.l.b16 %v3716
        %v3753 = vunpack.c.l.b16 %v3717
        %v3754 = vunpack.c.l.b16 %v3718
        %v3755 = vunpack.c.l.b16 %v3719
        %v3756 = vunpack.c.l.b16 %v3720
        %v3757 = vunpack.c.l.b16 %v3721
        %v3758 = vunpack.c.l.b16 %v3722
        %v3759 = vunpack.c.l.b16 %v3723
        %v3760 = vpack.c.b16 %v3745, %v3744
        %v3761 = vpack.c.b16 %v3747, %v3746
        %v3762 = vpack.c.b16 %v3749, %v3748
        %v3763 = vpack.c.b16 %v3751, %v3750
        %v3764 = vpack.c.b16 %v3753, %v3752
        %v3765 = vpack.c.b16 %v3755, %v3754
        %v3766 = vpack.c.b16 %v3757, %v3756
        %v3767 = vpack.c.b16 %v3759, %v3758
        %3776 = vmatpush.bf16.msra.mxu0 %v3767
        %3777 = vmatpush.bf16.msra.mxu0 %v3766
        %3778 = vmatpush.bf16.msra.mxu0 %v3765
        %3779 = vmatpush.bf16.msra.mxu0 %v3764
        %3780 = vmatpush.bf16.msra.mxu0 %v3763
        %3781 = vmatpush.bf16.msra.mxu0 %v3762
        %3782 = vmatpush.bf16.msra.mxu0 %v3761
        %3783 = vmatpush.bf16.msra.mxu0 %v3760
        %3784 = vmatmul.bf16.gmra.mxu0 %v3685
        %v3785 = vpop.f32.mrf.mxu0
        %v3786 = vadd.f32 %v3726, %v3785
        %v3787 = vpop.f32.mrf.mxu0
        %v3788 = vadd.f32 %v3726, %v3787
        %3789 = vmatmul.bf16.gmra.mxu0 %v3688
        %v3790 = vpop.f32.mrf.mxu0
        %v3791 = vadd.f32 %v3726, %v3790
        %v3792 = vpop.f32.mrf.mxu0
        %v3793 = vadd.f32 %v3726, %v3792
        %3794 = vmatmul.bf16.gmra.mxu0 %v3691
        %v3795 = vpop.f32.mrf.mxu0
        %v3796 = vadd.f32 %v3726, %v3795
        %v3797 = vpop.f32.mrf.mxu0
        %v3798 = vadd.f32 %v3726, %v3797
        %3799 = vmatmul.bf16.gmra.mxu0 %v3694
        %v3800 = vpop.f32.mrf.mxu0
        %v3801 = vadd.f32 %v3726, %v3800
        %v3802 = vpop.f32.mrf.mxu0
        %v3803 = vadd.f32 %v3726, %v3802
        %3804 = vmatmul.bf16.gmra.mxu0 %v3697
        %v3805 = vpop.f32.mrf.mxu0
        %v3806 = vadd.f32 %v3726, %v3805
        %v3807 = vpop.f32.mrf.mxu0
        %v3808 = vadd.f32 %v3726, %v3807
        %3809 = vmatmul.bf16.gmra.mxu0 %v3700
        %v3810 = vpop.f32.mrf.mxu0
        %v3811 = vadd.f32 %v3726, %v3810
        %v3812 = vpop.f32.mrf.mxu0
        %v3813 = vadd.f32 %v3726, %v3812
        %3814 = vmatmul.bf16.gmra.mxu0 %v3703
        %v3815 = vpop.f32.mrf.mxu0
        %v3816 = vadd.f32 %v3726, %v3815
        %v3817 = vpop.f32.mrf.mxu0
        %v3818 = vadd.f32 %v3726, %v3817
        %3819 = vmatmul.bf16.gmra.mxu0 %v3706
        %v3820 = vpop.f32.mrf.mxu0
        %v3821 = vadd.f32 %v3726, %v3820
        %v3822 = vpop.f32.mrf.mxu0
        %v3823 = vadd.f32 %v3726, %v3822
        %3824 = vdwg.mxu0
        %v3825 = vadd.f32 %v548, %v3786
        %v3826 = vadd.f32 %v549, %v3788
        %v3827 = vadd.f32 %v550, %v3791
        %v3828 = vadd.f32 %v551, %v3793
        %v3829 = vadd.f32 %v552, %v3796
        %v3830 = vadd.f32 %v553, %v3798
        %v3831 = vadd.f32 %v554, %v3801
        %v3832 = vadd.f32 %v555, %v3803
        %v3833 = vadd.f32 %v556, %v3806
        %v3834 = vadd.f32 %v557, %v3808
        %v3835 = vadd.f32 %v558, %v3811
        %v3836 = vadd.f32 %v559, %v3813
        %v3837 = vadd.f32 %v560, %v3816
        %v3838 = vadd.f32 %v561, %v3818
        %v3839 = vadd.f32 %v562, %v3821
        %v3840 = vadd.f32 %v563, %v3823
        %v3841 = vld [vmem:[%s6] sm:$0x1]
        %v3842 = vld [vmem:[%s7] sm:$0x1]
        %3843 = vadd.xlane.f32.xlu0 %v3825
        %v3844 = vpop.xlane.xlu0 %3843
        %3845 = vadd.xlane.f32.xlu0 %v3826
        %v3846 = vpop.xlane.xlu0 %3845
        %3847 = vadd.xlane.f32.xlu0 %v3827
        %v3848 = vpop.xlane.xlu0 %3847
        %3849 = vadd.xlane.f32.xlu0 %v3828
        %v3850 = vpop.xlane.xlu0 %3849
        %3851 = vadd.xlane.f32.xlu0 %v3829
        %v3852 = vpop.xlane.xlu0 %3851
        %3853 = vadd.xlane.f32.xlu0 %v3830
        %v3854 = vpop.xlane.xlu0 %3853
        %3855 = vadd.xlane.f32.xlu0 %v3831
        %v3856 = vpop.xlane.xlu0 %3855
        %3857 = vadd.xlane.f32.xlu0 %v3832
        %v3858 = vpop.xlane.xlu0 %3857
        %3859 = vadd.xlane.f32.xlu0 %v3833
        %v3860 = vpop.xlane.xlu0 %3859
        %3861 = vadd.xlane.f32.xlu0 %v3834
        %v3862 = vpop.xlane.xlu0 %3861
        %3863 = vadd.xlane.f32.xlu0 %v3835
        %v3864 = vpop.xlane.xlu0 %3863
        %3865 = vadd.xlane.f32.xlu0 %v3836
        %v3866 = vpop.xlane.xlu0 %3865
        %3867 = vadd.xlane.f32.xlu0 %v3837
        %v3868 = vpop.xlane.xlu0 %3867
        %3869 = vadd.xlane.f32.xlu0 %v3838
        %v3870 = vpop.xlane.xlu0 %3869
        %3871 = vadd.xlane.f32.xlu0 %v3839
        %v3872 = vpop.xlane.xlu0 %3871
        %3873 = vadd.xlane.f32.xlu0 %v3840
        %v3874 = vpop.xlane.xlu0 %3873
        %v3875 = vmul.f32 %v3844, %v604
        %v3876 = vmul.f32 %v3846, %v604
        %v3877 = vmul.f32 %v3848, %v604
        %v3878 = vmul.f32 %v3850, %v604
        %v3879 = vmul.f32 %v3852, %v604
        %v3880 = vmul.f32 %v3854, %v604
        %v3881 = vmul.f32 %v3856, %v604
        %v3882 = vmul.f32 %v3858, %v604
        %v3883 = vmul.f32 %v3860, %v604
        %v3884 = vmul.f32 %v3862, %v604
        %v3885 = vmul.f32 %v3864, %v604
        %v3886 = vmul.f32 %v3866, %v604
        %v3887 = vmul.f32 %v3868, %v604
        %v3888 = vmul.f32 %v3870, %v604
        %v3889 = vmul.f32 %v3872, %v604
        %v3890 = vmul.f32 %v3874, %v604
        %v3891 = vsub.f32 %v3825, %v3875
        %v3892 = vsub.f32 %v3826, %v3876
        %v3893 = vsub.f32 %v3827, %v3877
        %v3894 = vsub.f32 %v3828, %v3878
        %v3895 = vsub.f32 %v3829, %v3879
        %v3896 = vsub.f32 %v3830, %v3880
        %v3897 = vsub.f32 %v3831, %v3881
        %v3898 = vsub.f32 %v3832, %v3882
        %v3899 = vsub.f32 %v3833, %v3883
        %v3900 = vsub.f32 %v3834, %v3884
        %v3901 = vsub.f32 %v3835, %v3885
        %v3902 = vsub.f32 %v3836, %v3886
        %v3903 = vsub.f32 %v3837, %v3887
        %v3904 = vsub.f32 %v3838, %v3888
        %v3905 = vsub.f32 %v3839, %v3889
        %v3906 = vsub.f32 %v3840, %v3890
        %v3907 = vmul.f32 %v3891, %v3891
        %v3908 = vmul.f32 %v3892, %v3892
        %v3909 = vmul.f32 %v3893, %v3893
        %v3910 = vmul.f32 %v3894, %v3894
        %v3911 = vmul.f32 %v3895, %v3895
        %v3912 = vmul.f32 %v3896, %v3896
        %v3913 = vmul.f32 %v3897, %v3897
        %v3914 = vmul.f32 %v3898, %v3898
        %v3915 = vmul.f32 %v3899, %v3899
        %v3916 = vmul.f32 %v3900, %v3900
        %v3917 = vmul.f32 %v3901, %v3901
        %v3918 = vmul.f32 %v3902, %v3902
        %v3919 = vmul.f32 %v3903, %v3903
        %v3920 = vmul.f32 %v3904, %v3904
        %v3921 = vmul.f32 %v3905, %v3905
        %v3922 = vmul.f32 %v3906, %v3906
        %3923 = vadd.xlane.f32.xlu0 %v3907
        %v3924 = vpop.xlane.xlu0 %3923
        %3925 = vadd.xlane.f32.xlu0 %v3908
        %v3926 = vpop.xlane.xlu0 %3925
        %3927 = vadd.xlane.f32.xlu0 %v3909
        %v3928 = vpop.xlane.xlu0 %3927
        %3929 = vadd.xlane.f32.xlu0 %v3910
        %v3930 = vpop.xlane.xlu0 %3929
        %3931 = vadd.xlane.f32.xlu0 %v3911
        %v3932 = vpop.xlane.xlu0 %3931
        %3933 = vadd.xlane.f32.xlu0 %v3912
        %v3934 = vpop.xlane.xlu0 %3933
        %3935 = vadd.xlane.f32.xlu0 %v3913
        %v3936 = vpop.xlane.xlu0 %3935
        %3937 = vadd.xlane.f32.xlu0 %v3914
        %v3938 = vpop.xlane.xlu0 %3937
        %3939 = vadd.xlane.f32.xlu0 %v3915
        %v3940 = vpop.xlane.xlu0 %3939
        %3941 = vadd.xlane.f32.xlu0 %v3916
        %v3942 = vpop.xlane.xlu0 %3941
        %3943 = vadd.xlane.f32.xlu0 %v3917
        %v3944 = vpop.xlane.xlu0 %3943
        %3945 = vadd.xlane.f32.xlu0 %v3918
        %v3946 = vpop.xlane.xlu0 %3945
        %3947 = vadd.xlane.f32.xlu0 %v3919
        %v3948 = vpop.xlane.xlu0 %3947
        %3949 = vadd.xlane.f32.xlu0 %v3920
        %v3950 = vpop.xlane.xlu0 %3949
        %3951 = vadd.xlane.f32.xlu0 %v3921
        %v3952 = vpop.xlane.xlu0 %3951
        %3953 = vadd.xlane.f32.xlu0 %v3922
        %v3954 = vpop.xlane.xlu0 %3953
        %v3955 = vmul.f32 %v3924, %v604
        %v3956 = vmul.f32 %v3926, %v604
        %v3957 = vmul.f32 %v3928, %v604
        %v3958 = vmul.f32 %v3930, %v604
        %v3959 = vmul.f32 %v3932, %v604
        %v3960 = vmul.f32 %v3934, %v604
        %v3961 = vmul.f32 %v3936, %v604
        %v3962 = vmul.f32 %v3938, %v604
        %v3963 = vmul.f32 %v3940, %v604
        %v3964 = vmul.f32 %v3942, %v604
        %v3965 = vmul.f32 %v3944, %v604
        %v3966 = vmul.f32 %v3946, %v604
        %v3967 = vmul.f32 %v3948, %v604
        %v3968 = vmul.f32 %v3950, %v604
        %v3969 = vmul.f32 %v3952, %v604
        %v3970 = vmul.f32 %v3954, %v604
        %v3971 = vadd.f32 %v3955, 1e-05
        %v3972 = vadd.f32 %v3956, 1e-05
        %v3973 = vadd.f32 %v3957, 1e-05
        %v3974 = vadd.f32 %v3958, 1e-05
        %v3975 = vadd.f32 %v3959, 1e-05
        %v3976 = vadd.f32 %v3960, 1e-05
        %v3977 = vadd.f32 %v3961, 1e-05
        %v3978 = vadd.f32 %v3962, 1e-05
        %v3979 = vadd.f32 %v3963, 1e-05
        %v3980 = vadd.f32 %v3964, 1e-05
        %v3981 = vadd.f32 %v3965, 1e-05
        %v3982 = vadd.f32 %v3966, 1e-05
        %v3983 = vadd.f32 %v3967, 1e-05
        %v3984 = vadd.f32 %v3968, 1e-05
        %v3985 = vadd.f32 %v3969, 1e-05
        %v3986 = vadd.f32 %v3970, 1e-05
        %v3987 = vrsqrt.pop %v3971
        %v3988 = vmul.f32 %v3987, %v3971
        %v3989 = vmul.f32 %v3988, %v3987
        %v3990 = vmul.f32 0.5, %v3989
        %v3991 = vsub.f32 1.5, %v3990
        %v3992 = vmul.f32 %v3987, %v3991
        %vm3993 = vweird.f32 %v3971
        %vm3994 = vweird.f32 %v3987
        %vm3995 = vmor %vm3993, %vm3994
        %v3996 = vsel %vm3995, %v3987, %v3992
        %v3997 = vrsqrt.pop %v3972
        %v3998 = vmul.f32 %v3997, %v3972
        %v3999 = vmul.f32 %v3998, %v3997
        %v4000 = vmul.f32 0.5, %v3999
        %v4001 = vsub.f32 1.5, %v4000
        %v4002 = vmul.f32 %v3997, %v4001
        %vm4003 = vweird.f32 %v3972
        %vm4004 = vweird.f32 %v3997
        %vm4005 = vmor %vm4003, %vm4004
        %v4006 = vsel %vm4005, %v3997, %v4002
        %v4007 = vrsqrt.pop %v3973
        %v4008 = vmul.f32 %v4007, %v3973
        %v4009 = vmul.f32 %v4008, %v4007
        %v4010 = vmul.f32 0.5, %v4009
        %v4011 = vsub.f32 1.5, %v4010
        %v4012 = vmul.f32 %v4007, %v4011
        %vm4013 = vweird.f32 %v3973
        %vm4014 = vweird.f32 %v4007
        %vm4015 = vmor %vm4013, %vm4014
        %v4016 = vsel %vm4015, %v4007, %v4012
        %v4017 = vrsqrt.pop %v3974
        %v4018 = vmul.f32 %v4017, %v3974
        %v4019 = vmul.f32 %v4018, %v4017
        %v4020 = vmul.f32 0.5, %v4019
        %v4021 = vsub.f32 1.5, %v4020
        %v4022 = vmul.f32 %v4017, %v4021
        %vm4023 = vweird.f32 %v3974
        %vm4024 = vweird.f32 %v4017
        %vm4025 = vmor %vm4023, %vm4024
        %v4026 = vsel %vm4025, %v4017, %v4022
        %v4027 = vrsqrt.pop %v3975
        %v4028 = vmul.f32 %v4027, %v3975
        %v4029 = vmul.f32 %v4028, %v4027
        %v4030 = vmul.f32 0.5, %v4029
        %v4031 = vsub.f32 1.5, %v4030
        %v4032 = vmul.f32 %v4027, %v4031
        %vm4033 = vweird.f32 %v3975
        %vm4034 = vweird.f32 %v4027
        %vm4035 = vmor %vm4033, %vm4034
        %v4036 = vsel %vm4035, %v4027, %v4032
        %v4037 = vrsqrt.pop %v3976
        %v4038 = vmul.f32 %v4037, %v3976
        %v4039 = vmul.f32 %v4038, %v4037
        %v4040 = vmul.f32 0.5, %v4039
        %v4041 = vsub.f32 1.5, %v4040
        %v4042 = vmul.f32 %v4037, %v4041
        %vm4043 = vweird.f32 %v3976
        %vm4044 = vweird.f32 %v4037
        %vm4045 = vmor %vm4043, %vm4044
        %v4046 = vsel %vm4045, %v4037, %v4042
        %v4047 = vrsqrt.pop %v3977
        %v4048 = vmul.f32 %v4047, %v3977
        %v4049 = vmul.f32 %v4048, %v4047
        %v4050 = vmul.f32 0.5, %v4049
        %v4051 = vsub.f32 1.5, %v4050
        %v4052 = vmul.f32 %v4047, %v4051
        %vm4053 = vweird.f32 %v3977
        %vm4054 = vweird.f32 %v4047
        %vm4055 = vmor %vm4053, %vm4054
        %v4056 = vsel %vm4055, %v4047, %v4052
        %v4057 = vrsqrt.pop %v3978
        %v4058 = vmul.f32 %v4057, %v3978
        %v4059 = vmul.f32 %v4058, %v4057
        %v4060 = vmul.f32 0.5, %v4059
        %v4061 = vsub.f32 1.5, %v4060
        %v4062 = vmul.f32 %v4057, %v4061
        %vm4063 = vweird.f32 %v3978
        %vm4064 = vweird.f32 %v4057
        %vm4065 = vmor %vm4063, %vm4064
        %v4066 = vsel %vm4065, %v4057, %v4062
        %v4067 = vrsqrt.pop %v3979
        %v4068 = vmul.f32 %v4067, %v3979
        %v4069 = vmul.f32 %v4068, %v4067
        %v4070 = vmul.f32 0.5, %v4069
        %v4071 = vsub.f32 1.5, %v4070
        %v4072 = vmul.f32 %v4067, %v4071
        %vm4073 = vweird.f32 %v3979
        %vm4074 = vweird.f32 %v4067
        %vm4075 = vmor %vm4073, %vm4074
        %v4076 = vsel %vm4075, %v4067, %v4072
        %v4077 = vrsqrt.pop %v3980
        %v4078 = vmul.f32 %v4077, %v3980
        %v4079 = vmul.f32 %v4078, %v4077
        %v4080 = vmul.f32 0.5, %v4079
        %v4081 = vsub.f32 1.5, %v4080
        %v4082 = vmul.f32 %v4077, %v4081
        %vm4083 = vweird.f32 %v3980
        %vm4084 = vweird.f32 %v4077
        %vm4085 = vmor %vm4083, %vm4084
        %v4086 = vsel %vm4085, %v4077, %v4082
        %v4087 = vrsqrt.pop %v3981
        %v4088 = vmul.f32 %v4087, %v3981
        %v4089 = vmul.f32 %v4088, %v4087
        %v4090 = vmul.f32 0.5, %v4089
        %v4091 = vsub.f32 1.5, %v4090
        %v4092 = vmul.f32 %v4087, %v4091
        %vm4093 = vweird.f32 %v3981
        %vm4094 = vweird.f32 %v4087
        %vm4095 = vmor %vm4093, %vm4094
        %v4096 = vsel %vm4095, %v4087, %v4092
        %v4097 = vrsqrt.pop %v3982
        %v4098 = vmul.f32 %v4097, %v3982
        %v4099 = vmul.f32 %v4098, %v4097
        %v4100 = vmul.f32 0.5, %v4099
        %v4101 = vsub.f32 1.5, %v4100
        %v4102 = vmul.f32 %v4097, %v4101
        %vm4103 = vweird.f32 %v3982
        %vm4104 = vweird.f32 %v4097
        %vm4105 = vmor %vm4103, %vm4104
        %v4106 = vsel %vm4105, %v4097, %v4102
        %v4107 = vrsqrt.pop %v3983
        %v4108 = vmul.f32 %v4107, %v3983
        %v4109 = vmul.f32 %v4108, %v4107
        %v4110 = vmul.f32 0.5, %v4109
        %v4111 = vsub.f32 1.5, %v4110
        %v4112 = vmul.f32 %v4107, %v4111
        %vm4113 = vweird.f32 %v3983
        %vm4114 = vweird.f32 %v4107
        %vm4115 = vmor %vm4113, %vm4114
        %v4116 = vsel %vm4115, %v4107, %v4112
        %v4117 = vrsqrt.pop %v3984
        %v4118 = vmul.f32 %v4117, %v3984
        %v4119 = vmul.f32 %v4118, %v4117
        %v4120 = vmul.f32 0.5, %v4119
        %v4121 = vsub.f32 1.5, %v4120
        %v4122 = vmul.f32 %v4117, %v4121
        %vm4123 = vweird.f32 %v3984
        %vm4124 = vweird.f32 %v4117
        %vm4125 = vmor %vm4123, %vm4124
        %v4126 = vsel %vm4125, %v4117, %v4122
        %v4127 = vrsqrt.pop %v3985
        %v4128 = vmul.f32 %v4127, %v3985
        %v4129 = vmul.f32 %v4128, %v4127
        %v4130 = vmul.f32 0.5, %v4129
        %v4131 = vsub.f32 1.5, %v4130
        %v4132 = vmul.f32 %v4127, %v4131
        %vm4133 = vweird.f32 %v3985
        %vm4134 = vweird.f32 %v4127
        %vm4135 = vmor %vm4133, %vm4134
        %v4136 = vsel %vm4135, %v4127, %v4132
        %v4137 = vrsqrt.pop %v3986
        %v4138 = vmul.f32 %v4137, %v3986
        %v4139 = vmul.f32 %v4138, %v4137
        %v4140 = vmul.f32 0.5, %v4139
        %v4141 = vsub.f32 1.5, %v4140
        %v4142 = vmul.f32 %v4137, %v4141
        %vm4143 = vweird.f32 %v3986
        %vm4144 = vweird.f32 %v4137
        %vm4145 = vmor %vm4143, %vm4144
        %v4146 = vsel %vm4145, %v4137, %v4142
        %v4147 = vmul.f32 %v3891, %v3996
        %v4148 = vmul.f32 %v3892, %v4006
        %v4149 = vmul.f32 %v3893, %v4016
        %v4150 = vmul.f32 %v3894, %v4026
        %v4151 = vmul.f32 %v3895, %v4036
        %v4152 = vmul.f32 %v3896, %v4046
        %v4153 = vmul.f32 %v3897, %v4056
        %v4154 = vmul.f32 %v3898, %v4066
        %v4155 = vmul.f32 %v3899, %v4076
        %v4156 = vmul.f32 %v3900, %v4086
        %v4157 = vmul.f32 %v3901, %v4096
        %v4158 = vmul.f32 %v3902, %v4106
        %v4159 = vmul.f32 %v3903, %v4116
        %v4160 = vmul.f32 %v3904, %v4126
        %v4161 = vmul.f32 %v3905, %v4136
        %v4162 = vmul.f32 %v3906, %v4146
        %v4164 = vperm.slane %v3841, 0
        %v4166 = vmul.f32 %v4147, %v4164
        %v4167 = vmul.f32 %v4148, %v4164
        %v4168 = vmul.f32 %v4149, %v4164
        %v4169 = vmul.f32 %v4150, %v4164
        %v4170 = vmul.f32 %v4151, %v4164
        %v4171 = vmul.f32 %v4152, %v4164
        %v4172 = vmul.f32 %v4153, %v4164
        %v4173 = vmul.f32 %v4154, %v4164
        %v4174 = vmul.f32 %v4155, %v4164
        %v4175 = vmul.f32 %v4156, %v4164
        %v4176 = vmul.f32 %v4157, %v4164
        %v4177 = vmul.f32 %v4158, %v4164
        %v4178 = vmul.f32 %v4159, %v4164
        %v4179 = vmul.f32 %v4160, %v4164
        %v4180 = vmul.f32 %v4161, %v4164
        %v4181 = vmul.f32 %v4162, %v4164
        %v4183 = vperm.slane %v3842, 0
        %v4185 = vadd.f32 %v4166, %v4183
        %v4186 = vadd.f32 %v4167, %v4183
        %v4187 = vadd.f32 %v4168, %v4183
        %v4188 = vadd.f32 %v4169, %v4183
        %v4189 = vadd.f32 %v4170, %v4183
        %v4190 = vadd.f32 %v4171, %v4183
        %v4191 = vadd.f32 %v4172, %v4183
        %v4192 = vadd.f32 %v4173, %v4183
        %v4193 = vadd.f32 %v4174, %v4183
        %v4194 = vadd.f32 %v4175, %v4183
        %v4195 = vadd.f32 %v4176, %v4183
        %v4196 = vadd.f32 %v4177, %v4183
        %v4197 = vadd.f32 %v4178, %v4183
        %v4198 = vadd.f32 %v4179, %v4183
        %v4199 = vadd.f32 %v4180, %v4183
        %v4200 = vadd.f32 %v4181, %v4183
        %v4201 = vpack.c.bf16 %v4186, %v4185
        %v4202 = vpack.c.bf16 %v4188, %v4187
        %v4203 = vpack.c.bf16 %v4190, %v4189
        %v4204 = vpack.c.bf16 %v4192, %v4191
        %v4205 = vpack.c.bf16 %v4194, %v4193
        %v4206 = vpack.c.bf16 %v4196, %v4195
        %v4207 = vpack.c.bf16 %v4198, %v4197
        %v4208 = vpack.c.bf16 %v4200, %v4199
        %v4209 = vld [vmem:[#allocation10] sm:$0xff]
        %v4210 = vld [vmem:[#allocation10 + $0x8] sm:$0xff]
        %v4211 = vld [vmem:[#allocation10 + $0x10] sm:$0xff]
        %v4212 = vld [vmem:[#allocation10 + $0x18] sm:$0xff]
        %v4213 = vld [vmem:[#allocation10 + $0x20] sm:$0xff]
        %v4214 = vld [vmem:[#allocation10 + $0x28] sm:$0xff]
        %v4215 = vld [vmem:[#allocation10 + $0x30] sm:$0xff]
        %v4216 = vld [vmem:[#allocation10 + $0x38] sm:$0xff]
        %v4217 = vld [vmem:[#allocation10 + $0x40] sm:$0xff]
        %v4218 = vld [vmem:[#allocation10 + $0x48] sm:$0xff]
        %v4219 = vld [vmem:[#allocation10 + $0x50] sm:$0xff]
        %v4220 = vld [vmem:[#allocation10 + $0x58] sm:$0xff]
        %v4221 = vld [vmem:[#allocation10 + $0x60] sm:$0xff]
        %v4222 = vld [vmem:[#allocation10 + $0x68] sm:$0xff]
        %v4223 = vld [vmem:[#allocation10 + $0x70] sm:$0xff]
        %v4224 = vld [vmem:[#allocation10 + $0x78] sm:$0xff]
        %v4225 = vld [vmem:[#allocation10 + $0x80] sm:$0xff]
        %v4226 = vld [vmem:[#allocation10 + $0x88] sm:$0xff]
        %v4227 = vld [vmem:[#allocation10 + $0x90] sm:$0xff]
        %v4228 = vld [vmem:[#allocation10 + $0x98] sm:$0xff]
        %v4229 = vld [vmem:[#allocation10 + $0xa0] sm:$0xff]
        %v4230 = vld [vmem:[#allocation10 + $0xa8] sm:$0xff]
        %v4231 = vld [vmem:[#allocation10 + $0xb0] sm:$0xff]
        %v4232 = vld [vmem:[#allocation10 + $0xb8] sm:$0xff]
        %v4233 = vld [vmem:[#allocation10 + $0xc0] sm:$0xff]
        %v4234 = vld [vmem:[#allocation10 + $0xc8] sm:$0xff]
        %v4235 = vld [vmem:[#allocation10 + $0xd0] sm:$0xff]
        %v4236 = vld [vmem:[#allocation10 + $0xd8] sm:$0xff]
        %v4237 = vld [vmem:[#allocation10 + $0xe0] sm:$0xff]
        %v4238 = vld [vmem:[#allocation10 + $0xe8] sm:$0xff]
        %v4239 = vld [vmem:[#allocation10 + $0xf0] sm:$0xff]
        %v4240 = vld [vmem:[#allocation10 + $0xf8] sm:$0xff]
        %v4241 = vld [vmem:[#allocation11] sm:$0xf]
        %v4243 = vperm.slane %v4241, 0
        %v4244 = vperm.slane %v4241, 1
        %v4245 = vperm.slane %v4241, 2
        %v4246 = vperm.slane %v4241, 3
        %v4283 = vunpack.c.l.b16 %v4209
        %v4284 = vunpack.c.h.b16 %v4209
        %v4285 = vunpack.c.l.b16 %v4210
        %v4286 = vunpack.c.h.b16 %v4210
        %v4287 = vunpack.c.l.b16 %v4211
        %v4288 = vunpack.c.h.b16 %v4211
        %v4289 = vunpack.c.l.b16 %v4212
        %v4290 = vunpack.c.h.b16 %v4212
        %v4291 = vunpack.c.l.b16 %v4213
        %v4292 = vunpack.c.h.b16 %v4213
        %v4293 = vunpack.c.l.b16 %v4214
        %v4294 = vunpack.c.h.b16 %v4214
        %v4295 = vunpack.c.l.b16 %v4215
        %v4296 = vunpack.c.h.b16 %v4215
        %v4297 = vunpack.c.l.b16 %v4216
        %v4298 = vunpack.c.h.b16 %v4216
        %v4299 = vunpack.c.l.b16 %v4217
        %v4300 = vunpack.c.h.b16 %v4217
        %v4301 = vunpack.c.l.b16 %v4218
        %v4302 = vunpack.c.h.b16 %v4218
        %v4303 = vunpack.c.l.b16 %v4219
        %v4304 = vunpack.c.h.b16 %v4219
        %v4305 = vunpack.c.l.b16 %v4220
        %v4306 = vunpack.c.h.b16 %v4220
        %v4307 = vunpack.c.l.b16 %v4221
        %v4308 = vunpack.c.h.b16 %v4221
        %v4309 = vunpack.c.l.b16 %v4222
        %v4310 = vunpack.c.h.b16 %v4222
        %v4311 = vunpack.c.l.b16 %v4223
        %v4312 = vunpack.c.h.b16 %v4223
        %v4313 = vunpack.c.l.b16 %v4224
        %v4314 = vunpack.c.h.b16 %v4224
        %v4315 = vunpack.c.l.b16 %v4225
        %v4316 = vunpack.c.h.b16 %v4225
        %v4317 = vunpack.c.l.b16 %v4226
        %v4318 = vunpack.c.h.b16 %v4226
        %v4319 = vunpack.c.l.b16 %v4227
        %v4320 = vunpack.c.h.b16 %v4227
        %v4321 = vunpack.c.l.b16 %v4228
        %v4322 = vunpack.c.h.b16 %v4228
        %v4323 = vunpack.c.l.b16 %v4229
        %v4324 = vunpack.c.h.b16 %v4229
        %v4325 = vunpack.c.l.b16 %v4230
        %v4326 = vunpack.c.h.b16 %v4230
        %v4327 = vunpack.c.l.b16 %v4231
        %v4328 = vunpack.c.h.b16 %v4231
        %v4329 = vunpack.c.l.b16 %v4232
        %v4330 = vunpack.c.h.b16 %v4232
        %v4331 = vunpack.c.l.b16 %v4233
        %v4332 = vunpack.c.h.b16 %v4233
        %v4333 = vunpack.c.l.b16 %v4234
        %v4334 = vunpack.c.h.b16 %v4234
        %v4335 = vunpack.c.l.b16 %v4235
        %v4336 = vunpack.c.h.b16 %v4235
        %v4337 = vunpack.c.l.b16 %v4236
        %v4338 = vunpack.c.h.b16 %v4236
        %v4339 = vunpack.c.l.b16 %v4237
        %v4340 = vunpack.c.h.b16 %v4237
        %v4341 = vunpack.c.l.b16 %v4238
        %v4342 = vunpack.c.h.b16 %v4238
        %v4343 = vunpack.c.l.b16 %v4239
        %v4344 = vunpack.c.h.b16 %v4239
        %v4345 = vunpack.c.l.b16 %v4240
        %v4346 = vunpack.c.h.b16 %v4240
        %v4347 = vpack.c.b16 %v4287, %v4283
        %v4348 = vpack.c.b16 %v4288, %v4284
        %v4349 = vpack.c.b16 %v4289, %v4285
        %v4350 = vpack.c.b16 %v4290, %v4286
        %v4351 = vpack.c.b16 %v4295, %v4291
        %v4352 = vpack.c.b16 %v4296, %v4292
        %v4353 = vpack.c.b16 %v4297, %v4293
        %v4354 = vpack.c.b16 %v4298, %v4294
        %v4355 = vpack.c.b16 %v4303, %v4299
        %v4356 = vpack.c.b16 %v4304, %v4300
        %v4357 = vpack.c.b16 %v4305, %v4301
        %v4358 = vpack.c.b16 %v4306, %v4302
        %v4359 = vpack.c.b16 %v4311, %v4307
        %v4360 = vpack.c.b16 %v4312, %v4308
        %v4361 = vpack.c.b16 %v4313, %v4309
        %v4362 = vpack.c.b16 %v4314, %v4310
        %v4363 = vpack.c.b16 %v4319, %v4315
        %v4364 = vpack.c.b16 %v4320, %v4316
        %v4365 = vpack.c.b16 %v4321, %v4317
        %v4366 = vpack.c.b16 %v4322, %v4318
        %v4367 = vpack.c.b16 %v4327, %v4323
        %v4368 = vpack.c.b16 %v4328, %v4324
        %v4369 = vpack.c.b16 %v4329, %v4325
        %v4370 = vpack.c.b16 %v4330, %v4326
        %v4371 = vpack.c.b16 %v4335, %v4331
        %v4372 = vpack.c.b16 %v4336, %v4332
        %v4373 = vpack.c.b16 %v4337, %v4333
        %v4374 = vpack.c.b16 %v4338, %v4334
        %v4375 = vpack.c.b16 %v4343, %v4339
        %v4376 = vpack.c.b16 %v4344, %v4340
        %v4377 = vpack.c.b16 %v4345, %v4341
        %v4378 = vpack.c.b16 %v4346, %v4342
        %4411 = vmatpush.bf16.msra.mxu0 %v4375
        %4412 = vmatpush.bf16.msra.mxu0 %v4371
        %4413 = vmatpush.bf16.msra.mxu0 %v4367
        %4414 = vmatpush.bf16.msra.mxu0 %v4363
        %4415 = vmatpush.bf16.msra.mxu0 %v4359
        %4416 = vmatpush.bf16.msra.mxu0 %v4355
        %4417 = vmatpush.bf16.msra.mxu0 %v4351
        %4418 = vmatpush.bf16.msra.mxu0 %v4347
        %4419 = vmatmul.bf16.gmra.mxu0 %v4201
        %v4420 = vpop.f32.mrf.mxu0
        %v4421 = vadd.f32 %v4243, %v4420
        %v4422 = vpop.f32.mrf.mxu0
        %v4423 = vadd.f32 %v4243, %v4422
        %4424 = vmatmul.bf16.gmra.mxu0 %v4202
        %v4425 = vpop.f32.mrf.mxu0
        %v4426 = vadd.f32 %v4243, %v4425
        %v4427 = vpop.f32.mrf.mxu0
        %v4428 = vadd.f32 %v4243, %v4427
        %4429 = vmatmul.bf16.gmra.mxu0 %v4203
        %v4430 = vpop.f32.mrf.mxu0
        %v4431 = vadd.f32 %v4243, %v4430
        %v4432 = vpop.f32.mrf.mxu0
        %v4433 = vadd.f32 %v4243, %v4432
        %4434 = vmatmul.bf16.gmra.mxu0 %v4204
        %v4435 = vpop.f32.mrf.mxu0
        %v4436 = vadd.f32 %v4243, %v4435
        %v4437 = vpop.f32.mrf.mxu0
        %v4438 = vadd.f32 %v4243, %v4437
        %4439 = vmatmul.bf16.gmra.mxu0 %v4205
        %v4440 = vpop.f32.mrf.mxu0
        %v4441 = vadd.f32 %v4243, %v4440
        %v4442 = vpop.f32.mrf.mxu0
        %v4443 = vadd.f32 %v4243, %v4442
        %4444 = vmatmul.bf16.gmra.mxu0 %v4206
        %v4445 = vpop.f32.mrf.mxu0
        %v4446 = vadd.f32 %v4243, %v4445
        %v4447 = vpop.f32.mrf.mxu0
        %v4448 = vadd.f32 %v4243, %v4447
        %4449 = vmatmul.bf16.gmra.mxu0 %v4207
        %v4450 = vpop.f32.mrf.mxu0
        %v4451 = vadd.f32 %v4243, %v4450
        %v4452 = vpop.f32.mrf.mxu0
        %v4453 = vadd.f32 %v4243, %v4452
        %4454 = vmatmul.bf16.gmra.mxu0 %v4208
        %v4455 = vpop.f32.mrf.mxu0
        %v4456 = vadd.f32 %v4243, %v4455
        %v4457 = vpop.f32.mrf.mxu0
        %v4458 = vadd.f32 %v4243, %v4457
        %4459 = vdwg.mxu0
        %4460 = vmatpush.bf16.msra.mxu0 %v4376
        %4461 = vmatpush.bf16.msra.mxu0 %v4372
        %4462 = vmatpush.bf16.msra.mxu0 %v4368
        %4463 = vmatpush.bf16.msra.mxu0 %v4364
        %4464 = vmatpush.bf16.msra.mxu0 %v4360
        %4465 = vmatpush.bf16.msra.mxu0 %v4356
        %4466 = vmatpush.bf16.msra.mxu0 %v4352
        %4467 = vmatpush.bf16.msra.mxu0 %v4348
        %4468 = vmatmul.bf16.gmra.mxu0 %v4201
        %v4469 = vpop.f32.mrf.mxu0
        %v4470 = vadd.f32 %v4244, %v4469
        %v4471 = vpop.f32.mrf.mxu0
        %v4472 = vadd.f32 %v4244, %v4471
        %4473 = vmatmul.bf16.gmra.mxu0 %v4202
        %v4474 = vpop.f32.mrf.mxu0
        %v4475 = vadd.f32 %v4244, %v4474
        %v4476 = vpop.f32.mrf.mxu0
        %v4477 = vadd.f32 %v4244, %v4476
        %4478 = vmatmul.bf16.gmra.mxu0 %v4203
        %v4479 = vpop.f32.mrf.mxu0
        %v4480 = vadd.f32 %v4244, %v4479
        %v4481 = vpop.f32.mrf.mxu0
        %v4482 = vadd.f32 %v4244, %v4481
        %4483 = vmatmul.bf16.gmra.mxu0 %v4204
        %v4484 = vpop.f32.mrf.mxu0
        %v4485 = vadd.f32 %v4244, %v4484
        %v4486 = vpop.f32.mrf.mxu0
        %v4487 = vadd.f32 %v4244, %v4486
        %4488 = vmatmul.bf16.gmra.mxu0 %v4205
        %v4489 = vpop.f32.mrf.mxu0
        %v4490 = vadd.f32 %v4244, %v4489
        %v4491 = vpop.f32.mrf.mxu0
        %v4492 = vadd.f32 %v4244, %v4491
        %4493 = vmatmul.bf16.gmra.mxu0 %v4206
        %v4494 = vpop.f32.mrf.mxu0
        %v4495 = vadd.f32 %v4244, %v4494
        %v4496 = vpop.f32.mrf.mxu0
        %v4497 = vadd.f32 %v4244, %v4496
        %4498 = vmatmul.bf16.gmra.mxu0 %v4207
        %v4499 = vpop.f32.mrf.mxu0
        %v4500 = vadd.f32 %v4244, %v4499
        %v4501 = vpop.f32.mrf.mxu0
        %v4502 = vadd.f32 %v4244, %v4501
        %4503 = vmatmul.bf16.gmra.mxu0 %v4208
        %v4504 = vpop.f32.mrf.mxu0
        %v4505 = vadd.f32 %v4244, %v4504
        %v4506 = vpop.f32.mrf.mxu0
        %v4507 = vadd.f32 %v4244, %v4506
        %4508 = vdwg.mxu0
        %4509 = vmatpush.bf16.msra.mxu0 %v4377
        %4510 = vmatpush.bf16.msra.mxu0 %v4373
        %4511 = vmatpush.bf16.msra.mxu0 %v4369
        %4512 = vmatpush.bf16.msra.mxu0 %v4365
        %4513 = vmatpush.bf16.msra.mxu0 %v4361
        %4514 = vmatpush.bf16.msra.mxu0 %v4357
        %4515 = vmatpush.bf16.msra.mxu0 %v4353
        %4516 = vmatpush.bf16.msra.mxu0 %v4349
        %4517 = vmatmul.bf16.gmra.mxu0 %v4201
        %v4518 = vpop.f32.mrf.mxu0
        %v4519 = vadd.f32 %v4245, %v4518
        %v4520 = vpop.f32.mrf.mxu0
        %v4521 = vadd.f32 %v4245, %v4520
        %4522 = vmatmul.bf16.gmra.mxu0 %v4202
        %v4523 = vpop.f32.mrf.mxu0
        %v4524 = vadd.f32 %v4245, %v4523
        %v4525 = vpop.f32.mrf.mxu0
        %v4526 = vadd.f32 %v4245, %v4525
        %4527 = vmatmul.bf16.gmra.mxu0 %v4203
        %v4528 = vpop.f32.mrf.mxu0
        %v4529 = vadd.f32 %v4245, %v4528
        %v4530 = vpop.f32.mrf.mxu0
        %v4531 = vadd.f32 %v4245, %v4530
        %4532 = vmatmul.bf16.gmra.mxu0 %v4204
        %v4533 = vpop.f32.mrf.mxu0
        %v4534 = vadd.f32 %v4245, %v4533
        %v4535 = vpop.f32.mrf.mxu0
        %v4536 = vadd.f32 %v4245, %v4535
        %4537 = vmatmul.bf16.gmra.mxu0 %v4205
        %v4538 = vpop.f32.mrf.mxu0
        %v4539 = vadd.f32 %v4245, %v4538
        %v4540 = vpop.f32.mrf.mxu0
        %v4541 = vadd.f32 %v4245, %v4540
        %4542 = vmatmul.bf16.gmra.mxu0 %v4206
        %v4543 = vpop.f32.mrf.mxu0
        %v4544 = vadd.f32 %v4245, %v4543
        %v4545 = vpop.f32.mrf.mxu0
        %v4546 = vadd.f32 %v4245, %v4545
        %4547 = vmatmul.bf16.gmra.mxu0 %v4207
        %v4548 = vpop.f32.mrf.mxu0
        %v4549 = vadd.f32 %v4245, %v4548
        %v4550 = vpop.f32.mrf.mxu0
        %v4551 = vadd.f32 %v4245, %v4550
        %4552 = vmatmul.bf16.gmra.mxu0 %v4208
        %v4553 = vpop.f32.mrf.mxu0
        %v4554 = vadd.f32 %v4245, %v4553
        %v4555 = vpop.f32.mrf.mxu0
        %v4556 = vadd.f32 %v4245, %v4555
        %4557 = vdwg.mxu0
        %4558 = vmatpush.bf16.msra.mxu0 %v4378
        %4559 = vmatpush.bf16.msra.mxu0 %v4374
        %4560 = vmatpush.bf16.msra.mxu0 %v4370
        %4561 = vmatpush.bf16.msra.mxu0 %v4366
        %4562 = vmatpush.bf16.msra.mxu0 %v4362
        %4563 = vmatpush.bf16.msra.mxu0 %v4358
        %4564 = vmatpush.bf16.msra.mxu0 %v4354
        %4565 = vmatpush.bf16.msra.mxu0 %v4350
        %4566 = vmatmul.bf16.gmra.mxu0 %v4201
        %v4567 = vpop.f32.mrf.mxu0
        %v4568 = vadd.f32 %v4246, %v4567
        %v4569 = vpop.f32.mrf.mxu0
        %v4570 = vadd.f32 %v4246, %v4569
        %4571 = vmatmul.bf16.gmra.mxu0 %v4202
        %v4572 = vpop.f32.mrf.mxu0
        %v4573 = vadd.f32 %v4246, %v4572
        %v4574 = vpop.f32.mrf.mxu0
        %v4575 = vadd.f32 %v4246, %v4574
        %4576 = vmatmul.bf16.gmra.mxu0 %v4203
        %v4577 = vpop.f32.mrf.mxu0
        %v4578 = vadd.f32 %v4246, %v4577
        %v4579 = vpop.f32.mrf.mxu0
        %v4580 = vadd.f32 %v4246, %v4579
        %4581 = vmatmul.bf16.gmra.mxu0 %v4204
        %v4582 = vpop.f32.mrf.mxu0
        %v4583 = vadd.f32 %v4246, %v4582
        %v4584 = vpop.f32.mrf.mxu0
        %v4585 = vadd.f32 %v4246, %v4584
        %4586 = vmatmul.bf16.gmra.mxu0 %v4205
        %v4587 = vpop.f32.mrf.mxu0
        %v4588 = vadd.f32 %v4246, %v4587
        %v4589 = vpop.f32.mrf.mxu0
        %v4590 = vadd.f32 %v4246, %v4589
        %4591 = vmatmul.bf16.gmra.mxu0 %v4206
        %v4592 = vpop.f32.mrf.mxu0
        %v4593 = vadd.f32 %v4246, %v4592
        %v4594 = vpop.f32.mrf.mxu0
        %v4595 = vadd.f32 %v4246, %v4594
        %4596 = vmatmul.bf16.gmra.mxu0 %v4207
        %v4597 = vpop.f32.mrf.mxu0
        %v4598 = vadd.f32 %v4246, %v4597
        %v4599 = vpop.f32.mrf.mxu0
        %v4600 = vadd.f32 %v4246, %v4599
        %4601 = vmatmul.bf16.gmra.mxu0 %v4208
        %v4602 = vpop.f32.mrf.mxu0
        %v4603 = vadd.f32 %v4246, %v4602
        %v4604 = vpop.f32.mrf.mxu0
        %v4605 = vadd.f32 %v4246, %v4604
        %4606 = vdwg.mxu0
        %v4607 = vmax.f32 %v4421, 0.0
        %v4608 = vmax.f32 %v4470, 0.0
        %v4609 = vmax.f32 %v4519, 0.0
        %v4610 = vmax.f32 %v4568, 0.0
        %v4611 = vmax.f32 %v4423, 0.0
        %v4612 = vmax.f32 %v4472, 0.0
        %v4613 = vmax.f32 %v4521, 0.0
        %v4614 = vmax.f32 %v4570, 0.0
        %v4615 = vmax.f32 %v4426, 0.0
        %v4616 = vmax.f32 %v4475, 0.0
        %v4617 = vmax.f32 %v4524, 0.0
        %v4618 = vmax.f32 %v4573, 0.0
        %v4619 = vmax.f32 %v4428, 0.0
        %v4620 = vmax.f32 %v4477, 0.0
        %v4621 = vmax.f32 %v4526, 0.0
        %v4622 = vmax.f32 %v4575, 0.0
        %v4623 = vmax.f32 %v4431, 0.0
        %v4624 = vmax.f32 %v4480, 0.0
        %v4625 = vmax.f32 %v4529, 0.0
        %v4626 = vmax.f32 %v4578, 0.0
        %v4627 = vmax.f32 %v4433, 0.0
        %v4628 = vmax.f32 %v4482, 0.0
        %v4629 = vmax.f32 %v4531, 0.0
        %v4630 = vmax.f32 %v4580, 0.0
        %v4631 = vmax.f32 %v4436, 0.0
        %v4632 = vmax.f32 %v4485, 0.0
        %v4633 = vmax.f32 %v4534, 0.0
        %v4634 = vmax.f32 %v4583, 0.0
        %v4635 = vmax.f32 %v4438, 0.0
        %v4636 = vmax.f32 %v4487, 0.0
        %v4637 = vmax.f32 %v4536, 0.0
        %v4638 = vmax.f32 %v4585, 0.0
        %v4639 = vmax.f32 %v4441, 0.0
        %v4640 = vmax.f32 %v4490, 0.0
        %v4641 = vmax.f32 %v4539, 0.0
        %v4642 = vmax.f32 %v4588, 0.0
        %v4643 = vmax.f32 %v4443, 0.0
        %v4644 = vmax.f32 %v4492, 0.0
        %v4645 = vmax.f32 %v4541, 0.0
        %v4646 = vmax.f32 %v4590, 0.0
        %v4647 = vmax.f32 %v4446, 0.0
        %v4648 = vmax.f32 %v4495, 0.0
        %v4649 = vmax.f32 %v4544, 0.0
        %v4650 = vmax.f32 %v4593, 0.0
        %v4651 = vmax.f32 %v4448, 0.0
        %v4652 = vmax.f32 %v4497, 0.0
        %v4653 = vmax.f32 %v4546, 0.0
        %v4654 = vmax.f32 %v4595, 0.0
        %v4655 = vmax.f32 %v4451, 0.0
        %v4656 = vmax.f32 %v4500, 0.0
        %v4657 = vmax.f32 %v4549, 0.0
        %v4658 = vmax.f32 %v4598, 0.0
        %v4659 = vmax.f32 %v4453, 0.0
        %v4660 = vmax.f32 %v4502, 0.0
        %v4661 = vmax.f32 %v4551, 0.0
        %v4662 = vmax.f32 %v4600, 0.0
        %v4663 = vmax.f32 %v4456, 0.0
        %v4664 = vmax.f32 %v4505, 0.0
        %v4665 = vmax.f32 %v4554, 0.0
        %v4666 = vmax.f32 %v4603, 0.0
        %v4667 = vmax.f32 %v4458, 0.0
        %v4668 = vmax.f32 %v4507, 0.0
        %v4669 = vmax.f32 %v4556, 0.0
        %v4670 = vmax.f32 %v4605, 0.0
        %v4671 = vpack.c.bf16 %v4611, %v4607
        %v4672 = vpack.c.bf16 %v4612, %v4608
        %v4673 = vpack.c.bf16 %v4613, %v4609
        %v4674 = vpack.c.bf16 %v4614, %v4610
        %v4675 = vpack.c.bf16 %v4619, %v4615
        %v4676 = vpack.c.bf16 %v4620, %v4616
        %v4677 = vpack.c.bf16 %v4621, %v4617
        %v4678 = vpack.c.bf16 %v4622, %v4618
        %v4679 = vpack.c.bf16 %v4627, %v4623
        %v4680 = vpack.c.bf16 %v4628, %v4624
        %v4681 = vpack.c.bf16 %v4629, %v4625
        %v4682 = vpack.c.bf16 %v4630, %v4626
        %v4683 = vpack.c.bf16 %v4635, %v4631
        %v4684 = vpack.c.bf16 %v4636, %v4632
        %v4685 = vpack.c.bf16 %v4637, %v4633
        %v4686 = vpack.c.bf16 %v4638, %v4634
        %v4687 = vpack.c.bf16 %v4643, %v4639
        %v4688 = vpack.c.bf16 %v4644, %v4640
        %v4689 = vpack.c.bf16 %v4645, %v4641
        %v4690 = vpack.c.bf16 %v4646, %v4642
        %v4691 = vpack.c.bf16 %v4651, %v4647
        %v4692 = vpack.c.bf16 %v4652, %v4648
        %v4693 = vpack.c.bf16 %v4653, %v4649
        %v4694 = vpack.c.bf16 %v4654, %v4650
        %v4695 = vpack.c.bf16 %v4659, %v4655
        %v4696 = vpack.c.bf16 %v4660, %v4656
        %v4697 = vpack.c.bf16 %v4661, %v4657
        %v4698 = vpack.c.bf16 %v4662, %v4658
        %v4699 = vpack.c.bf16 %v4667, %v4663
        %v4700 = vpack.c.bf16 %v4668, %v4664
        %v4701 = vpack.c.bf16 %v4669, %v4665
        %v4702 = vpack.c.bf16 %v4670, %v4666
        %v4703 = vld [vmem:[#allocation13] sm:$0xf]
        %v4704 = vld [vmem:[#allocation13 + $0x4] sm:$0xf]
        %v4705 = vld [vmem:[#allocation13 + $0x8] sm:$0xf]
        %v4706 = vld [vmem:[#allocation13 + $0xc] sm:$0xf]
        %v4707 = vld [vmem:[#allocation13 + $0x10] sm:$0xf]
        %v4708 = vld [vmem:[#allocation13 + $0x14] sm:$0xf]
        %v4709 = vld [vmem:[#allocation13 + $0x18] sm:$0xf]
        %v4710 = vld [vmem:[#allocation13 + $0x1c] sm:$0xf]
        %v4711 = vld [vmem:[#allocation13 + $0x20] sm:$0xf]
        %v4712 = vld [vmem:[#allocation13 + $0x24] sm:$0xf]
        %v4713 = vld [vmem:[#allocation13 + $0x28] sm:$0xf]
        %v4714 = vld [vmem:[#allocation13 + $0x2c] sm:$0xf]
        %v4715 = vld [vmem:[#allocation13 + $0x30] sm:$0xf]
        %v4716 = vld [vmem:[#allocation13 + $0x34] sm:$0xf]
        %v4717 = vld [vmem:[#allocation13 + $0x38] sm:$0xf]
        %v4718 = vld [vmem:[#allocation13 + $0x3c] sm:$0xf]
        %v4719 = vld [vmem:[#allocation13 + $0x40] sm:$0xf]
        %v4720 = vld [vmem:[#allocation13 + $0x44] sm:$0xf]
        %v4721 = vld [vmem:[#allocation13 + $0x48] sm:$0xf]
        %v4722 = vld [vmem:[#allocation13 + $0x4c] sm:$0xf]
        %v4723 = vld [vmem:[#allocation13 + $0x50] sm:$0xf]
        %v4724 = vld [vmem:[#allocation13 + $0x54] sm:$0xf]
        %v4725 = vld [vmem:[#allocation13 + $0x58] sm:$0xf]
        %v4726 = vld [vmem:[#allocation13 + $0x5c] sm:$0xf]
        %v4727 = vld [vmem:[#allocation13 + $0x60] sm:$0xf]
        %v4728 = vld [vmem:[#allocation13 + $0x64] sm:$0xf]
        %v4729 = vld [vmem:[#allocation13 + $0x68] sm:$0xf]
        %v4730 = vld [vmem:[#allocation13 + $0x6c] sm:$0xf]
        %v4731 = vld [vmem:[#allocation13 + $0x70] sm:$0xf]
        %v4732 = vld [vmem:[#allocation13 + $0x74] sm:$0xf]
        %v4733 = vld [vmem:[#allocation13 + $0x78] sm:$0xf]
        %v4734 = vld [vmem:[#allocation13 + $0x7c] sm:$0xf]
        %v4735 = vld [vmem:[#allocation13 + $0x80] sm:$0xf]
        %v4736 = vld [vmem:[#allocation13 + $0x84] sm:$0xf]
        %v4737 = vld [vmem:[#allocation13 + $0x88] sm:$0xf]
        %v4738 = vld [vmem:[#allocation13 + $0x8c] sm:$0xf]
        %v4739 = vld [vmem:[#allocation13 + $0x90] sm:$0xf]
        %v4740 = vld [vmem:[#allocation13 + $0x94] sm:$0xf]
        %v4741 = vld [vmem:[#allocation13 + $0x98] sm:$0xf]
        %v4742 = vld [vmem:[#allocation13 + $0x9c] sm:$0xf]
        %v4743 = vld [vmem:[#allocation13 + $0xa0] sm:$0xf]
        %v4744 = vld [vmem:[#allocation13 + $0xa4] sm:$0xf]
        %v4745 = vld [vmem:[#allocation13 + $0xa8] sm:$0xf]
        %v4746 = vld [vmem:[#allocation13 + $0xac] sm:$0xf]
        %v4747 = vld [vmem:[#allocation13 + $0xb0] sm:$0xf]
        %v4748 = vld [vmem:[#allocation13 + $0xb4] sm:$0xf]
        %v4749 = vld [vmem:[#allocation13 + $0xb8] sm:$0xf]
        %v4750 = vld [vmem:[#allocation13 + $0xbc] sm:$0xf]
        %v4751 = vld [vmem:[#allocation13 + $0xc0] sm:$0xf]
        %v4752 = vld [vmem:[#allocation13 + $0xc4] sm:$0xf]
        %v4753 = vld [vmem:[#allocation13 + $0xc8] sm:$0xf]
        %v4754 = vld [vmem:[#allocation13 + $0xcc] sm:$0xf]
        %v4755 = vld [vmem:[#allocation13 + $0xd0] sm:$0xf]
        %v4756 = vld [vmem:[#allocation13 + $0xd4] sm:$0xf]
        %v4757 = vld [vmem:[#allocation13 + $0xd8] sm:$0xf]
        %v4758 = vld [vmem:[#allocation13 + $0xdc] sm:$0xf]
        %v4759 = vld [vmem:[#allocation13 + $0xe0] sm:$0xf]
        %v4760 = vld [vmem:[#allocation13 + $0xe4] sm:$0xf]
        %v4761 = vld [vmem:[#allocation13 + $0xe8] sm:$0xf]
        %v4762 = vld [vmem:[#allocation13 + $0xec] sm:$0xf]
        %v4763 = vld [vmem:[#allocation13 + $0xf0] sm:$0xf]
        %v4764 = vld [vmem:[#allocation13 + $0xf4] sm:$0xf]
        %v4765 = vld [vmem:[#allocation13 + $0xf8] sm:$0xf]
        %v4766 = vld [vmem:[#allocation13 + $0xfc] sm:$0xf]
        %v4767 = vld [vmem:[#allocation14] sm:$0x1]
        %v4769 = vperm.slane %v4767, 0
        %v4835 = vunpack.c.l.b16 %v4703
        %v4836 = vunpack.c.l.b16 %v4704
        %v4837 = vunpack.c.l.b16 %v4705
        %v4838 = vunpack.c.l.b16 %v4706
        %v4839 = vunpack.c.l.b16 %v4707
        %v4840 = vunpack.c.l.b16 %v4708
        %v4841 = vunpack.c.l.b16 %v4709
        %v4842 = vunpack.c.l.b16 %v4710
        %v4843 = vunpack.c.l.b16 %v4711
        %v4844 = vunpack.c.l.b16 %v4712
        %v4845 = vunpack.c.l.b16 %v4713
        %v4846 = vunpack.c.l.b16 %v4714
        %v4847 = vunpack.c.l.b16 %v4715
        %v4848 = vunpack.c.l.b16 %v4716
        %v4849 = vunpack.c.l.b16 %v4717
        %v4850 = vunpack.c.l.b16 %v4718
        %v4851 = vunpack.c.l.b16 %v4719
        %v4852 = vunpack.c.l.b16 %v4720
        %v4853 = vunpack.c.l.b16 %v4721
        %v4854 = vunpack.c.l.b16 %v4722
        %v4855 = vunpack.c.l.b16 %v4723
        %v4856 = vunpack.c.l.b16 %v4724
        %v4857 = vunpack.c.l.b16 %v4725
        %v4858 = vunpack.c.l.b16 %v4726
        %v4859 = vunpack.c.l.b16 %v4727
        %v4860 = vunpack.c.l.b16 %v4728
        %v4861 = vunpack.c.l.b16 %v4729
        %v4862 = vunpack.c.l.b16 %v4730
        %v4863 = vunpack.c.l.b16 %v4731
        %v4864 = vunpack.c.l.b16 %v4732
        %v4865 = vunpack.c.l.b16 %v4733
        %v4866 = vunpack.c.l.b16 %v4734
        %v4867 = vunpack.c.l.b16 %v4735
        %v4868 = vunpack.c.l.b16 %v4736
        %v4869 = vunpack.c.l.b16 %v4737
        %v4870 = vunpack.c.l.b16 %v4738
        %v4871 = vunpack.c.l.b16 %v4739
        %v4872 = vunpack.c.l.b16 %v4740
        %v4873 = vunpack.c.l.b16 %v4741
        %v4874 = vunpack.c.l.b16 %v4742
        %v4875 = vunpack.c.l.b16 %v4743
        %v4876 = vunpack.c.l.b16 %v4744
        %v4877 = vunpack.c.l.b16 %v4745
        %v4878 = vunpack.c.l.b16 %v4746
        %v4879 = vunpack.c.l.b16 %v4747
        %v4880 = vunpack.c.l.b16 %v4748
        %v4881 = vunpack.c.l.b16 %v4749
        %v4882 = vunpack.c.l.b16 %v4750
        %v4883 = vunpack.c.l.b16 %v4751
        %v4884 = vunpack.c.l.b16 %v4752
        %v4885 = vunpack.c.l.b16 %v4753
        %v4886 = vunpack.c.l.b16 %v4754
        %v4887 = vunpack.c.l.b16 %v4755
        %v4888 = vunpack.c.l.b16 %v4756
        %v4889 = vunpack.c.l.b16 %v4757
        %v4890 = vunpack.c.l.b16 %v4758
        %v4891 = vunpack.c.l.b16 %v4759
        %v4892 = vunpack.c.l.b16 %v4760
        %v4893 = vunpack.c.l.b16 %v4761
        %v4894 = vunpack.c.l.b16 %v4762
        %v4895 = vunpack.c.l.b16 %v4763
        %v4896 = vunpack.c.l.b16 %v4764
        %v4897 = vunpack.c.l.b16 %v4765
        %v4898 = vunpack.c.l.b16 %v4766
        %v4899 = vpack.c.b16 %v4836, %v4835
        %v4900 = vpack.c.b16 %v4838, %v4837
        %v4901 = vpack.c.b16 %v4840, %v4839
        %v4902 = vpack.c.b16 %v4842, %v4841
        %v4903 = vpack.c.b16 %v4844, %v4843
        %v4904 = vpack.c.b16 %v4846, %v4845
        %v4905 = vpack.c.b16 %v4848, %v4847
        %v4906 = vpack.c.b16 %v4850, %v4849
        %v4907 = vpack.c.b16 %v4852, %v4851
        %v4908 = vpack.c.b16 %v4854, %v4853
        %v4909 = vpack.c.b16 %v4856, %v4855
        %v4910 = vpack.c.b16 %v4858, %v4857
        %v4911 = vpack.c.b16 %v4860, %v4859
        %v4912 = vpack.c.b16 %v4862, %v4861
        %v4913 = vpack.c.b16 %v4864, %v4863
        %v4914 = vpack.c.b16 %v4866, %v4865
        %v4915 = vpack.c.b16 %v4868, %v4867
        %v4916 = vpack.c.b16 %v4870, %v4869
        %v4917 = vpack.c.b16 %v4872, %v4871
        %v4918 = vpack.c.b16 %v4874, %v4873
        %v4919 = vpack.c.b16 %v4876, %v4875
        %v4920 = vpack.c.b16 %v4878, %v4877
        %v4921 = vpack.c.b16 %v4880, %v4879
        %v4922 = vpack.c.b16 %v4882, %v4881
        %v4923 = vpack.c.b16 %v4884, %v4883
        %v4924 = vpack.c.b16 %v4886, %v4885
        %v4925 = vpack.c.b16 %v4888, %v4887
        %v4926 = vpack.c.b16 %v4890, %v4889
        %v4927 = vpack.c.b16 %v4892, %v4891
        %v4928 = vpack.c.b16 %v4894, %v4893
        %v4929 = vpack.c.b16 %v4896, %v4895
        %v4930 = vpack.c.b16 %v4898, %v4897
        %4963 = vmatpush.bf16.msra.mxu0 %v4906
        %4964 = vmatpush.bf16.msra.mxu0 %v4905
        %4965 = vmatpush.bf16.msra.mxu0 %v4904
        %4966 = vmatpush.bf16.msra.mxu0 %v4903
        %4967 = vmatpush.bf16.msra.mxu0 %v4902
        %4968 = vmatpush.bf16.msra.mxu0 %v4901
        %4969 = vmatpush.bf16.msra.mxu0 %v4900
        %4970 = vmatpush.bf16.msra.mxu0 %v4899
        %4971 = vmatmul.bf16.gmra.mxu0 %v4671
        %v4972 = vpop.f32.mrf.mxu0
        %v4973 = vadd.f32 %v4769, %v4972
        %v4974 = vpop.f32.mrf.mxu0
        %v4975 = vadd.f32 %v4769, %v4974
        %4976 = vmatmul.bf16.gmra.mxu0 %v4675
        %v4977 = vpop.f32.mrf.mxu0
        %v4978 = vadd.f32 %v4769, %v4977
        %v4979 = vpop.f32.mrf.mxu0
        %v4980 = vadd.f32 %v4769, %v4979
        %4981 = vmatmul.bf16.gmra.mxu0 %v4679
        %v4982 = vpop.f32.mrf.mxu0
        %v4983 = vadd.f32 %v4769, %v4982
        %v4984 = vpop.f32.mrf.mxu0
        %v4985 = vadd.f32 %v4769, %v4984
        %4986 = vmatmul.bf16.gmra.mxu0 %v4683
        %v4987 = vpop.f32.mrf.mxu0
        %v4988 = vadd.f32 %v4769, %v4987
        %v4989 = vpop.f32.mrf.mxu0
        %v4990 = vadd.f32 %v4769, %v4989
        %4991 = vmatmul.bf16.gmra.mxu0 %v4687
        %v4992 = vpop.f32.mrf.mxu0
        %v4993 = vadd.f32 %v4769, %v4992
        %v4994 = vpop.f32.mrf.mxu0
        %v4995 = vadd.f32 %v4769, %v4994
        %4996 = vmatmul.bf16.gmra.mxu0 %v4691
        %v4997 = vpop.f32.mrf.mxu0
        %v4998 = vadd.f32 %v4769, %v4997
        %v4999 = vpop.f32.mrf.mxu0
        %v5000 = vadd.f32 %v4769, %v4999
        %5001 = vmatmul.bf16.gmra.mxu0 %v4695
        %v5002 = vpop.f32.mrf.mxu0
        %v5003 = vadd.f32 %v4769, %v5002
        %v5004 = vpop.f32.mrf.mxu0
        %v5005 = vadd.f32 %v4769, %v5004
        %5006 = vmatmul.bf16.gmra.mxu0 %v4699
        %v5007 = vpop.f32.mrf.mxu0
        %v5008 = vadd.f32 %v4769, %v5007
        %v5009 = vpop.f32.mrf.mxu0
        %v5010 = vadd.f32 %v4769, %v5009
        %5011 = vdwg.mxu0
        %5012 = vmatpush.bf16.msra.mxu0 %v4914
        %5013 = vmatpush.bf16.msra.mxu0 %v4913
        %5014 = vmatpush.bf16.msra.mxu0 %v4912
        %5015 = vmatpush.bf16.msra.mxu0 %v4911
        %5016 = vmatpush.bf16.msra.mxu0 %v4910
        %5017 = vmatpush.bf16.msra.mxu0 %v4909
        %5018 = vmatpush.bf16.msra.mxu0 %v4908
        %5019 = vmatpush.bf16.msra.mxu0 %v4907
        %5020 = vmatmul.bf16.gmra.mxu0 %v4672
        %v5021 = vpop.f32.mrf.mxu0
        %v5022 = vadd.f32 %v4973, %v5021
        %v5023 = vpop.f32.mrf.mxu0
        %v5024 = vadd.f32 %v4975, %v5023
        %5025 = vmatmul.bf16.gmra.mxu0 %v4676
        %v5026 = vpop.f32.mrf.mxu0
        %v5027 = vadd.f32 %v4978, %v5026
        %v5028 = vpop.f32.mrf.mxu0
        %v5029 = vadd.f32 %v4980, %v5028
        %5030 = vmatmul.bf16.gmra.mxu0 %v4680
        %v5031 = vpop.f32.mrf.mxu0
        %v5032 = vadd.f32 %v4983, %v5031
        %v5033 = vpop.f32.mrf.mxu0
        %v5034 = vadd.f32 %v4985, %v5033
        %5035 = vmatmul.bf16.gmra.mxu0 %v4684
        %v5036 = vpop.f32.mrf.mxu0
        %v5037 = vadd.f32 %v4988, %v5036
        %v5038 = vpop.f32.mrf.mxu0
        %v5039 = vadd.f32 %v4990, %v5038
        %5040 = vmatmul.bf16.gmra.mxu0 %v4688
        %v5041 = vpop.f32.mrf.mxu0
        %v5042 = vadd.f32 %v4993, %v5041
        %v5043 = vpop.f32.mrf.mxu0
        %v5044 = vadd.f32 %v4995, %v5043
        %5045 = vmatmul.bf16.gmra.mxu0 %v4692
        %v5046 = vpop.f32.mrf.mxu0
        %v5047 = vadd.f32 %v4998, %v5046
        %v5048 = vpop.f32.mrf.mxu0
        %v5049 = vadd.f32 %v5000, %v5048
        %5050 = vmatmul.bf16.gmra.mxu0 %v4696
        %v5051 = vpop.f32.mrf.mxu0
        %v5052 = vadd.f32 %v5003, %v5051
        %v5053 = vpop.f32.mrf.mxu0
        %v5054 = vadd.f32 %v5005, %v5053
        %5055 = vmatmul.bf16.gmra.mxu0 %v4700
        %v5056 = vpop.f32.mrf.mxu0
        %v5057 = vadd.f32 %v5008, %v5056
        %v5058 = vpop.f32.mrf.mxu0
        %v5059 = vadd.f32 %v5010, %v5058
        %5060 = vdwg.mxu0
        %5061 = vmatpush.bf16.msra.mxu0 %v4922
        %5062 = vmatpush.bf16.msra.mxu0 %v4921
        %5063 = vmatpush.bf16.msra.mxu0 %v4920
        %5064 = vmatpush.bf16.msra.mxu0 %v4919
        %5065 = vmatpush.bf16.msra.mxu0 %v4918
        %5066 = vmatpush.bf16.msra.mxu0 %v4917
        %5067 = vmatpush.bf16.msra.mxu0 %v4916
        %5068 = vmatpush.bf16.msra.mxu0 %v4915
        %5069 = vmatmul.bf16.gmra.mxu0 %v4673
        %v5070 = vpop.f32.mrf.mxu0
        %v5071 = vadd.f32 %v5022, %v5070
        %v5072 = vpop.f32.mrf.mxu0
        %v5073 = vadd.f32 %v5024, %v5072
        %5074 = vmatmul.bf16.gmra.mxu0 %v4677
        %v5075 = vpop.f32.mrf.mxu0
        %v5076 = vadd.f32 %v5027, %v5075
        %v5077 = vpop.f32.mrf.mxu0
        %v5078 = vadd.f32 %v5029, %v5077
        %5079 = vmatmul.bf16.gmra.mxu0 %v4681
        %v5080 = vpop.f32.mrf.mxu0
        %v5081 = vadd.f32 %v5032, %v5080
        %v5082 = vpop.f32.mrf.mxu0
        %v5083 = vadd.f32 %v5034, %v5082
        %5084 = vmatmul.bf16.gmra.mxu0 %v4685
        %v5085 = vpop.f32.mrf.mxu0
        %v5086 = vadd.f32 %v5037, %v5085
        %v5087 = vpop.f32.mrf.mxu0
        %v5088 = vadd.f32 %v5039, %v5087
        %5089 = vmatmul.bf16.gmra.mxu0 %v4689
        %v5090 = vpop.f32.mrf.mxu0
        %v5091 = vadd.f32 %v5042, %v5090
        %v5092 = vpop.f32.mrf.mxu0
        %v5093 = vadd.f32 %v5044, %v5092
        %5094 = vmatmul.bf16.gmra.mxu0 %v4693
        %v5095 = vpop.f32.mrf.mxu0
        %v5096 = vadd.f32 %v5047, %v5095
        %v5097 = vpop.f32.mrf.mxu0
        %v5098 = vadd.f32 %v5049, %v5097
        %5099 = vmatmul.bf16.gmra.mxu0 %v4697
        %v5100 = vpop.f32.mrf.mxu0
        %v5101 = vadd.f32 %v5052, %v5100
        %v5102 = vpop.f32.mrf.mxu0
        %v5103 = vadd.f32 %v5054, %v5102
        %5104 = vmatmul.bf16.gmra.mxu0 %v4701
        %v5105 = vpop.f32.mrf.mxu0
        %v5106 = vadd.f32 %v5057, %v5105
        %v5107 = vpop.f32.mrf.mxu0
        %v5108 = vadd.f32 %v5059, %v5107
        %5109 = vdwg.mxu0
        %5110 = vmatpush.bf16.msra.mxu0 %v4930
        %5111 = vmatpush.bf16.msra.mxu0 %v4929
        %5112 = vmatpush.bf16.msra.mxu0 %v4928
        %5113 = vmatpush.bf16.msra.mxu0 %v4927
        %5114 = vmatpush.bf16.msra.mxu0 %v4926
        %5115 = vmatpush.bf16.msra.mxu0 %v4925
        %5116 = vmatpush.bf16.msra.mxu0 %v4924
        %5117 = vmatpush.bf16.msra.mxu0 %v4923
        %5118 = vmatmul.bf16.gmra.mxu0 %v4674
        %v5119 = vpop.f32.mrf.mxu0
        %v5120 = vadd.f32 %v5071, %v5119
        %v5121 = vpop.f32.mrf.mxu0
        %v5122 = vadd.f32 %v5073, %v5121
        %5123 = vmatmul.bf16.gmra.mxu0 %v4678
        %v5124 = vpop.f32.mrf.mxu0
        %v5125 = vadd.f32 %v5076, %v5124
        %v5126 = vpop.f32.mrf.mxu0
        %v5127 = vadd.f32 %v5078, %v5126
        %5128 = vmatmul.bf16.gmra.mxu0 %v4682
        %v5129 = vpop.f32.mrf.mxu0
        %v5130 = vadd.f32 %v5081, %v5129
        %v5131 = vpop.f32.mrf.mxu0
        %v5132 = vadd.f32 %v5083, %v5131
        %5133 = vmatmul.bf16.gmra.mxu0 %v4686
        %v5134 = vpop.f32.mrf.mxu0
        %v5135 = vadd.f32 %v5086, %v5134
        %v5136 = vpop.f32.mrf.mxu0
        %v5137 = vadd.f32 %v5088, %v5136
        %5138 = vmatmul.bf16.gmra.mxu0 %v4690
        %v5139 = vpop.f32.mrf.mxu0
        %v5140 = vadd.f32 %v5091, %v5139
        %v5141 = vpop.f32.mrf.mxu0
        %v5142 = vadd.f32 %v5093, %v5141
        %5143 = vmatmul.bf16.gmra.mxu0 %v4694
        %v5144 = vpop.f32.mrf.mxu0
        %v5145 = vadd.f32 %v5096, %v5144
        %v5146 = vpop.f32.mrf.mxu0
        %v5147 = vadd.f32 %v5098, %v5146
        %5148 = vmatmul.bf16.gmra.mxu0 %v4698
        %v5149 = vpop.f32.mrf.mxu0
        %v5150 = vadd.f32 %v5101, %v5149
        %v5151 = vpop.f32.mrf.mxu0
        %v5152 = vadd.f32 %v5103, %v5151
        %5153 = vmatmul.bf16.gmra.mxu0 %v4702
        %v5154 = vpop.f32.mrf.mxu0
        %v5155 = vadd.f32 %v5106, %v5154
        %v5156 = vpop.f32.mrf.mxu0
        %v5157 = vadd.f32 %v5108, %v5156
        %5158 = vdwg.mxu0
        %v5159 = vadd.f32 %v3825, %v5120
        %v5160 = vadd.f32 %v3826, %v5122
        %v5161 = vadd.f32 %v3827, %v5125
        %v5162 = vadd.f32 %v3828, %v5127
        %v5163 = vadd.f32 %v3829, %v5130
        %v5164 = vadd.f32 %v3830, %v5132
        %v5165 = vadd.f32 %v3831, %v5135
        %v5166 = vadd.f32 %v3832, %v5137
        %v5167 = vadd.f32 %v3833, %v5140
        %v5168 = vadd.f32 %v3834, %v5142
        %v5169 = vadd.f32 %v3835, %v5145
        %v5170 = vadd.f32 %v3836, %v5147
        %v5171 = vadd.f32 %v3837, %v5150
        %v5172 = vadd.f32 %v3838, %v5152
        %v5173 = vadd.f32 %v3839, %v5155
        %v5174 = vadd.f32 %v3840, %v5157
        %5175 = vst [vmem:[%s544] sm:$0xff] %v5159
        %5176 = vst [vmem:[%s544 + $0x8] sm:$0xff] %v5160
        %5177 = vst [vmem:[%s544 + $0x10] sm:$0xff] %v5161
        %5178 = vst [vmem:[%s544 + $0x18] sm:$0xff] %v5162
        %5179 = vst [vmem:[%s544 + $0x20] sm:$0xff] %v5163
        %5180 = vst [vmem:[%s544 + $0x28] sm:$0xff] %v5164
        %5181 = vst [vmem:[%s544 + $0x30] sm:$0xff] %v5165
        %5182 = vst [vmem:[%s544 + $0x38] sm:$0xff] %v5166
        %5183 = vst [vmem:[%s544 + $0x40] sm:$0xff] %v5167
        %5184 = vst [vmem:[%s544 + $0x48] sm:$0xff] %v5168
        %5185 = vst [vmem:[%s544 + $0x50] sm:$0xff] %v5169
        %5186 = vst [vmem:[%s544 + $0x58] sm:$0xff] %v5170
        %5187 = vst [vmem:[%s544 + $0x60] sm:$0xff] %v5171
        %5188 = vst [vmem:[%s544 + $0x68] sm:$0xff] %v5172
        %5189 = vst [vmem:[%s544 + $0x70] sm:$0xff] %v5173
        %5190 = vst [vmem:[%s544 + $0x78] sm:$0xff] %v5174
        %s5191 = sand.u32 %s298, 1
        %s5192 = scalar_lea.sflag [#allocation4], %s5191
        %s5193 = sand.u32 %s298, 1
        %s5194 = smul.addr %s5193, 128
        %s5195 = scalar_lea.vmem [#allocation16], %s5194
        // Predicated region
        $region101: #{block_forward.1} parent=67 // pred_check
          %p5196 = pneg %p308
        $region102: #{block_forward.1} parent=67 // pred_check_branch
          %5198 = sbr.rel (%p5196) target = $region104
        $region103: #{block_forward.1} parent=67 // pred_region
          %s5199 = smul.u32 2, %s33
          %5201 = vsyncadd %s5192, 0
          %s5202 = smul.addr %s5199, 8
          %s5203 = smul.addr %s5202, 8
          %s5204 = scalar_lea.hbm %s12, %s5203
          %s5205 = sshll.u32 %s5195, 4
          %s5206 = int_to_ptr.vmem [resolvable:$true] %s5205
          %s5207 = sshll.u32 %s5204, 4
          %s5208 = int_to_ptr.hbm [resolvable:$true] %s5207
          %5213 = dma.vmem_to_hbm [thread:$0]  %s5206, 2048, %s5208, %s5192, 128, 128, 8
        $region104: #{block_forward.1} parent=67 // pred_fallthru
          _
      $region68: #{block_forward.1} parent=5 // pred_fallthru
        _
      %p5214 = scmp.le.s32.totalorder 2, %s28
      // Predicated region
      $region105: #{block_forward.1} parent=5 // pred_check
        %p5215 = pneg %p5214
      $region106: #{block_forward.1} parent=5 // pred_check_branch
        %5217 = sbr.rel (%p5215) target = $region108
      $region107: #{block_forward.1} parent=5 // pred_region
        %s5218 = ssub.s32 %s28, 2
        // Predicated region
        $region109: #{block_forward.1} parent=107 // pred_check
          %p5219 = pneg %p314
        $region110: #{block_forward.1} parent=107 // pred_check_branch
          %5221 = sbr.rel (%p5219) target = $region112
        $region111: #{block_forward.1} parent=107 // pred_region
          %s5222 = sand.u32 %s299, 1
          %s5223 = scalar_lea.sflag [#allocation4], %s5222
          %s5224 = sand.u32 %s299, 1
          %s5225 = smul.addr %s5224, 128
          %s5226 = scalar_lea.vmem [#allocation16], %s5225
          %5228 = dma.done %s5223, 2048
        $region112: #{block_forward.1} parent=107 // pred_fallthru
          _
      $region108: #{block_forward.1} parent=5 // pred_fallthru
        _
    $region6: #{block_forward.1} parent=1 // loop_footer
      %s32 = sadd.s32 1, %s28
    $region7: #{block_forward.1} parent=1 // loop_footer_branch
      %27 = sbr.rel target = $region3
    $region8: #{block_forward.1} parent=1 // loop_exit
      _
    %5229 = vsyncpa [#allocation3], 1
    %s5230 = scalar_lea.sflag [#allocation3], 1
    %5231 = vsyncpa %s5230, 1
    %5232 = vsyncpa [#allocation6], 1
    %5233 = vsyncpa [#allocation9], 1
    %5234 = vsyncpa [#allocation12], 1
    %5235 = vsyncpa [#allocation15], 1
    %5236 = vsyncpa [#allocation4], 1
    %s5237 = scalar_lea.sflag [#allocation4], 1
    %5238 = vsyncpa %s5237, 1

</llo_original>
